<compile_context>
chip_gen: v7x
topology: tpu7x:2x2x1
jax: 0.10.0
libtpu: 0.0.40
codegen_flags: <defaults>
</compile_context>

<pallas_src>
import functools
import math

import numpy as np
import jax
import jax.numpy as jnp
from jax import lax
from jax.experimental import pallas as pl
from jax.experimental.pallas import tpu as pltpu


# ------------------------- fused per-view CNN kernel -------------------------

def _cnn_kernel(x_ref, ring_ref, pool_ref, *refs, dims, strides, pool_scale):
    """One grid step == one view.

    x_ref   : (1, Cin0, N*S)       bf16  zero-ring padded, spatially flattened
    ring_ref: (1, N*S)             f32   1 at interior pixels, 0 on the pad ring
    pool_ref: (N, 1, N*S_last)     f32   row n selects image n's strided outputs
    refs    : (w_0, b_0, ..., w_{L-1}, b_{L-1}, o_ref)
      w_l   : (1, 9, Cout_l, Cin_l) bf16  tap-major conv weights
      b_l   : (1, Cout_l, 1)        f32
      o_ref : (1, N, Cout_last)     f32   pooled per-view features
    """
    N, H, W = dims
    n_layers = len(strides)
    o_ref = refs[2 * n_layers]

    Hp, Wp = H + 2, W + 2
    S = Hp * Wp
    pad = Wp + 1

    a = x_ref[0]                                   # (Cin0, N*S) bf16
    ring = ring_ref[...]                           # (1, N*S)    f32

    for l in range(n_layers):
        w_ref = refs[2 * l]                        # (1, 9, Cout, Cin) bf16
        b = refs[2 * l + 1][0]                     # (Cout, 1) f32
        cout, cin = int(w_ref.shape[2]), int(w_ref.shape[3])
        m = int(a.shape[1])                        # N * S (current spatial size)
        stride = int(strides[l])

        # Extend the flat activation by one padded row + one pixel on each end
        # so every 3x3 tap is a static lane-offset slice.  Out-of-image reads
        # only ever land on the zeroed pad ring, so no masking is needed.
        zext = jnp.zeros((cin, pad), jnp.bfloat16)
        a_ext = jnp.concatenate([zext, a, zext], axis=1)       # (Cin, m + 2*pad)

        # 9 shift-and-matmul-accumulate steps (bf16 MXU inputs, f32 accumulate).
        acc = None
        for ky in range(3):
            for kx in range(3):
                off = (ky - 1) * Wp + (kx - 1)
                tap = a_ext[:, pad + off:pad + off + m]        # (Cin, m) bf16
                part = jnp.dot(w_ref[0, 3 * ky + kx], tap,
                               preferred_element_type=jnp.float32)
                acc = part if acc is None else acc + part
        y = jnp.maximum(acc + b, 0.0)                          # (Cout, m) f32

        if l == n_layers - 1:
            # Fused stride + global average pool: the precomputed selector is
            # nonzero only at this image's stride-selected interior positions,
            # so pad-ring garbage never contributes; no iota/where/transpose.
            #   (N, 1, m) * (Cout, m) -> (N, Cout, m) -> sum over lanes.
            pooled = jnp.sum(pool_ref[...] * y, axis=-1)       # (N, Cout) f32
            o_ref[0] = (pooled * pool_scale).astype(o_ref.dtype)
        else:
            y = y * ring                   # re-zero pad ring for the next conv
            if stride > 1:
                # TODO(synk): interior strided conv layer (not hit by the demo
                # config) — slow strided-slice fallback, untested lowering path.
                ho, wo = (H - 1) // stride + 1, (W - 1) // stride + 1
                y4 = y.reshape(cout, N, Hp, Wp)
                y4 = lax.slice(
                    y4, (0, 0, 1, 1),
                    (cout, N, 2 + (ho - 1) * stride, 2 + (wo - 1) * stride),
                    (1, 1, stride, stride))                    # (Cout,N,ho,wo)
                H, W = ho, wo
                Hp, Wp = H + 2, W + 2
                S = Hp * Wp
                pad = Wp + 1
                zc = jnp.zeros((cout, N, H, 1), jnp.float32)
                y4 = jnp.concatenate([zc, y4, zc], axis=3)
                zr = jnp.zeros((cout, N, 1, Wp), jnp.float32)
                y4 = jnp.concatenate([zr, y4, zr], axis=2)
                a = y4.reshape(cout, N * S).astype(jnp.bfloat16)
                hi = lax.broadcasted_iota(jnp.int32, (Hp, Wp), 0)
                wi = lax.broadcasted_iota(jnp.int32, (Hp, Wp), 1)
                m2 = ((hi >= 1) & (hi <= H) & (wi >= 1) & (wi <= W))
                ring = jnp.concatenate(
                    [m2.astype(jnp.float32).reshape(1, S)] * N, axis=1)
            else:
                a = y.astype(jnp.bfloat16)


def _cnn_pool_all_views(x_flat, ring, pool, conv_ws, conv_bs, *, dims, strides,
                        pool_scale):
    """x_flat: (V, Cin0, N*S) bf16; ring: (1, N*S) f32; pool: (N, 1, N*S_last) f32;
    conv_ws[l]: (V, 9, Cout, Cin) bf16; conv_bs[l]: (V, Cout, 1) f32.
    Returns (V, N, Cout_last) f32 pooled per-view features."""
    V = int(x_flat.shape[0])
    N = dims[0]
    c_last = int(conv_ws[-1].shape[2])

    in_specs = [
        pl.BlockSpec((1,) + tuple(x_flat.shape[1:]), lambda v: (v, 0, 0)),
        pl.BlockSpec(tuple(ring.shape), lambda v: (0, 0)),
        pl.BlockSpec(tuple(pool.shape), lambda v: (0, 0, 0)),
    ]
    operands = [x_flat, ring, pool]
    for wl, bl in zip(conv_ws, conv_bs):
        in_specs.append(pl.BlockSpec((1,) + tuple(wl.shape[1:]),
                                     lambda v: (v, 0, 0, 0)))
        in_specs.append(pl.BlockSpec((1,) + tuple(bl.shape[1:]),
                                     lambda v: (v, 0, 0)))
        operands += [wl, bl]

    # Scoped-VMEM limit sized from the actual per-step footprint with headroom;
    # never below the 32 MiB default, never above v7x's 64 MiB physical ceiling.
    c_max = max([int(x_flat.shape[1])] + [int(w.shape[2]) for w in conv_ws])
    act_bytes = c_max * int(x_flat.shape[2]) * 4
    est = (10 * act_bytes + int(pool.size) * 4 + int(ring.size) * 4
           + 4 * int(x_flat.shape[1]) * int(x_flat.shape[2])
           + sum(int(w.size) * 2 + int(b.size) * 4
                 for w, b in zip(conv_ws, conv_bs)))
    vmem_limit = int(min(max(32 * 1024 * 1024, 2 * est), 64 * 1024 * 1024))

    return pl.pallas_call(
        functools.partial(_cnn_kernel, dims=dims, strides=tuple(strides),
                          pool_scale=pool_scale),
        out_shape=jax.ShapeDtypeStruct((V, N, c_last), jnp.float32),
        grid=(V,),
        in_specs=in_specs,
        out_specs=pl.BlockSpec((1, N, c_last), lambda v: (v, 0, 0)),
        compiler_params=pltpu.CompilerParams(
            dimension_semantics=("parallel",),   # 4-view axis -> megacore on v7x
            vmem_limit_bytes=vmem_limit),
    )(*operands)


# ---------------------------- fused MLP classifier ---------------------------

def _mlp_kernel(feats_ref, *refs, n_views, n_hidden):
    """feats_ref: (V, N, C) f32; refs = (w1, b1, ..., w_out, b_out, o_ref).
    Hidden activations never leave VMEM; nn.Dropout is identity at inference."""
    o_ref = refs[-1]
    # torch.cat([l_cc, l_mlo, r_cc, r_mlo], dim=1) done in-VMEM.
    h = jnp.concatenate([feats_ref[v] for v in range(n_views)], axis=-1)
    h = h.astype(jnp.float32)
    i = 0
    for _ in range(n_hidden):
        w, b = refs[i][...], refs[i + 1][...].astype(jnp.float32)
        i += 2
        h = jnp.dot(h.astype(jnp.bfloat16), w,
                    preferred_element_type=jnp.float32) + b
        h = jnp.maximum(h, 0.0)
    w, b = refs[i][...], refs[i + 1][...].astype(jnp.float32)
    o_ref[...] = (jnp.dot(h.astype(jnp.bfloat16), w,
                          preferred_element_type=jnp.float32) + b
                  ).astype(o_ref.dtype)


def _classifier(feats, fc_params, out_params):
    V, N, _ = feats.shape
    flat = []
    for w, b in fc_params:
        flat += [w, b]
    flat += [out_params[0], out_params[1]]
    oc = int(out_params[0].shape[-1])
    return pl.pallas_call(
        functools.partial(_mlp_kernel, n_views=int(V), n_hidden=len(fc_params)),
        out_shape=jax.ShapeDtypeStruct((int(N), oc), jnp.float32),
    )(feats, *flat)


# ---------------------------------- forward ----------------------------------

@functools.partial(jax.jit, static_argnums=(0,))
def _forward_impl(strides, arrays, l_cc, l_mlo, r_cc, r_mlo):
    N, c_in, H, W = l_cc.shape
    V = 4
    Hp, Wp = H + 2, W + 2
    s0 = Hp * Wp

    # One-time boundary glue (XLA): NCHW views -> zero-ring padded, spatially
    # flattened, channel-major bf16 blocks (flat spatial axis -> 128-wide lanes).
    x = jnp.stack([l_cc, l_mlo, r_cc, r_mlo], axis=0)            # (V,N,C,H,W)
    x = jnp.transpose(x, (0, 2, 1, 3, 4))                        # (V,C,N,H,W)
    x = jnp.pad(x, ((0, 0), (0, 0), (0, 0), (1, 1), (1, 1)))
    x = x.reshape(V, c_in, N * s0).astype(jnp.bfloat16)

    # Spatial dims entering the last conv layer (after interior strides, if any).
    h_l, w_l = H, W
    for s in strides[:-1]:
        if s > 1:
            h_l, w_l = (h_l - 1) // s + 1, (w_l - 1) // s + 1
    s_last = strides[-1]
    ho, wo = (h_l - 1) // s_last + 1, (w_l - 1) // s_last + 1
    hpl, wpl = h_l + 2, w_l + 2
    sl = hpl * wpl

    # Interior (pad-ring) mask for the first spatial size: (1, N*s0) f32.
    m = np.zeros((Hp, Wp), np.float32)
    m[1:H + 1, 1:W + 1] = 1.0
    ring = jnp.asarray(np.tile(m.reshape(1, s0), (1, N)))

    # Pool selector: row n picks image n's stride-selected interior outputs.
    mp = np.zeros((hpl, wpl), np.float32)
    mp[1:(ho - 1) * s_last + 2:s_last, 1:(wo - 1) * s_last + 2:s_last] = 1.0
    pool = np.zeros((N, 1, N * sl), np.float32)
    for n in range(N):
        pool[n, 0, n * sl:(n + 1) * sl] = mp.reshape(-1)
    pool = jnp.asarray(pool)

    feats = _cnn_pool_all_views(
        x, ring, pool, arrays["conv_w"], arrays["conv_b"],
        dims=(int(N), int(H), int(W)), strides=strides,
        pool_scale=1.0 / float(ho * wo))                         # (V, N, C_last)
    return _classifier(feats, arrays["fc"], arrays["out"])


def model4_forward(params, l_cc, l_mlo, r_cc, r_mlo):
    arrays = {k: v for k, v in params.items() if k != "strides"}
    return _forward_impl(params["strides"], arrays, l_cc, l_mlo, r_cc, r_mlo)


# ------------------------------ param creation --------------------------------

def make_params(key, in_dims, out_classes, channels, strides, fc_sizes):
    n_views = 4
    conv_w, conv_b = [], []
    cin = in_dims[0]
    for cout in channels:
        key, kw, kb = jax.random.split(key, 3)
        w = (jax.random.normal(kw, (n_views, 9, cout, cin), jnp.float32)
             / math.sqrt(9 * cin))
        b = 0.01 * jax.random.normal(kb, (n_views, cout, 1), jnp.float32)
        conv_w.append(w.astype(jnp.bfloat16))
        conv_b.append(b)
        cin = cout
    fc = []
    prev = n_views * channels[-1]
    for h in fc_sizes:
        key, kw, kb = jax.random.split(key, 3)
        w = jax.random.normal(kw, (prev, h), jnp.float32) / math.sqrt(prev)
        b = 0.01 * jax.random.normal(kb, (1, h), jnp.float32)
        fc.append((w.astype(jnp.bfloat16), b))
        prev = h
    key, kw, kb = jax.random.split(key, 3)
    w = jax.random.normal(kw, (prev, out_classes), jnp.float32) / math.sqrt(prev)
    b = 0.01 * jax.random.normal(kb, (1, out_classes), jnp.float32)
    return {"strides": tuple(int(s) for s in strides),
            "conv_w": conv_w, "conv_b": conv_b,
            "fc": fc, "out": (w.astype(jnp.bfloat16), b)}


# --------------------------- pure-JAX f32 reference ---------------------------

def _reference_forward(params, l_cc, l_mlo, r_cc, r_mlo):
    feats = []
    for v, view in enumerate([l_cc, l_mlo, r_cc, r_mlo]):
        h = view.astype(jnp.float32)
        for l, s in enumerate(params["strides"]):
            w = params["conv_w"][l][v].astype(jnp.float32)      # (9, Cout, Cin)
            b = params["conv_b"][l][v][:, 0]                    # (Cout,)
            cout, cin = w.shape[1], w.shape[2]
            wk = jnp.transpose(w.reshape(3, 3, cout, cin), (2, 3, 0, 1))
            h = lax.conv_general_dilated(
                h, wk, (s, s), ((1, 1), (1, 1)),
                dimension_numbers=("NCHW", "OIHW", "NCHW"))
            h = jnp.maximum(h + b[None, :, None, None], 0.0)
        feats.append(jnp.mean(h, axis=(2, 3)))                   # global avg pool
    h = jnp.concatenate(feats, axis=1)
    for w, b in params["fc"]:
        h = jnp.maximum(h @ w.astype(jnp.float32) + b, 0.0)
    w, b = params["out"]
    return h @ w.astype(jnp.float32) + b


# ------------------------------------ main ------------------------------------

if __name__ == "__main__":
    # Small config consistent with Model4's constructor signature.
    in_dims = (1, 16, 16)          # (C, H, W) per view
    channels = (8, 16)
    strides = (1, 2)
    fc_sizes = (32,)
    dropouts = (0.5,)              # identity at inference; kept for signature parity
    out_classes = 3
    batch = 2

    key = jax.random.PRNGKey(0)
    key, kp, k1, k2, k3, k4 = jax.random.split(key, 6)
    params = make_params(kp, in_dims, out_classes, channels, strides, fc_sizes)

    shape_nchw = (batch, in_dims[0], in_dims[1], in_dims[2])
    l_cc = jax.random.normal(k1, shape_nchw, jnp.float32)
    l_mlo = jax.random.normal(k2, shape_nchw, jnp.float32)
    r_cc = jax.random.normal(k3, shape_nchw, jnp.float32)
    r_mlo = jax.random.normal(k4, shape_nchw, jnp.float32)

    out = model4_forward(params, l_cc, l_mlo, r_cc, r_mlo)
    out = jax.block_until_ready(out)

    assert out.shape == (batch, out_classes), out.shape
    assert bool(jnp.all(jnp.isfinite(out)))

    # Tolerance check against a pure-JAX f32 reference (bf16 drift expected).
    ref = _reference_forward(params, l_cc, l_mlo, r_cc, r_mlo)
    rel_err = float(jnp.linalg.norm(out - ref)
                    / jnp.maximum(jnp.linalg.norm(ref), 1e-6))
    assert rel_err < 0.05, f"kernel vs reference relative L2 error {rel_err:.4f}"

    print("KERNEL_OK")
</pallas_src>

<mosaic_0001>
module attributes {stable_mosaic.version = 11 : i64} {
  func.func @_cnn_kernel(%arg0: i32, %arg1: memref<1x1x648xbf16, #tpu.memory_space<vmem>>, %arg2: memref<1x648xf32, #tpu.memory_space<vmem>>, %arg3: memref<2x1x648xf32, #tpu.memory_space<vmem>>, %arg4: memref<1x9x8x1xbf16, #tpu.memory_space<vmem>>, %arg5: memref<1x8x1xf32, #tpu.memory_space<vmem>>, %arg6: memref<1x9x16x8xbf16, #tpu.memory_space<vmem>>, %arg7: memref<1x16x1xf32, #tpu.memory_space<vmem>>, %arg8: memref<1x2x16xf32, #tpu.memory_space<vmem>>) attributes {dimension_semantics = [#tpu.dimension_semantics<parallel>], iteration_bounds = array<i64: 4>, scalar_prefetch = 0 : i64, scratch_operands = 0 : i64, tpu.core_type = #tpu.core_type<tc>, window_params = [{transform_indices = @transform_0, window_bounds = array<i64: 1, 1, 648>}, {pipeline_mode = #tpu.pipeline_mode<synchronous>, transform_indices = @transform_1, window_bounds = array<i64: 1, 648>}, {pipeline_mode = #tpu.pipeline_mode<synchronous>, transform_indices = @transform_2, window_bounds = array<i64: 2, 1, 648>}, {transform_indices = @transform_3, window_bounds = array<i64: 1, 9, 8, 1>}, {transform_indices = @transform_4, window_bounds = array<i64: 1, 8, 1>}, {transform_indices = @transform_5, window_bounds = array<i64: 1, 9, 16, 8>}, {transform_indices = @transform_6, window_bounds = array<i64: 1, 16, 1>}, {transform_indices = @transform_7, window_bounds = array<i64: 1, 2, 16>}]} {
    %c0 = arith.constant 0 : index
    %c0_0 = arith.constant 0 : index
    %c0_1 = arith.constant 0 : index
    %0 = vector.load %arg1[%c0, %c0_0, %c0_1] : memref<1x1x648xbf16, #tpu.memory_space<vmem>>, vector<1x1x648xbf16>
    %1 = vector.shape_cast %0 : vector<1x1x648xbf16> to vector<1x648xbf16>
    %c0_2 = arith.constant 0 : index
    %c0_3 = arith.constant 0 : index
    %2 = vector.load %arg2[%c0_2, %c0_3] : memref<1x648xf32, #tpu.memory_space<vmem>>, vector<1x648xf32>
    %c0_4 = arith.constant 0 : index
    %c0_5 = arith.constant 0 : index
    %c0_6 = arith.constant 0 : index
    %3 = vector.load %arg5[%c0_4, %c0_5, %c0_6] : memref<1x8x1xf32, #tpu.memory_space<vmem>>, vector<1x8x1xf32>
    %4 = vector.shape_cast %3 : vector<1x8x1xf32> to vector<8x1xf32>
    %cst = arith.constant 0.000000e+00 : bf16
    %5 = vector.broadcast %cst : bf16 to vector<1x19xbf16>
    %6 = tpu.concatenate %5, %1, %5 in 1 : vector<1x19xbf16>, vector<1x648xbf16>, vector<1x19xbf16> -> vector<1x686xbf16>
    %7 = vector.extract_strided_slice %6 {offsets = [0, 0], sizes = [1, 648], strides = [1, 1]} : vector<1x686xbf16> to vector<1x648xbf16>
    %c0_7 = arith.constant 0 : index
    %c0_8 = arith.constant 0 : index
    %c0_9 = arith.constant 0 : index
    %c0_10 = arith.constant 0 : index
    %8 = vector.load %arg4[%c0_7, %c0_8, %c0_9, %c0_10] : memref<1x9x8x1xbf16, #tpu.memory_space<vmem>>, vector<1x1x8x1xbf16>
    %9 = vector.shape_cast %8 : vector<1x1x8x1xbf16> to vector<8x1xbf16>
    %cst_11 = arith.constant dense<0.000000e+00> : vector<8x648xf32>
    %10 = tpu.matmul %9, %7, %cst_11 {dimension_numbers = #tpu.dot_dimension_numbers<[1], [0], [0], [1], [0, 0, 1, 1], [], []>} : vector<8x1xbf16>, vector<1x648xbf16>, vector<8x648xf32> -> vector<8x648xf32>
    %11 = vector.extract_strided_slice %6 {offsets = [0, 1], sizes = [1, 648], strides = [1, 1]} : vector<1x686xbf16> to vector<1x648xbf16>
    %c0_12 = arith.constant 0 : index
    %c1 = arith.constant 1 : index
    %c0_13 = arith.constant 0 : index
    %c0_14 = arith.constant 0 : index
    %12 = vector.load %arg4[%c0_12, %c1, %c0_13, %c0_14] : memref<1x9x8x1xbf16, #tpu.memory_space<vmem>>, vector<1x1x8x1xbf16>
    %13 = vector.shape_cast %12 : vector<1x1x8x1xbf16> to vector<8x1xbf16>
    %cst_15 = arith.constant dense<0.000000e+00> : vector<8x648xf32>
    %14 = tpu.matmul %13, %11, %cst_15 {dimension_numbers = #tpu.dot_dimension_numbers<[1], [0], [0], [1], [0, 0, 1, 1], [], []>} : vector<8x1xbf16>, vector<1x648xbf16>, vector<8x648xf32> -> vector<8x648xf32>
    %15 = arith.addf %10, %14 : vector<8x648xf32>
    %16 = vector.extract_strided_slice %6 {offsets = [0, 2], sizes = [1, 648], strides = [1, 1]} : vector<1x686xbf16> to vector<1x648xbf16>
    %c0_16 = arith.constant 0 : index
    %c2 = arith.constant 2 : index
    %c0_17 = arith.constant 0 : index
    %c0_18 = arith.constant 0 : index
    %17 = vector.load %arg4[%c0_16, %c2, %c0_17, %c0_18] : memref<1x9x8x1xbf16, #tpu.memory_space<vmem>>, vector<1x1x8x1xbf16>
    %18 = vector.shape_cast %17 : vector<1x1x8x1xbf16> to vector<8x1xbf16>
    %cst_19 = arith.constant dense<0.000000e+00> : vector<8x648xf32>
    %19 = tpu.matmul %18, %16, %cst_19 {dimension_numbers = #tpu.dot_dimension_numbers<[1], [0], [0], [1], [0, 0, 1, 1], [], []>} : vector<8x1xbf16>, vector<1x648xbf16>, vector<8x648xf32> -> vector<8x648xf32>
    %20 = arith.addf %15, %19 : vector<8x648xf32>
    %21 = vector.extract_strided_slice %6 {offsets = [0, 18], sizes = [1, 648], strides = [1, 1]} : vector<1x686xbf16> to vector<1x648xbf16>
    %c0_20 = arith.constant 0 : index
    %c3 = arith.constant 3 : index
    %c0_21 = arith.constant 0 : index
    %c0_22 = arith.constant 0 : index
    %22 = vector.load %arg4[%c0_20, %c3, %c0_21, %c0_22] : memref<1x9x8x1xbf16, #tpu.memory_space<vmem>>, vector<1x1x8x1xbf16>
    %23 = vector.shape_cast %22 : vector<1x1x8x1xbf16> to vector<8x1xbf16>
    %cst_23 = arith.constant dense<0.000000e+00> : vector<8x648xf32>
    %24 = tpu.matmul %23, %21, %cst_23 {dimension_numbers = #tpu.dot_dimension_numbers<[1], [0], [0], [1], [0, 0, 1, 1], [], []>} : vector<8x1xbf16>, vector<1x648xbf16>, vector<8x648xf32> -> vector<8x648xf32>
    %25 = arith.addf %20, %24 : vector<8x648xf32>
    %26 = vector.extract_strided_slice %6 {offsets = [0, 19], sizes = [1, 648], strides = [1, 1]} : vector<1x686xbf16> to vector<1x648xbf16>
    %c0_24 = arith.constant 0 : index
    %c4 = arith.constant 4 : index
    %c0_25 = arith.constant 0 : index
    %c0_26 = arith.constant 0 : index
    %27 = vector.load %arg4[%c0_24, %c4, %c0_25, %c0_26] : memref<1x9x8x1xbf16, #tpu.memory_space<vmem>>, vector<1x1x8x1xbf16>
    %28 = vector.shape_cast %27 : vector<1x1x8x1xbf16> to vector<8x1xbf16>
    %cst_27 = arith.constant dense<0.000000e+00> : vector<8x648xf32>
    %29 = tpu.matmul %28, %26, %cst_27 {dimension_numbers = #tpu.dot_dimension_numbers<[1], [0], [0], [1], [0, 0, 1, 1], [], []>} : vector<8x1xbf16>, vector<1x648xbf16>, vector<8x648xf32> -> vector<8x648xf32>
    %30 = arith.addf %25, %29 : vector<8x648xf32>
    %31 = vector.extract_strided_slice %6 {offsets = [0, 20], sizes = [1, 648], strides = [1, 1]} : vector<1x686xbf16> to vector<1x648xbf16>
    %c0_28 = arith.constant 0 : index
    %c5 = arith.constant 5 : index
    %c0_29 = arith.constant 0 : index
    %c0_30 = arith.constant 0 : index
    %32 = vector.load %arg4[%c0_28, %c5, %c0_29, %c0_30] : memref<1x9x8x1xbf16, #tpu.memory_space<vmem>>, vector<1x1x8x1xbf16>
    %33 = vector.shape_cast %32 : vector<1x1x8x1xbf16> to vector<8x1xbf16>
    %cst_31 = arith.constant dense<0.000000e+00> : vector<8x648xf32>
    %34 = tpu.matmul %33, %31, %cst_31 {dimension_numbers = #tpu.dot_dimension_numbers<[1], [0], [0], [1], [0, 0, 1, 1], [], []>} : vector<8x1xbf16>, vector<1x648xbf16>, vector<8x648xf32> -> vector<8x648xf32>
    %35 = arith.addf %30, %34 : vector<8x648xf32>
    %36 = vector.extract_strided_slice %6 {offsets = [0, 36], sizes = [1, 648], strides = [1, 1]} : vector<1x686xbf16> to vector<1x648xbf16>
    %c0_32 = arith.constant 0 : index
    %c6 = arith.constant 6 : index
    %c0_33 = arith.constant 0 : index
    %c0_34 = arith.constant 0 : index
    %37 = vector.load %arg4[%c0_32, %c6, %c0_33, %c0_34] : memref<1x9x8x1xbf16, #tpu.memory_space<vmem>>, vector<1x1x8x1xbf16>
    %38 = vector.shape_cast %37 : vector<1x1x8x1xbf16> to vector<8x1xbf16>
    %cst_35 = arith.constant dense<0.000000e+00> : vector<8x648xf32>
    %39 = tpu.matmul %38, %36, %cst_35 {dimension_numbers = #tpu.dot_dimension_numbers<[1], [0], [0], [1], [0, 0, 1, 1], [], []>} : vector<8x1xbf16>, vector<1x648xbf16>, vector<8x648xf32> -> vector<8x648xf32>
    %40 = arith.addf %35, %39 : vector<8x648xf32>
    %41 = vector.extract_strided_slice %6 {offsets = [0, 37], sizes = [1, 648], strides = [1, 1]} : vector<1x686xbf16> to vector<1x648xbf16>
    %c0_36 = arith.constant 0 : index
    %c7 = arith.constant 7 : index
    %c0_37 = arith.constant 0 : index
    %c0_38 = arith.constant 0 : index
    %42 = vector.load %arg4[%c0_36, %c7, %c0_37, %c0_38] : memref<1x9x8x1xbf16, #tpu.memory_space<vmem>>, vector<1x1x8x1xbf16>
    %43 = vector.shape_cast %42 : vector<1x1x8x1xbf16> to vector<8x1xbf16>
    %cst_39 = arith.constant dense<0.000000e+00> : vector<8x648xf32>
    %44 = tpu.matmul %43, %41, %cst_39 {dimension_numbers = #tpu.dot_dimension_numbers<[1], [0], [0], [1], [0, 0, 1, 1], [], []>} : vector<8x1xbf16>, vector<1x648xbf16>, vector<8x648xf32> -> vector<8x648xf32>
    %45 = arith.addf %40, %44 : vector<8x648xf32>
    %46 = vector.extract_strided_slice %6 {offsets = [0, 38], sizes = [1, 648], strides = [1, 1]} : vector<1x686xbf16> to vector<1x648xbf16>
    %c0_40 = arith.constant 0 : index
    %c8 = arith.constant 8 : index
    %c0_41 = arith.constant 0 : index
    %c0_42 = arith.constant 0 : index
    %47 = vector.load %arg4[%c0_40, %c8, %c0_41, %c0_42] : memref<1x9x8x1xbf16, #tpu.memory_space<vmem>>, vector<1x1x8x1xbf16>
    %48 = vector.shape_cast %47 : vector<1x1x8x1xbf16> to vector<8x1xbf16>
    %cst_43 = arith.constant dense<0.000000e+00> : vector<8x648xf32>
    %49 = tpu.matmul %48, %46, %cst_43 {dimension_numbers = #tpu.dot_dimension_numbers<[1], [0], [0], [1], [0, 0, 1, 1], [], []>} : vector<8x1xbf16>, vector<1x648xbf16>, vector<8x648xf32> -> vector<8x648xf32>
    %50 = arith.addf %45, %49 : vector<8x648xf32>
    %51 = vector.broadcast %4 : vector<8x1xf32> to vector<8x648xf32>
    %52 = arith.addf %50, %51 : vector<8x648xf32>
    %cst_44 = arith.constant 0.000000e+00 : f32
    %53 = vector.broadcast %cst_44 : f32 to vector<8x648xf32>
    %54 = arith.maximumf %52, %53 : vector<8x648xf32>
    %55 = vector.broadcast %2 : vector<1x648xf32> to vector<8x648xf32>
    %56 = arith.mulf %54, %55 : vector<8x648xf32>
    %57 = arith.truncf %56 : vector<8x648xf32> to vector<8x648xbf16>
    %c0_45 = arith.constant 0 : index
    %c0_46 = arith.constant 0 : index
    %c0_47 = arith.constant 0 : index
    %58 = vector.load %arg7[%c0_45, %c0_46, %c0_47] : memref<1x16x1xf32, #tpu.memory_space<vmem>>, vector<1x16x1xf32>
    %59 = vector.shape_cast %58 : vector<1x16x1xf32> to vector<16x1xf32>
    %cst_48 = arith.constant 0.000000e+00 : bf16
    %60 = vector.broadcast %cst_48 : bf16 to vector<8x19xbf16>
    %61 = tpu.concatenate %60, %57, %60 in 1 : vector<8x19xbf16>, vector<8x648xbf16>, vector<8x19xbf16> -> vector<8x686xbf16>
    %62 = vector.extract_strided_slice %61 {offsets = [0, 0], sizes = [8, 648], strides = [1, 1]} : vector<8x686xbf16> to vector<8x648xbf16>
    %c0_49 = arith.constant 0 : index
    %c0_50 = arith.constant 0 : index
    %c0_51 = arith.constant 0 : index
    %c0_52 = arith.constant 0 : index
    %63 = vector.load %arg6[%c0_49, %c0_50, %c0_51, %c0_52] : memref<1x9x16x8xbf16, #tpu.memory_space<vmem>>, vector<1x1x16x8xbf16>
    %64 = vector.shape_cast %63 : vector<1x1x16x8xbf16> to vector<16x8xbf16>
    %cst_53 = arith.constant dense<0.000000e+00> : vector<16x648xf32>
    %65 = tpu.matmul %64, %62, %cst_53 {dimension_numbers = #tpu.dot_dimension_numbers<[1], [0], [0], [1], [0, 0, 1, 1], [], []>} : vector<16x8xbf16>, vector<8x648xbf16>, vector<16x648xf32> -> vector<16x648xf32>
    %66 = vector.extract_strided_slice %61 {offsets = [0, 1], sizes = [8, 648], strides = [1, 1]} : vector<8x686xbf16> to vector<8x648xbf16>
    %c0_54 = arith.constant 0 : index
    %c1_55 = arith.constant 1 : index
    %c0_56 = arith.constant 0 : index
    %c0_57 = arith.constant 0 : index
    %67 = vector.load %arg6[%c0_54, %c1_55, %c0_56, %c0_57] : memref<1x9x16x8xbf16, #tpu.memory_space<vmem>>, vector<1x1x16x8xbf16>
    %68 = vector.shape_cast %67 : vector<1x1x16x8xbf16> to vector<16x8xbf16>
    %cst_58 = arith.constant dense<0.000000e+00> : vector<16x648xf32>
    %69 = tpu.matmul %68, %66, %cst_58 {dimension_numbers = #tpu.dot_dimension_numbers<[1], [0], [0], [1], [0, 0, 1, 1], [], []>} : vector<16x8xbf16>, vector<8x648xbf16>, vector<16x648xf32> -> vector<16x648xf32>
    %70 = arith.addf %65, %69 : vector<16x648xf32>
    %71 = vector.extract_strided_slice %61 {offsets = [0, 2], sizes = [8, 648], strides = [1, 1]} : vector<8x686xbf16> to vector<8x648xbf16>
    %c0_59 = arith.constant 0 : index
    %c2_60 = arith.constant 2 : index
    %c0_61 = arith.constant 0 : index
    %c0_62 = arith.constant 0 : index
    %72 = vector.load %arg6[%c0_59, %c2_60, %c0_61, %c0_62] : memref<1x9x16x8xbf16, #tpu.memory_space<vmem>>, vector<1x1x16x8xbf16>
    %73 = vector.shape_cast %72 : vector<1x1x16x8xbf16> to vector<16x8xbf16>
    %cst_63 = arith.constant dense<0.000000e+00> : vector<16x648xf32>
    %74 = tpu.matmul %73, %71, %cst_63 {dimension_numbers = #tpu.dot_dimension_numbers<[1], [0], [0], [1], [0, 0, 1, 1], [], []>} : vector<16x8xbf16>, vector<8x648xbf16>, vector<16x648xf32> -> vector<16x648xf32>
    %75 = arith.addf %70, %74 : vector<16x648xf32>
    %76 = vector.extract_strided_slice %61 {offsets = [0, 18], sizes = [8, 648], strides = [1, 1]} : vector<8x686xbf16> to vector<8x648xbf16>
    %c0_64 = arith.constant 0 : index
    %c3_65 = arith.constant 3 : index
    %c0_66 = arith.constant 0 : index
    %c0_67 = arith.constant 0 : index
    %77 = vector.load %arg6[%c0_64, %c3_65, %c0_66, %c0_67] : memref<1x9x16x8xbf16, #tpu.memory_space<vmem>>, vector<1x1x16x8xbf16>
    %78 = vector.shape_cast %77 : vector<1x1x16x8xbf16> to vector<16x8xbf16>
    %cst_68 = arith.constant dense<0.000000e+00> : vector<16x648xf32>
    %79 = tpu.matmul %78, %76, %cst_68 {dimension_numbers = #tpu.dot_dimension_numbers<[1], [0], [0], [1], [0, 0, 1, 1], [], []>} : vector<16x8xbf16>, vector<8x648xbf16>, vector<16x648xf32> -> vector<16x648xf32>
    %80 = arith.addf %75, %79 : vector<16x648xf32>
    %81 = vector.extract_strided_slice %61 {offsets = [0, 19], sizes = [8, 648], strides = [1, 1]} : vector<8x686xbf16> to vector<8x648xbf16>
    %c0_69 = arith.constant 0 : index
    %c4_70 = arith.constant 4 : index
    %c0_71 = arith.constant 0 : index
    %c0_72 = arith.constant 0 : index
    %82 = vector.load %arg6[%c0_69, %c4_70, %c0_71, %c0_72] : memref<1x9x16x8xbf16, #tpu.memory_space<vmem>>, vector<1x1x16x8xbf16>
    %83 = vector.shape_cast %82 : vector<1x1x16x8xbf16> to vector<16x8xbf16>
    %cst_73 = arith.constant dense<0.000000e+00> : vector<16x648xf32>
    %84 = tpu.matmul %83, %81, %cst_73 {dimension_numbers = #tpu.dot_dimension_numbers<[1], [0], [0], [1], [0, 0, 1, 1], [], []>} : vector<16x8xbf16>, vector<8x648xbf16>, vector<16x648xf32> -> vector<16x648xf32>
    %85 = arith.addf %80, %84 : vector<16x648xf32>
    %86 = vector.extract_strided_slice %61 {offsets = [0, 20], sizes = [8, 648], strides = [1, 1]} : vector<8x686xbf16> to vector<8x648xbf16>
    %c0_74 = arith.constant 0 : index
    %c5_75 = arith.constant 5 : index
    %c0_76 = arith.constant 0 : index
    %c0_77 = arith.constant 0 : index
    %87 = vector.load %arg6[%c0_74, %c5_75, %c0_76, %c0_77] : memref<1x9x16x8xbf16, #tpu.memory_space<vmem>>, vector<1x1x16x8xbf16>
    %88 = vector.shape_cast %87 : vector<1x1x16x8xbf16> to vector<16x8xbf16>
    %cst_78 = arith.constant dense<0.000000e+00> : vector<16x648xf32>
    %89 = tpu.matmul %88, %86, %cst_78 {dimension_numbers = #tpu.dot_dimension_numbers<[1], [0], [0], [1], [0, 0, 1, 1], [], []>} : vector<16x8xbf16>, vector<8x648xbf16>, vector<16x648xf32> -> vector<16x648xf32>
    %90 = arith.addf %85, %89 : vector<16x648xf32>
    %91 = vector.extract_strided_slice %61 {offsets = [0, 36], sizes = [8, 648], strides = [1, 1]} : vector<8x686xbf16> to vector<8x648xbf16>
    %c0_79 = arith.constant 0 : index
    %c6_80 = arith.constant 6 : index
    %c0_81 = arith.constant 0 : index
    %c0_82 = arith.constant 0 : index
    %92 = vector.load %arg6[%c0_79, %c6_80, %c0_81, %c0_82] : memref<1x9x16x8xbf16, #tpu.memory_space<vmem>>, vector<1x1x16x8xbf16>
    %93 = vector.shape_cast %92 : vector<1x1x16x8xbf16> to vector<16x8xbf16>
    %cst_83 = arith.constant dense<0.000000e+00> : vector<16x648xf32>
    %94 = tpu.matmul %93, %91, %cst_83 {dimension_numbers = #tpu.dot_dimension_numbers<[1], [0], [0], [1], [0, 0, 1, 1], [], []>} : vector<16x8xbf16>, vector<8x648xbf16>, vector<16x648xf32> -> vector<16x648xf32>
    %95 = arith.addf %90, %94 : vector<16x648xf32>
    %96 = vector.extract_strided_slice %61 {offsets = [0, 37], sizes = [8, 648], strides = [1, 1]} : vector<8x686xbf16> to vector<8x648xbf16>
    %c0_84 = arith.constant 0 : index
    %c7_85 = arith.constant 7 : index
    %c0_86 = arith.constant 0 : index
    %c0_87 = arith.constant 0 : index
    %97 = vector.load %arg6[%c0_84, %c7_85, %c0_86, %c0_87] : memref<1x9x16x8xbf16, #tpu.memory_space<vmem>>, vector<1x1x16x8xbf16>
    %98 = vector.shape_cast %97 : vector<1x1x16x8xbf16> to vector<16x8xbf16>
    %cst_88 = arith.constant dense<0.000000e+00> : vector<16x648xf32>
    %99 = tpu.matmul %98, %96, %cst_88 {dimension_numbers = #tpu.dot_dimension_numbers<[1], [0], [0], [1], [0, 0, 1, 1], [], []>} : vector<16x8xbf16>, vector<8x648xbf16>, vector<16x648xf32> -> vector<16x648xf32>
    %100 = arith.addf %95, %99 : vector<16x648xf32>
    %101 = vector.extract_strided_slice %61 {offsets = [0, 38], sizes = [8, 648], strides = [1, 1]} : vector<8x686xbf16> to vector<8x648xbf16>
    %c0_89 = arith.constant 0 : index
    %c8_90 = arith.constant 8 : index
    %c0_91 = arith.constant 0 : index
    %c0_92 = arith.constant 0 : index
    %102 = vector.load %arg6[%c0_89, %c8_90, %c0_91, %c0_92] : memref<1x9x16x8xbf16, #tpu.memory_space<vmem>>, vector<1x1x16x8xbf16>
    %103 = vector.shape_cast %102 : vector<1x1x16x8xbf16> to vector<16x8xbf16>
    %cst_93 = arith.constant dense<0.000000e+00> : vector<16x648xf32>
    %104 = tpu.matmul %103, %101, %cst_93 {dimension_numbers = #tpu.dot_dimension_numbers<[1], [0], [0], [1], [0, 0, 1, 1], [], []>} : vector<16x8xbf16>, vector<8x648xbf16>, vector<16x648xf32> -> vector<16x648xf32>
    %105 = arith.addf %100, %104 : vector<16x648xf32>
    %106 = vector.broadcast %59 : vector<16x1xf32> to vector<16x648xf32>
    %107 = arith.addf %105, %106 : vector<16x648xf32>
    %cst_94 = arith.constant 0.000000e+00 : f32
    %108 = vector.broadcast %cst_94 : f32 to vector<16x648xf32>
    %109 = arith.maximumf %107, %108 : vector<16x648xf32>
    %c0_95 = arith.constant 0 : index
    %c0_96 = arith.constant 0 : index
    %c0_97 = arith.constant 0 : index
    %110 = vector.load %arg3[%c0_95, %c0_96, %c0_97] : memref<2x1x648xf32, #tpu.memory_space<vmem>>, vector<2x1x648xf32>
    %111 = vector.shape_cast %109 : vector<16x648xf32> to vector<1x16x648xf32>
    %112 = vector.broadcast %110 : vector<2x1x648xf32> to vector<2x16x648xf32>
    %113 = vector.broadcast %111 : vector<1x16x648xf32> to vector<2x16x648xf32>
    %114 = arith.mulf %112, %113 : vector<2x16x648xf32>
    %cst_98 = arith.constant dense<0.000000e+00> : vector<2x16xf32>
    %115 = vector.multi_reduction <add>, %114, %cst_98 [2] : vector<2x16x648xf32> to vector<2x16xf32>
    %cst_99 = arith.constant 1.562500e-02 : f32
    %116 = vector.broadcast %cst_99 : f32 to vector<2x16xf32>
    %117 = arith.mulf %115, %116 : vector<2x16xf32>
    %c0_100 = arith.constant 0 : index
    %c0_101 = arith.constant 0 : index
    %c0_102 = arith.constant 0 : index
    %118 = vector.load %arg8[%c0_100, %c0_101, %c0_102] : memref<1x2x16xf32, #tpu.memory_space<vmem>>, vector<1x2x16xf32>
    %119 = vector.shape_cast %118 : vector<1x2x16xf32> to vector<2x16xf32>
    %120 = vector.shape_cast %117 : vector<2x16xf32> to vector<1x2x16xf32>
    tpu.vector_store %arg8[%c0_100, %c0_101, %c0_102], %120 {strides = array<i32>} : memref<1x2x16xf32, #tpu.memory_space<vmem>>, vector<1x2x16xf32>,
    return
  }
  func.func @transform_0(%arg0: i32) -> (i32, i32, i32) {
    %c0_i32 = arith.constant 0 : i32
    %c0_i32_0 = arith.constant 0 : i32
    %c0_i32_1 = arith.constant 0 : i32
    return %arg0, %c0_i32, %c0_i32_0 : i32, i32, i32
  }
  func.func @transform_1(%arg0: i32) -> (i32, i32) {
    %c0_i32 = arith.constant 0 : i32
    %c0_i32_0 = arith.constant 0 : i32
    %c0_i32_1 = arith.constant 0 : i32
    return %c0_i32, %c0_i32_0 : i32, i32
  }
  func.func @transform_2(%arg0: i32) -> (i32, i32, i32) {
    %c0_i32 = arith.constant 0 : i32
    %c0_i32_0 = arith.constant 0 : i32
    %c0_i32_1 = arith.constant 0 : i32
    %c0_i32_2 = arith.constant 0 : i32
    return %c0_i32, %c0_i32_0, %c0_i32_1 : i32, i32, i32
  }
  func.func @transform_3(%arg0: i32) -> (i32, i32, i32, i32) {
    %c0_i32 = arith.constant 0 : i32
    %c0_i32_0 = arith.constant 0 : i32
    %c0_i32_1 = arith.constant 0 : i32
    %c0_i32_2 = arith.constant 0 : i32
    return %arg0, %c0_i32, %c0_i32_0, %c0_i32_1 : i32, i32, i32, i32
  }
  func.func @transform_4(%arg0: i32) -> (i32, i32, i32) {
    %c0_i32 = arith.constant 0 : i32
    %c0_i32_0 = arith.constant 0 : i32
    %c0_i32_1 = arith.constant 0 : i32
    return %arg0, %c0_i32, %c0_i32_0 : i32, i32, i32
  }
  func.func @transform_5(%arg0: i32) -> (i32, i32, i32, i32) {
    %c0_i32 = arith.constant 0 : i32
    %c0_i32_0 = arith.constant 0 : i32
    %c0_i32_1 = arith.constant 0 : i32
    %c0_i32_2 = arith.constant 0 : i32
    return %arg0, %c0_i32, %c0_i32_0, %c0_i32_1 : i32, i32, i32, i32
  }
  func.func @transform_6(%arg0: i32) -> (i32, i32, i32) {
    %c0_i32 = arith.constant 0 : i32
    %c0_i32_0 = arith.constant 0 : i32
    %c0_i32_1 = arith.constant 0 : i32
    return %arg0, %c0_i32, %c0_i32_0 : i32, i32, i32
  }
  func.func @transform_7(%arg0: i32) -> (i32, i32, i32) {
    %c0_i32 = arith.constant 0 : i32
    %c0_i32_0 = arith.constant 0 : i32
    %c0_i32_1 = arith.constant 0 : i32
    return %arg0, %c0_i32, %c0_i32_0 : i32, i32, i32
  }
}

module attributes {stable_mosaic.version = 11 : i64} {
  func.func @_mlp_kernel(%arg0: memref<4x2x16xf32, #tpu.memory_space<vmem>>, %arg1: memref<64x32xbf16, #tpu.memory_space<vmem>>, %arg2: memref<1x32xf32, #tpu.memory_space<vmem>>, %arg3: memref<32x3xbf16, #tpu.memory_space<vmem>>, %arg4: memref<1x3xf32, #tpu.memory_space<vmem>>, %arg5: memref<2x3xf32, #tpu.memory_space<vmem>>) attributes {dimension_semantics = [], scalar_prefetch = 0 : i64, scratch_operands = 0 : i64, tpu.core_type = #tpu.core_type<tc>} {
    %c0 = arith.constant 0 : index
    %c0_0 = arith.constant 0 : index
    %c0_1 = arith.constant 0 : index
    %0 = vector.load %arg0[%c0, %c0_0, %c0_1] : memref<4x2x16xf32, #tpu.memory_space<vmem>>, vector<1x2x16xf32>
    %1 = vector.shape_cast %0 : vector<1x2x16xf32> to vector<2x16xf32>
    %c1 = arith.constant 1 : index
    %c0_2 = arith.constant 0 : index
    %c0_3 = arith.constant 0 : index
    %2 = vector.load %arg0[%c1, %c0_2, %c0_3] : memref<4x2x16xf32, #tpu.memory_space<vmem>>, vector<1x2x16xf32>
    %3 = vector.shape_cast %2 : vector<1x2x16xf32> to vector<2x16xf32>
    %c2 = arith.constant 2 : index
    %c0_4 = arith.constant 0 : index
    %c0_5 = arith.constant 0 : index
    %4 = vector.load %arg0[%c2, %c0_4, %c0_5] : memref<4x2x16xf32, #tpu.memory_space<vmem>>, vector<1x2x16xf32>
    %5 = vector.shape_cast %4 : vector<1x2x16xf32> to vector<2x16xf32>
    %c3 = arith.constant 3 : index
    %c0_6 = arith.constant 0 : index
    %c0_7 = arith.constant 0 : index
    %6 = vector.load %arg0[%c3, %c0_6, %c0_7] : memref<4x2x16xf32, #tpu.memory_space<vmem>>, vector<1x2x16xf32>
    %7 = vector.shape_cast %6 : vector<1x2x16xf32> to vector<2x16xf32>
    %8 = tpu.concatenate %1, %3, %5, %7 in 1 : vector<2x16xf32>, vector<2x16xf32>, vector<2x16xf32>, vector<2x16xf32> -> vector<2x64xf32>
    %c0_8 = arith.constant 0 : index
    %c0_9 = arith.constant 0 : index
    %9 = vector.load %arg1[%c0_8, %c0_9] : memref<64x32xbf16, #tpu.memory_space<vmem>>, vector<64x32xbf16>
    %c0_10 = arith.constant 0 : index
    %c0_11 = arith.constant 0 : index
    %10 = vector.load %arg2[%c0_10, %c0_11] : memref<1x32xf32, #tpu.memory_space<vmem>>, vector<1x32xf32>
    %11 = arith.truncf %8 : vector<2x64xf32> to vector<2x64xbf16>
    %cst = arith.constant dense<0.000000e+00> : vector<2x32xf32>
    %12 = tpu.matmul %11, %9, %cst {dimension_numbers = #tpu.dot_dimension_numbers<[1], [0], [0], [1], [0, 0, 1, 1], [], []>} : vector<2x64xbf16>, vector<64x32xbf16>, vector<2x32xf32> -> vector<2x32xf32>
    %13 = vector.broadcast %10 : vector<1x32xf32> to vector<2x32xf32>
    %14 = arith.addf %12, %13 : vector<2x32xf32>
    %cst_12 = arith.constant 0.000000e+00 : f32
    %15 = vector.broadcast %cst_12 : f32 to vector<2x32xf32>
    %16 = arith.maximumf %14, %15 : vector<2x32xf32>
    %c0_13 = arith.constant 0 : index
    %c0_14 = arith.constant 0 : index
    %17 = vector.load %arg3[%c0_13, %c0_14] : memref<32x3xbf16, #tpu.memory_space<vmem>>, vector<32x3xbf16>
    %c0_15 = arith.constant 0 : index
    %c0_16 = arith.constant 0 : index
    %18 = vector.load %arg4[%c0_15, %c0_16] : memref<1x3xf32, #tpu.memory_space<vmem>>, vector<1x3xf32>
    %19 = arith.truncf %16 : vector<2x32xf32> to vector<2x32xbf16>
    %cst_17 = arith.constant dense<0.000000e+00> : vector<2x3xf32>
    %20 = tpu.matmul %19, %17, %cst_17 {dimension_numbers = #tpu.dot_dimension_numbers<[1], [0], [0], [1], [0, 0, 1, 1], [], []>} : vector<2x32xbf16>, vector<32x3xbf16>, vector<2x3xf32> -> vector<2x3xf32>
    %21 = vector.broadcast %18 : vector<1x3xf32> to vector<2x3xf32>
    %22 = arith.addf %20, %21 : vector<2x3xf32>
    %c0_18 = arith.constant 0 : index
    %c0_19 = arith.constant 0 : index
    %23 = vector.load %arg5[%c0_18, %c0_19] : memref<2x3xf32, #tpu.memory_space<vmem>>, vector<2x3xf32>
    tpu.vector_store %arg5[%c0_18, %c0_19], %22 {strides = array<i32>} : memref<2x3xf32, #tpu.memory_space<vmem>>, vector<2x3xf32>,
    return
  }
}

</mosaic_0001>

<llo_original>
// kernel: _forward_impl.3
$region0: #{_forward_impl.3}
  #allocation0 [shape = 'u32[]', space=smem, size = 0x4, offset = 0x4, fixed_abs, tag = 'smem constant byte address 0x4 - core index']
  #allocation1 [shape = 'u32[144,128]{1,0:T(1,128)}', space=vmem, size = 0x12000, scoped, tag = 'internal scratch']
  %s0 = inlined_call_operand.vmem [shape: f32[4,2,16], index: 0, kind: input, shape index: {}]
  %s1 = inlined_call_operand.vmem [shape: bf16[64,32], index: 1, kind: input, shape index: {}]
  %s2 = inlined_call_operand.vmem [shape: f32[1,32], index: 2, kind: input, shape index: {}]
  %s3 = inlined_call_operand.vmem [shape: bf16[32,3], index: 3, kind: input, shape index: {}]
  %s4 = inlined_call_operand.vmem [shape: f32[1,3], index: 4, kind: input, shape index: {}]
  %s5 = inlined_call_operand.hbm [shape: f32[2,3], index: 5, kind: output, shape index: {}]
  %s6 = sld [smem:[#allocation0]]
  $region30: #{_forward_impl.3} parent=0
    _
  %s8 = ssub.s32 1, %s6
  %s9 = scalar_select 0, %s8, %s6
  $region1: #{_forward_impl.3} parent=0
    #allocation2 [shape = 'u8[1024]{0}', space=vmem, size = 0x400, scoped, tag = 'output window, operand 0, single buffered']
    #allocation3 [shape = 's32[1]{0}', space=sflag, size = 0x4, scoped, tag = 'scoped memory for _forward_impl.3']
    %10 = vsyncpa [#allocation3], 0
    // Predicated region
    $region2: #{_forward_impl.3} parent=1 // pred_check
      _
    $region3: #{_forward_impl.3} parent=1 // pred_check_branch
      %12 = sbr.rel (0) target = $region5
    $region4: #{_forward_impl.3} parent=1 // pred_region
      _
    $region5: #{_forward_impl.3} parent=1 // pred_fallthru
      _
    // Predicated region
    $region6: #{_forward_impl.3} parent=1 // pred_check
      _
    $region7: #{_forward_impl.3} parent=1 // pred_check_branch
      %14 = sbr.rel (0) target = $region9
    $region8: #{_forward_impl.3} parent=1 // pred_region
      _
    $region9: #{_forward_impl.3} parent=1 // pred_fallthru
      _
    // Predicated region
    $region10: #{_forward_impl.3} parent=1 // pred_check
      _
    $region11: #{_forward_impl.3} parent=1 // pred_check_branch
      %16 = sbr.rel (0) target = $region13
    $region12: #{_forward_impl.3} parent=1 // pred_region
      _
    $region13: #{_forward_impl.3} parent=1 // pred_fallthru
      _
    // Predicated region
    $region14: #{_forward_impl.3} parent=1 // pred_check
      _
    $region15: #{_forward_impl.3} parent=1 // pred_check_branch
      %18 = sbr.rel (0) target = $region17
    $region16: #{_forward_impl.3} parent=1 // pred_region
      _
    $region17: #{_forward_impl.3} parent=1 // pred_fallthru
      _
    // Predicated region
    $region18: #{_forward_impl.3} parent=1 // pred_check
      _
    $region19: #{_forward_impl.3} parent=1 // pred_check_branch
      %20 = sbr.rel (0) target = $region21
    $region20: #{_forward_impl.3} parent=1 // pred_region
      _
    $region21: #{_forward_impl.3} parent=1 // pred_fallthru
      _
    %v22 = vld [vmem:[%s0] sm:$0x3]
    %s23 = scalar_lea.vmem %s0, 2
    %v24 = vld [vmem:[%s23] sm:$0x3]
    %s25 = scalar_lea.vmem %s0, 4
    %v26 = vld [vmem:[%s25] sm:$0x3]
    %s27 = scalar_lea.vmem %s0, 6
    %v28 = vld [vmem:[%s27] sm:$0x3]
    %30 = vrot.lane.b32.xlu0 %v24, 16
    %v31 = vpop.permute.xlu0 %30
    %34 = vrot.lane.b32.xlu0 %v26, 32
    %v35 = vpop.permute.xlu0 %34
    %38 = vrot.lane.b32.xlu0 %v28, 48
    %v39 = vpop.permute.xlu0 %38
    %vm41 = vcmask 130048
    %v42 = vsel %vm41, %v22, %v31
    %vm43 = vcmask 261120
    %v44 = vsel %vm43, %v42, %v35
    %vm45 = vcmask 392192
    %v46 = vsel %vm45, %v44, %v39
    %v47 = vld [vmem:[%s1] sm:$0xf]
    %v48 = vld [vmem:[%s1 + $0x4] sm:$0xf]
    %v49 = vld [vmem:[%s1 + $0x8] sm:$0xf]
    %v50 = vld [vmem:[%s1 + $0xc] sm:$0xf]
    %v51 = vld [vmem:[%s1 + $0x10] sm:$0xf]
    %v52 = vld [vmem:[%s1 + $0x14] sm:$0xf]
    %v53 = vld [vmem:[%s1 + $0x18] sm:$0xf]
    %v54 = vld [vmem:[%s1 + $0x1c] sm:$0xf]
    %v55 = vld [vmem:[%s2] sm:$0x1]
    %v56 = vpack.c.bf16 %v46, %v46
    %v58 = vlaneseq
    %v59 = vshrl.u32 %v58, 7
    %v60 = vsub.s32 0, %v59
    %v61 = vrot.slane %v55, %v60
    %v71 = vunpack.c.l.b16 %v47
    %v72 = vunpack.c.l.b16 %v48
    %v73 = vunpack.c.l.b16 %v49
    %v74 = vunpack.c.l.b16 %v50
    %v75 = vunpack.c.l.b16 %v51
    %v76 = vunpack.c.l.b16 %v52
    %v77 = vunpack.c.l.b16 %v53
    %v78 = vunpack.c.l.b16 %v54
    %v79 = vpack.c.b16 %v72, %v71
    %v80 = vpack.c.b16 %v74, %v73
    %v81 = vpack.c.b16 %v76, %v75
    %v82 = vpack.c.b16 %v78, %v77
    %vm87 = vcmask 523264
    %v89 = vsel %vm87, %v56, 0
    %91 = vmatprep.subr.bf16.mxu0 0
    %92 = vmatpush1.bf16.msra.mxu0 %v79
    %93 = vmatprep.subr.bf16.mxu0 0
    %94 = vmatpush1.bf16.msra.mxu0 %v80
    %95 = vmatprep.subr.bf16.mxu0 0
    %96 = vmatpush1.bf16.msra.mxu0 %v81
    %97 = vmatprep.subr.bf16.mxu0 0
    %98 = vmatpush1.bf16.msra.mxu0 %v82
    %99 = vmatprep.subr.bf16.mxu0 0
    %100 = vmatpush1.bf16.msra.mxu0 0
    %101 = vmatprep.subr.bf16.mxu0 0
    %102 = vmatpush1.bf16.msra.mxu0 0
    %103 = vmatprep.subr.bf16.mxu0 0
    %104 = vmatpush1.bf16.msra.mxu0 0
    %105 = vmatprep.subr.bf16.mxu0 0
    %106 = vmatpush1.bf16.msra.mxu0 0
    %107 = vmatprep.subr.bf16.mxu0 0
    %108 = vmatpush1.bf16.msra.mxu0 0
    %109 = vmatprep.subr.bf16.mxu0 0
    %110 = vmatpush1.bf16.msra.mxu0 0
    %111 = vmatprep.subr.bf16.mxu0 0
    %112 = vmatpush1.bf16.msra.mxu0 0
    %113 = vmatprep.subr.bf16.mxu0 0
    %114 = vmatpush1.bf16.msra.mxu0 0
    %115 = vmatprep.subr.bf16.mxu0 0
    %116 = vmatpush1.bf16.msra.mxu0 0
    %117 = vmatprep.subr.bf16.mxu0 0
    %118 = vmatpush1.bf16.msra.mxu0 0
    %119 = vmatprep.subr.bf16.mxu0 0
    %120 = vmatpush1.bf16.msra.mxu0 0
    %121 = vmatprep.subr.bf16.mxu0 0
    %122 = vmatpush1.bf16.msra.mxu0 0
    %123 = vmatprep.mubr.bf16.mxu0 0
    %124 = vmatmul.mubr.bf16.gmra.mrb[0].mxu0 %v89
    %v125 = vpop.f32.mrb[0].mxu0
    %v126 = vadd.f32 %v61, %v125
    %v127 = vpop.f32.mrb[0].mxu0
    %v128 = vpop.f32.mrb[0].mxu0
    %v129 = vpop.f32.mrb[0].mxu0
    %130 = vdwg.mxu0
    %v131 = vmax.f32 %v126, 0.0
    %v132 = vld [vmem:[%s3] sm:$0xf]
    %v133 = vld [vmem:[%s3 + $0x4] sm:$0xf]
    %v134 = vld [vmem:[%s3 + $0x8] sm:$0xf]
    %v135 = vld [vmem:[%s3 + $0xc] sm:$0xf]
    %v136 = vld [vmem:[%s4] sm:$0x1]
    %v137 = vpack.c.bf16 %v131, %v131
    %v139 = vlaneseq
    %v140 = vshrl.u32 %v139, 7
    %v141 = vsub.s32 0, %v140
    %v142 = vrot.slane %v136, %v141
    %v148 = vunpack.c.l.b16 %v132
    %v149 = vunpack.c.l.b16 %v133
    %v150 = vunpack.c.l.b16 %v134
    %v151 = vunpack.c.l.b16 %v135
    %v152 = vpack.c.b16 %v149, %v148
    %v153 = vpack.c.b16 %v151, %v150
    %v157 = vsel %vm43, %v137, 0
    %159 = vmatprep.subr.bf16.mxu0 0
    %160 = vmatpush1.bf16.msra.mxu0 %v152
    %161 = vmatprep.subr.bf16.mxu0 0
    %162 = vmatpush1.bf16.msra.mxu0 %v153
    %163 = vmatprep.subr.bf16.mxu0 0
    %164 = vmatpush1.bf16.msra.mxu0 0
    %165 = vmatprep.subr.bf16.mxu0 0
    %166 = vmatpush1.bf16.msra.mxu0 0
    %167 = vmatprep.subr.bf16.mxu0 0
    %168 = vmatpush1.bf16.msra.mxu0 0
    %169 = vmatprep.subr.bf16.mxu0 0
    %170 = vmatpush1.bf16.msra.mxu0 0
    %171 = vmatprep.subr.bf16.mxu0 0
    %172 = vmatpush1.bf16.msra.mxu0 0
    %173 = vmatprep.subr.bf16.mxu0 0
    %174 = vmatpush1.bf16.msra.mxu0 0
    %175 = vmatprep.subr.bf16.mxu0 0
    %176 = vmatpush1.bf16.msra.mxu0 0
    %177 = vmatprep.subr.bf16.mxu0 0
    %178 = vmatpush1.bf16.msra.mxu0 0
    %179 = vmatprep.subr.bf16.mxu0 0
    %180 = vmatpush1.bf16.msra.mxu0 0
    %181 = vmatprep.subr.bf16.mxu0 0
    %182 = vmatpush1.bf16.msra.mxu0 0
    %183 = vmatprep.subr.bf16.mxu0 0
    %184 = vmatpush1.bf16.msra.mxu0 0
    %185 = vmatprep.subr.bf16.mxu0 0
    %186 = vmatpush1.bf16.msra.mxu0 0
    %187 = vmatprep.subr.bf16.mxu0 0
    %188 = vmatpush1.bf16.msra.mxu0 0
    %189 = vmatprep.subr.bf16.mxu0 0
    %190 = vmatpush1.bf16.msra.mxu0 0
    %191 = vmatprep.mubr.bf16.mxu0 0
    %192 = vmatmul.mubr.bf16.gmra.mrb[0].mxu0 %v157
    %v193 = vpop.f32.mrb[0].mxu0
    %v194 = vadd.f32 %v142, %v193
    %v195 = vpop.f32.mrb[0].mxu0
    %v196 = vpop.f32.mrb[0].mxu0
    %v197 = vpop.f32.mrb[0].mxu0
    %198 = vdwg.mxu0
    %vm199 = vcmask 17408
    %200 = vst.msk [vmem:[#allocation2] sm:$0x3] %vm199, %v194
    // Predicated region
    $region22: #{_forward_impl.3} parent=1 // pred_check
      _
    $region23: #{_forward_impl.3} parent=1 // pred_check_branch
      %202 = sbr.rel (0) target = $region25
    $region24: #{_forward_impl.3} parent=1 // pred_region
      %s204 = ssub.s32 32, 32
      %205 = vsyncadd [#allocation3], %s204
      %s207 = sshll.u32 [#allocation2], 4
      %s208 = int_to_ptr.vmem [resolvable:$true] %s207
      %210 = dma.vmem_to_hbm [thread:$0]  %s208, 32, %s5, [#allocation3]
    $region25: #{_forward_impl.3} parent=1 // pred_fallthru
      _
    // Predicated region
    $region26: #{_forward_impl.3} parent=1 // pred_check
      _
    $region27: #{_forward_impl.3} parent=1 // pred_check_branch
      %212 = sbr.rel (0) target = $region29
    $region28: #{_forward_impl.3} parent=1 // pred_region
      %213 = dma.done [#allocation3], 32
    $region29: #{_forward_impl.3} parent=1 // pred_fallthru
      _
    %214 = vsyncpa [#allocation3], 1

// kernel: _forward_impl.2
$region0: #{_forward_impl.2}
  #allocation0 [shape = 'u32[]', space=smem, size = 0x4, offset = 0x4, fixed_abs, tag = 'smem constant byte address 0x4 - core index']
  #allocation1 [shape = 'u32[144,128]{1,0:T(1,128)}', space=vmem, size = 0x12000, scoped, tag = 'internal scratch']
  %s0 = inlined_call_operand.vmem [shape: bf16[4,1,648], index: 0, kind: input, shape index: {}]
  %s1 = inlined_call_operand.vmem [shape: f32[1,648], index: 1, kind: input, shape index: {}]
  %s2 = inlined_call_operand.vmem [shape: f32[2,1,648], index: 2, kind: input, shape index: {}]
  %s3 = inlined_call_operand.vmem [shape: bf16[4,9,8,1], index: 3, kind: input, shape index: {}]
  %s4 = inlined_call_operand.vmem [shape: f32[4,8,1], index: 4, kind: input, shape index: {}]
  %s5 = inlined_call_operand.vmem [shape: bf16[4,9,16,8], index: 5, kind: input, shape index: {}]
  %s6 = inlined_call_operand.vmem [shape: f32[4,16,1], index: 6, kind: input, shape index: {}]
  %s7 = inlined_call_operand.vmem [shape: f32[4,2,16], index: 7, kind: output, shape index: {}]
  %s8 = sld [smem:[#allocation0]]
  $region61: #{_forward_impl.2} parent=0
    _
  %s10 = ssub.s32 1, %s8
  %s11 = scalar_select 0, %s10, %s8
  loop: start=0, step=1, limit=6
  $region2: #{_forward_impl.2} parent=0 // loop_pre_header
    _
  $region3: #{_forward_impl.2} parent=0 // loop_header
    %s13 = sphi 0, %s17
    %p14 = scmp.ge.s32.totalorder %s13, 6
    %s23 = sphi 0, %s25
    %s26 = sphi 0, %s23
    %s27 = sphi 0, %s26
    %s43 = sphi 0, %s27
    %s47 = sphi 0, %s47
    %s49 = sphi 0, %s47
    %s50 = sphi 0, %s49
    %s64 = sphi 0, %s50
    %s68 = sphi 0, %s68
    %s70 = sphi 0, %s68
    %s71 = sphi 0, %s70
    %s85 = sphi 0, %s71
    %s91 = sphi 0, %s93
    %s94 = sphi 0, %s91
    %s95 = sphi 0, %s94
    %s111 = sphi 0, %s95
    %s117 = sphi 0, %s119
    %s120 = sphi 0, %s117
    %s121 = sphi 0, %s120
    %s137 = sphi 0, %s121
    %s143 = sphi 0, %s145
    %s146 = sphi 0, %s143
    %s147 = sphi 0, %s146
    %s163 = sphi 0, %s147
    %s169 = sphi 0, %s171
    %s172 = sphi 0, %s169
    %s173 = sphi 0, %s172
    %s189 = sphi 0, %s173
    %s195 = sphi 0, %s197
    %s198 = sphi 0, %s195
    %s199 = sphi 0, %s198
    %s215 = sphi 0, %s199
  $region4: #{_forward_impl.2} parent=0 // loop_header_branch
    %16 = sbr.rel (%p14) target = $region8
  $region5: #{_forward_impl.2} parent=0 // loop_body
    %s18 = ssub.s32 %s13, 1
    %s19 = ssub.s32 %s13, 2
    %s20 = sadd.s32 %s13, 1
    %s21 = ssub.s32 %s13, %s20
    %p22 = scmp.eq.s32.totalorder %s21, 0
    %s24 = sadd.s32 %s23, 1
    %s25 = scalar_select %p22, %s23, %s24
    %p28 = pneg %p22
    %p29 = scmp.eq.s32.totalorder %s13, 3
    %p30 = por %p28, %p29
    %p31 = scmp.ne.s32.totalorder %s23, %s26
    %p32 = scmp.eq.s32.totalorder %s13, 0
    %p33 = por %p31, %p32
    %p34 = scmp.ne.s32.totalorder %s23, %s26
    %p35 = scmp.eq.s32.totalorder %s18, 3
    %p36 = por %p34, %p35
    %p37 = scmp.ne.s32.totalorder %s26, %s27
    %p38 = scmp.eq.s32.totalorder %s18, 0
    %p39 = por %p37, %p38
    %p40 = scmp.ne.s32.totalorder %s26, %s27
    %p41 = scmp.eq.s32.totalorder %s19, 3
    %p42 = por %p40, %p41
    %p44 = scmp.ne.s32.totalorder %s27, %s43
    %p45 = scmp.eq.s32.totalorder %s19, 0
    %p46 = por %p44, %p45
    %s48 = sadd.s32 %s47, 1
    %p51 = scmp.eq.s32.totalorder %s13, 3
    %p52 = scmp.ne.s32.totalorder %s47, %s49
    %p53 = scmp.eq.s32.totalorder %s13, 0
    %p54 = por %p52, %p53
    %p55 = scmp.ne.s32.totalorder %s47, %s49
    %p56 = scmp.eq.s32.totalorder %s18, 3
    %p57 = por %p55, %p56
    %p58 = scmp.ne.s32.totalorder %s49, %s50
    %p59 = scmp.eq.s32.totalorder %s18, 0
    %p60 = por %p58, %p59
    %p61 = scmp.ne.s32.totalorder %s49, %s50
    %p62 = scmp.eq.s32.totalorder %s19, 3
    %p63 = por %p61, %p62
    %p65 = scmp.ne.s32.totalorder %s50, %s64
    %p66 = scmp.eq.s32.totalorder %s19, 0
    %p67 = por %p65, %p66
    %s69 = sadd.s32 %s68, 1
    %p72 = scmp.eq.s32.totalorder %s13, 3
    %p73 = scmp.ne.s32.totalorder %s68, %s70
    %p74 = scmp.eq.s32.totalorder %s13, 0
    %p75 = por %p73, %p74
    %p76 = scmp.ne.s32.totalorder %s68, %s70
    %p77 = scmp.eq.s32.totalorder %s18, 3
    %p78 = por %p76, %p77
    %p79 = scmp.ne.s32.totalorder %s70, %s71
    %p80 = scmp.eq.s32.totalorder %s18, 0
    %p81 = por %p79, %p80
    %p82 = scmp.ne.s32.totalorder %s70, %s71
    %p83 = scmp.eq.s32.totalorder %s19, 3
    %p84 = por %p82, %p83
    %p86 = scmp.ne.s32.totalorder %s71, %s85
    %p87 = scmp.eq.s32.totalorder %s19, 0
    %p88 = por %p86, %p87
    %s89 = ssub.s32 %s13, %s20
    %p90 = scmp.eq.s32.totalorder %s89, 0
    %s92 = sadd.s32 %s91, 1
    %s93 = scalar_select %p90, %s91, %s92
    %p96 = pneg %p90
    %p97 = scmp.eq.s32.totalorder %s13, 3
    %p98 = por %p96, %p97
    %p99 = scmp.ne.s32.totalorder %s91, %s94
    %p100 = scmp.eq.s32.totalorder %s13, 0
    %p101 = por %p99, %p100
    %p102 = scmp.ne.s32.totalorder %s91, %s94
    %p103 = scmp.eq.s32.totalorder %s18, 3
    %p104 = por %p102, %p103
    %p105 = scmp.ne.s32.totalorder %s94, %s95
    %p106 = scmp.eq.s32.totalorder %s18, 0
    %p107 = por %p105, %p106
    %p108 = scmp.ne.s32.totalorder %s94, %s95
    %p109 = scmp.eq.s32.totalorder %s19, 3
    %p110 = por %p108, %p109
    %p112 = scmp.ne.s32.totalorder %s95, %s111
    %p113 = scmp.eq.s32.totalorder %s19, 0
    %p114 = por %p112, %p113
    %s115 = ssub.s32 %s13, %s20
    %p116 = scmp.eq.s32.totalorder %s115, 0
    %s118 = sadd.s32 %s117, 1
    %s119 = scalar_select %p116, %s117, %s118
    %p122 = pneg %p116
    %p123 = scmp.eq.s32.totalorder %s13, 3
    %p124 = por %p122, %p123
    %p125 = scmp.ne.s32.totalorder %s117, %s120
    %p126 = scmp.eq.s32.totalorder %s13, 0
    %p127 = por %p125, %p126
    %p128 = scmp.ne.s32.totalorder %s117, %s120
    %p129 = scmp.eq.s32.totalorder %s18, 3
    %p130 = por %p128, %p129
    %p131 = scmp.ne.s32.totalorder %s120, %s121
    %p132 = scmp.eq.s32.totalorder %s18, 0
    %p133 = por %p131, %p132
    %p134 = scmp.ne.s32.totalorder %s120, %s121
    %p135 = scmp.eq.s32.totalorder %s19, 3
    %p136 = por %p134, %p135
    %p138 = scmp.ne.s32.totalorder %s121, %s137
    %p139 = scmp.eq.s32.totalorder %s19, 0
    %p140 = por %p138, %p139
    %s141 = ssub.s32 %s13, %s20
    %p142 = scmp.eq.s32.totalorder %s141, 0
    %s144 = sadd.s32 %s143, 1
    %s145 = scalar_select %p142, %s143, %s144
    %p148 = pneg %p142
    %p149 = scmp.eq.s32.totalorder %s13, 3
    %p150 = por %p148, %p149
    %p151 = scmp.ne.s32.totalorder %s143, %s146
    %p152 = scmp.eq.s32.totalorder %s13, 0
    %p153 = por %p151, %p152
    %p154 = scmp.ne.s32.totalorder %s143, %s146
    %p155 = scmp.eq.s32.totalorder %s18, 3
    %p156 = por %p154, %p155
    %p157 = scmp.ne.s32.totalorder %s146, %s147
    %p158 = scmp.eq.s32.totalorder %s18, 0
    %p159 = por %p157, %p158
    %p160 = scmp.ne.s32.totalorder %s146, %s147
    %p161 = scmp.eq.s32.totalorder %s19, 3
    %p162 = por %p160, %p161
    %p164 = scmp.ne.s32.totalorder %s147, %s163
    %p165 = scmp.eq.s32.totalorder %s19, 0
    %p166 = por %p164, %p165
    %s167 = ssub.s32 %s13, %s20
    %p168 = scmp.eq.s32.totalorder %s167, 0
    %s170 = sadd.s32 %s169, 1
    %s171 = scalar_select %p168, %s169, %s170
    %p174 = pneg %p168
    %p175 = scmp.eq.s32.totalorder %s13, 3
    %p176 = por %p174, %p175
    %p177 = scmp.ne.s32.totalorder %s169, %s172
    %p178 = scmp.eq.s32.totalorder %s13, 0
    %p179 = por %p177, %p178
    %p180 = scmp.ne.s32.totalorder %s169, %s172
    %p181 = scmp.eq.s32.totalorder %s18, 3
    %p182 = por %p180, %p181
    %p183 = scmp.ne.s32.totalorder %s172, %s173
    %p184 = scmp.eq.s32.totalorder %s18, 0
    %p185 = por %p183, %p184
    %p186 = scmp.ne.s32.totalorder %s172, %s173
    %p187 = scmp.eq.s32.totalorder %s19, 3
    %p188 = por %p186, %p187
    %p190 = scmp.ne.s32.totalorder %s173, %s189
    %p191 = scmp.eq.s32.totalorder %s19, 0
    %p192 = por %p190, %p191
    %s193 = ssub.s32 %s13, %s20
    %p194 = scmp.eq.s32.totalorder %s193, 0
    %s196 = sadd.s32 %s195, 1
    %s197 = scalar_select %p194, %s195, %s196
    %p200 = pneg %p194
    %p201 = scmp.eq.s32.totalorder %s13, 3
    %p202 = por %p200, %p201
    %p203 = scmp.ne.s32.totalorder %s195, %s198
    %p204 = scmp.eq.s32.totalorder %s13, 0
    %p205 = por %p203, %p204
    %p206 = scmp.ne.s32.totalorder %s195, %s198
    %p207 = scmp.eq.s32.totalorder %s18, 3
    %p208 = por %p206, %p207
    %p209 = scmp.ne.s32.totalorder %s198, %s199
    %p210 = scmp.eq.s32.totalorder %s18, 0
    %p211 = por %p209, %p210
    %p212 = scmp.ne.s32.totalorder %s198, %s199
    %p213 = scmp.eq.s32.totalorder %s19, 3
    %p214 = por %p212, %p213
    %p216 = scmp.ne.s32.totalorder %s199, %s215
    %p217 = scmp.eq.s32.totalorder %s19, 0
    %p218 = por %p216, %p217
    %p219 = scmp.le.s32.totalorder 1, %s13
    %p220 = scmp.lt.s32.totalorder %s13, 5
    %p221 = pnand %p219, %p220
    %p222 = pneg %p221
    // Predicated region
    $region9: #{_forward_impl.2} parent=5 // pred_check
      _
    $region10: #{_forward_impl.2} parent=5 // pred_check_branch
      %224 = sbr.rel (%p221) target = $region12
    $region11: #{_forward_impl.2} parent=5 // pred_region
      %s225 = ssub.s32 %s13, 1
      // Predicated region
      $region13: #{_forward_impl.2} parent=11 // pred_check
        %p226 = pneg %p60
      $region14: #{_forward_impl.2} parent=11 // pred_check_branch
        %228 = sbr.rel (%p226) target = $region16
      $region15: #{_forward_impl.2} parent=11 // pred_region
        _
      $region16: #{_forward_impl.2} parent=11 // pred_fallthru
        _
      // Predicated region
      $region17: #{_forward_impl.2} parent=11 // pred_check
        %p229 = pneg %p81
      $region18: #{_forward_impl.2} parent=11 // pred_check_branch
        %231 = sbr.rel (%p229) target = $region20
      $region19: #{_forward_impl.2} parent=11 // pred_region
        _
      $region20: #{_forward_impl.2} parent=11 // pred_fallthru
        _
    $region12: #{_forward_impl.2} parent=5 // pred_fallthru
      _
    %p232 = scmp.lt.s32.totalorder %s13, 4
    // Predicated region
    $region21: #{_forward_impl.2} parent=5 // pred_check
      %p233 = pneg %p232
    $region22: #{_forward_impl.2} parent=5 // pred_check_branch
      %235 = sbr.rel (%p233) target = $region24
    $region23: #{_forward_impl.2} parent=5 // pred_region
      // Predicated region
      $region25: #{_forward_impl.2} parent=23 // pred_check
        %p236 = pneg %p33
      $region26: #{_forward_impl.2} parent=23 // pred_check_branch
        %238 = sbr.rel (%p236) target = $region28
      $region27: #{_forward_impl.2} parent=23 // pred_region
        %p239 = scmp.lt.s32.totalorder %s13, 3
        %s240 = scalar_select %p239, %s13, 3
        %s241 = smul.addr %s240, 6
        %s242 = scalar_lea.vmem %s0, %s241
      $region28: #{_forward_impl.2} parent=23 // pred_fallthru
        _
      // Predicated region
      $region29: #{_forward_impl.2} parent=23 // pred_check
        %p243 = pneg %p101
      $region30: #{_forward_impl.2} parent=23 // pred_check_branch
        %245 = sbr.rel (%p243) target = $region32
      $region31: #{_forward_impl.2} parent=23 // pred_region
        %p246 = scmp.lt.s32.totalorder %s13, 3
        %s247 = scalar_select %p246, %s13, 3
        %s248 = smul.addr %s247, 9
        %s249 = smul.addr %s248, 4
        %s250 = scalar_lea.vmem %s3, %s249
      $region32: #{_forward_impl.2} parent=23 // pred_fallthru
        _
      // Predicated region
      $region33: #{_forward_impl.2} parent=23 // pred_check
        %p251 = pneg %p127
      $region34: #{_forward_impl.2} parent=23 // pred_check_branch
        %253 = sbr.rel (%p251) target = $region36
      $region35: #{_forward_impl.2} parent=23 // pred_region
        %p254 = scmp.lt.s32.totalorder %s13, 3
        %s255 = scalar_select %p254, %s13, 3
        %s256 = smul.addr %s255, 8
        %s257 = scalar_lea.vmem %s4, %s256
      $region36: #{_forward_impl.2} parent=23 // pred_fallthru
        _
      // Predicated region
      $region37: #{_forward_impl.2} parent=23 // pred_check
        %p258 = pneg %p153
      $region38: #{_forward_impl.2} parent=23 // pred_check_branch
        %260 = sbr.rel (%p258) target = $region40
      $region39: #{_forward_impl.2} parent=23 // pred_region
        %p261 = scmp.lt.s32.totalorder %s13, 3
        %s262 = scalar_select %p261, %s13, 3
        %s263 = smul.addr %s262, 18
        %s264 = smul.addr %s263, 4
        %s265 = scalar_lea.vmem %s5, %s264
      $region40: #{_forward_impl.2} parent=23 // pred_fallthru
        _
      // Predicated region
      $region41: #{_forward_impl.2} parent=23 // pred_check
        %p266 = pneg %p179
      $region42: #{_forward_impl.2} parent=23 // pred_check_branch
        %268 = sbr.rel (%p266) target = $region44
      $region43: #{_forward_impl.2} parent=23 // pred_region
        %p269 = scmp.lt.s32.totalorder %s13, 3
        %s270 = scalar_select %p269, %s13, 3
        %s271 = smul.addr %s270, 2
        %s272 = smul.addr %s271, 8
        %s273 = scalar_lea.vmem %s6, %s272
      $region44: #{_forward_impl.2} parent=23 // pred_fallthru
        _
    $region24: #{_forward_impl.2} parent=5 // pred_fallthru
      _
    %p274 = scmp.le.s32.totalorder 1, %s13
    %p275 = scmp.lt.s32.totalorder %s13, 5
    %p276 = pnand %p274, %p275
    %p277 = pneg %p276
    // Predicated region
    $region45: #{_forward_impl.2} parent=5 // pred_check
      _
    $region46: #{_forward_impl.2} parent=5 // pred_check_branch
      %279 = sbr.rel (%p276) target = $region48
    $region47: #{_forward_impl.2} parent=5 // pred_region
      %s280 = ssub.s32 %s13, 1
      %p281 = scmp.lt.s32.totalorder %s18, 3
      %s282 = scalar_select %p281, %s18, 3
      %s283 = smul.addr %s282, 6
      %s284 = scalar_lea.vmem %s0, %s283
      %p285 = pneg %p39
      %p286 = pneg %p36
      %p287 = pneg %p60
      %p288 = pneg %p57
      %p289 = pneg %p81
      %p290 = pneg %p78
      %p291 = scmp.lt.s32.totalorder %s18, 3
      %s292 = scalar_select %p291, %s18, 3
      %s293 = smul.addr %s292, 9
      %s294 = smul.addr %s293, 4
      %s295 = scalar_lea.vmem %s3, %s294
      %p296 = pneg %p107
      %p297 = pneg %p104
      %p298 = scmp.lt.s32.totalorder %s18, 3
      %s299 = scalar_select %p298, %s18, 3
      %s300 = smul.addr %s299, 8
      %s301 = scalar_lea.vmem %s4, %s300
      %p302 = pneg %p133
      %p303 = pneg %p130
      %p304 = scmp.lt.s32.totalorder %s18, 3
      %s305 = scalar_select %p304, %s18, 3
      %s306 = smul.addr %s305, 18
      %s307 = smul.addr %s306, 4
      %s308 = scalar_lea.vmem %s5, %s307
      %p309 = pneg %p159
      %p310 = pneg %p156
      %p311 = scmp.lt.s32.totalorder %s18, 3
      %s312 = scalar_select %p311, %s18, 3
      %s313 = smul.addr %s312, 2
      %s314 = smul.addr %s313, 8
      %s315 = scalar_lea.vmem %s6, %s314
      %p316 = pneg %p185
      %p317 = pneg %p182
      %p318 = pneg %p211
      %p319 = pneg %p208
      %p320 = scmp.lt.s32.totalorder %s18, 3
      %s321 = scalar_select %p320, %s18, 3
      %s322 = smul.addr %s321, 2
      %s323 = scalar_lea.vmem %s7, %s322
      %p324 = scmp.lt.s32.totalorder %s18, 3
      %s325 = scalar_select %p324, %s18, 3
      %s326 = smul.addr %s325, 6
      %s327 = scalar_lea.vmem %s0, %s326
      %p328 = scmp.lt.s32.totalorder %s18, 3
      %s329 = scalar_select %p328, %s18, 3
      %s330 = smul.addr %s329, 9
      %s331 = smul.addr %s330, 4
      %s332 = scalar_lea.vmem %s3, %s331
      %p333 = scmp.lt.s32.totalorder %s18, 3
      %s334 = scalar_select %p333, %s18, 3
      %s335 = smul.addr %s334, 8
      %s336 = scalar_lea.vmem %s4, %s335
      %p337 = scmp.lt.s32.totalorder %s18, 3
      %s338 = scalar_select %p337, %s18, 3
      %s339 = smul.addr %s338, 18
      %s340 = smul.addr %s339, 4
      %s341 = scalar_lea.vmem %s5, %s340
      %p342 = scmp.lt.s32.totalorder %s18, 3
      %s343 = scalar_select %p342, %s18, 3
      %s344 = smul.addr %s343, 2
      %s345 = smul.addr %s344, 8
      %s346 = scalar_lea.vmem %s6, %s345
      %p347 = scmp.lt.s32.totalorder %s18, 3
      %s348 = scalar_select %p347, %s18, 3
      %s349 = smul.addr %s348, 2
      %s350 = scalar_lea.vmem %s7, %s349
      %v352 = vld [vmem:[%s327] sm:$0x3f]
      %v353 = vld [vmem:[%s1] sm:$0x3f]
      %v354 = vld [vmem:[%s336] sm:$0xff]
      %v356 = vcombine.high %v352, %v352
      %v358 = vunpack.c.l.s4 1966171168
      %v359 = vunpack.c.0.s8 %v358
      %v360 = vlaneseq
      %v361 = vshrl.u32 %v360, 7
      %v362 = vsub.s32 %v359, %v361
      %v363 = vrot.slane %v352, %v362
      %v365 = vunpack.c.l.s4 1966171168
      %v366 = vunpack.c.0.s8 %v365
      %v367 = vlaneseq
      %v368 = vshrl.u32 %v367, 7
      %v369 = vsub.s32 %v366, %v368
      %v370 = vrot.slane %v356, %v369
      %v371 = vcombine.high %v363, %v363
      %v372 = vcombine.high %v370, %v370
      %v374 = vunpack.c.l.s4 1966171168
      %v375 = vunpack.c.0.s8 %v374
      %v376 = vlaneseq
      %v377 = vshrl.u32 %v376, 7
      %v378 = vsub.s32 %v375, %v377
      %v379 = vrot.slane %v363, %v378
      %v381 = vunpack.c.l.s4 1966171168
      %v382 = vunpack.c.0.s8 %v381
      %v383 = vlaneseq
      %v384 = vshrl.u32 %v383, 7
      %v385 = vsub.s32 %v382, %v384
      %v386 = vrot.slane %v370, %v385
      %v388 = vunpack.c.l.s4 1966171168
      %v389 = vunpack.c.0.s8 %v388
      %v390 = vlaneseq
      %v391 = vshrl.u32 %v390, 7
      %v392 = vsub.s32 %v389, %v391
      %v393 = vrot.slane %v371, %v392
      %v395 = vunpack.c.l.s4 1966171168
      %v396 = vunpack.c.0.s8 %v395
      %v397 = vlaneseq
      %v398 = vshrl.u32 %v397, 7
      %v399 = vsub.s32 %v396, %v398
      %v400 = vrot.slane %v372, %v399
      %v401 = vcombine.high %v379, %v379
      %v402 = vcombine.high %v393, %v393
      %403 = vrot.lane.b32.xlu0 %v379, 19
      %v404 = vpop.permute.xlu0 %403
      %405 = vrot.lane.b32.xlu0 %v393, 19
      %v406 = vpop.permute.xlu0 %405
      %407 = vrot.lane.b32.xlu0 %v401, 19
      %v408 = vpop.permute.xlu0 %407
      %409 = vrot.lane.b32.xlu0 %v402, 19
      %v410 = vpop.permute.xlu0 %409
      %411 = vrot.lane.b32.xlu0 %v386, 19
      %v412 = vpop.permute.xlu0 %411
      %413 = vrot.lane.b32.xlu0 %v400, 19
      %v414 = vpop.permute.xlu0 %413
      %vm415 = vcmask 154624
      %v416 = vsel %vm415, %v404, %v406
      %v417 = vsel %vm415, %v406, %v408
      %v418 = vsel %vm415, %v408, %v410
      %v419 = vsel %vm415, %v410, %v412
      %v420 = vsel %vm415, %v412, %v414
      %vm421 = vcmask 154624
      %v424 = vsel %vm421, 0, %v404
      %vm425 = vcmask 220160
      %v427 = vsel %vm425, %v420, 0
      %v428 = vld [vmem:[%s332] sm:$0xf]
      %s429 = scalar_lea.vmem %s332, 4
      %v430 = vld [vmem:[%s429] sm:$0xf]
      %433 = vrot.lane.b32.xlu0 %v424, 127
      %v434 = vpop.permute.xlu0 %433
      %435 = vrot.lane.b32.xlu0 %v416, 127
      %v436 = vpop.permute.xlu0 %435
      %437 = vrot.lane.b32.xlu0 %v417, 127
      %v438 = vpop.permute.xlu0 %437
      %439 = vrot.lane.b32.xlu0 %v418, 127
      %v440 = vpop.permute.xlu0 %439
      %441 = vrot.lane.b32.xlu0 %v419, 127
      %v442 = vpop.permute.xlu0 %441
      %443 = vrot.lane.b32.xlu0 %v427, 127
      %v444 = vpop.permute.xlu0 %443
      %vm445 = vcmask 1039360
      %v446 = vsel %vm445, %v434, %v436
      %v447 = vsel %vm445, %v436, %v438
      %v448 = vsel %vm445, %v438, %v440
      %v449 = vsel %vm445, %v440, %v442
      %v450 = vsel %vm445, %v442, %v444
      %vm451 = vcmask 7168
      %v453 = vsel %vm451, %v430, 0
      %vm455 = vcmask 1040384
      %v456 = vsel 0, 4294967295, 65535
      %v457 = vsel %vm455, %v456, 0
      %v459 = vand.u32 %v446, %v457
      %v462 = vand.u32 %v447, %v457
      %v465 = vand.u32 %v448, %v457
      %v468 = vand.u32 %v449, %v457
      %v471 = vand.u32 %v450, %v457
      %v474 = vand.u32 %v444, %v457
      %476 = vmatprep.subr.bf16.mxu0 %v462
      %477 = vmatpush1.bf16.msra.mxu0 %v459
      %478 = vmatprep.subr.bf16.mxu0 0
      %479 = vmatpush1.bf16.msra.mxu0 0
      %480 = vmatprep.subr.bf16.mxu0 0
      %481 = vmatpush1.bf16.msra.mxu0 0
      %482 = vmatprep.subr.bf16.mxu0 0
      %483 = vmatpush1.bf16.msra.mxu0 0
      %484 = vmatprep.subr.bf16.mxu0 0
      %485 = vmatpush1.bf16.msra.mxu0 0
      %486 = vmatprep.subr.bf16.mxu0 0
      %487 = vmatpush1.bf16.msra.mxu0 0
      %488 = vmatprep.subr.bf16.mxu0 0
      %489 = vmatpush1.bf16.msra.mxu0 0
      %490 = vmatprep.subr.bf16.mxu0 0
      %491 = vmatpush1.bf16.msra.mxu0 0
      %492 = vmatprep.subr.bf16.mxu0 0
      %493 = vmatpush1.bf16.msra.mxu0 0
      %494 = vmatprep.subr.bf16.mxu0 0
      %495 = vmatpush1.bf16.msra.mxu0 0
      %496 = vmatprep.subr.bf16.mxu0 0
      %497 = vmatpush1.bf16.msra.mxu0 0
      %498 = vmatprep.subr.bf16.mxu0 0
      %499 = vmatpush1.bf16.msra.mxu0 0
      %500 = vmatprep.subr.bf16.mxu0 0
      %501 = vmatpush1.bf16.msra.mxu0 0
      %502 = vmatprep.subr.bf16.mxu0 0
      %503 = vmatpush1.bf16.msra.mxu0 0
      %504 = vmatprep.subr.bf16.mxu0 0
      %505 = vmatpush1.bf16.msra.mxu0 0
      %506 = vmatprep.subr.bf16.mxu0 0
      %507 = vmatpush1.bf16.msra.mxu0 0
      %508 = vmatprep.mubr.bf16.mxu0 0
      %509 = vmatmul.mubr.bf16.gmra.mrb[0].mxu0 %v453
      %v510 = vpop.f32.mrb[0].mxu0
      %v511 = vadd.f32 0.0, %v510
      %v512 = vpop.f32.mrb[0].mxu0
      %v513 = vadd.f32 0.0, %v512
      %v514 = vpop.f32.mrb[0].mxu0
      %v515 = vpop.f32.mrb[0].mxu0
      %516 = vdwg.mxu0
      %517 = vmatprep.subr.bf16.mxu0 %v468
      %518 = vmatpush1.bf16.msra.mxu0 %v465
      %519 = vmatprep.subr.bf16.mxu0 0
      %520 = vmatpush1.bf16.msra.mxu0 0
      %521 = vmatprep.subr.bf16.mxu0 0
      %522 = vmatpush1.bf16.msra.mxu0 0
      %523 = vmatprep.subr.bf16.mxu0 0
      %524 = vmatpush1.bf16.msra.mxu0 0
      %525 = vmatprep.subr.bf16.mxu0 0
      %526 = vmatpush1.bf16.msra.mxu0 0
      %527 = vmatprep.subr.bf16.mxu0 0
      %528 = vmatpush1.bf16.msra.mxu0 0
      %529 = vmatprep.subr.bf16.mxu0 0
      %530 = vmatpush1.bf16.msra.mxu0 0
      %531 = vmatprep.subr.bf16.mxu0 0
      %532 = vmatpush1.bf16.msra.mxu0 0
      %533 = vmatprep.subr.bf16.mxu0 0
      %534 = vmatpush1.bf16.msra.mxu0 0
      %535 = vmatprep.subr.bf16.mxu0 0
      %536 = vmatpush1.bf16.msra.mxu0 0
      %537 = vmatprep.subr.bf16.mxu0 0
      %538 = vmatpush1.bf16.msra.mxu0 0
      %539 = vmatprep.subr.bf16.mxu0 0
      %540 = vmatpush1.bf16.msra.mxu0 0
      %541 = vmatprep.subr.bf16.mxu0 0
      %542 = vmatpush1.bf16.msra.mxu0 0
      %543 = vmatprep.subr.bf16.mxu0 0
      %544 = vmatpush1.bf16.msra.mxu0 0
      %545 = vmatprep.subr.bf16.mxu0 0
      %546 = vmatpush1.bf16.msra.mxu0 0
      %547 = vmatprep.subr.bf16.mxu0 0
      %548 = vmatpush1.bf16.msra.mxu0 0
      %549 = vmatprep.mubr.bf16.mxu0 0
      %550 = vmatmul.mubr.bf16.gmra.mrb[0].mxu0 %v453
      %v551 = vpop.f32.mrb[0].mxu0
      %v552 = vadd.f32 0.0, %v551
      %v553 = vpop.f32.mrb[0].mxu0
      %v554 = vadd.f32 0.0, %v553
      %v555 = vpop.f32.mrb[0].mxu0
      %v556 = vpop.f32.mrb[0].mxu0
      %557 = vdwg.mxu0
      %558 = vmatprep.subr.bf16.mxu0 %v474
      %559 = vmatpush1.bf16.msra.mxu0 %v471
      %560 = vmatprep.subr.bf16.mxu0 0
      %561 = vmatpush1.bf16.msra.mxu0 0
      %562 = vmatprep.subr.bf16.mxu0 0
      %563 = vmatpush1.bf16.msra.mxu0 0
      %564 = vmatprep.subr.bf16.mxu0 0
      %565 = vmatpush1.bf16.msra.mxu0 0
      %566 = vmatprep.subr.bf16.mxu0 0
      %567 = vmatpush1.bf16.msra.mxu0 0
      %568 = vmatprep.subr.bf16.mxu0 0
      %569 = vmatpush1.bf16.msra.mxu0 0
      %570 = vmatprep.subr.bf16.mxu0 0
      %571 = vmatpush1.bf16.msra.mxu0 0
      %572 = vmatprep.subr.bf16.mxu0 0
      %573 = vmatpush1.bf16.msra.mxu0 0
      %574 = vmatprep.subr.bf16.mxu0 0
      %575 = vmatpush1.bf16.msra.mxu0 0
      %576 = vmatprep.subr.bf16.mxu0 0
      %577 = vmatpush1.bf16.msra.mxu0 0
      %578 = vmatprep.subr.bf16.mxu0 0
      %579 = vmatpush1.bf16.msra.mxu0 0
      %580 = vmatprep.subr.bf16.mxu0 0
      %581 = vmatpush1.bf16.msra.mxu0 0
      %582 = vmatprep.subr.bf16.mxu0 0
      %583 = vmatpush1.bf16.msra.mxu0 0
      %584 = vmatprep.subr.bf16.mxu0 0
      %585 = vmatpush1.bf16.msra.mxu0 0
      %586 = vmatprep.subr.bf16.mxu0 0
      %587 = vmatpush1.bf16.msra.mxu0 0
      %588 = vmatprep.subr.bf16.mxu0 0
      %589 = vmatpush1.bf16.msra.mxu0 0
      %590 = vmatprep.mubr.bf16.mxu0 0
      %591 = vmatmul.mubr.bf16.gmra.mrb[0].mxu0 %v453
      %v592 = vpop.f32.mrb[0].mxu0
      %v593 = vadd.f32 0.0, %v592
      %v594 = vpop.f32.mrb[0].mxu0
      %v595 = vadd.f32 0.0, %v594
      %v596 = vpop.f32.mrb[0].mxu0
      %v597 = vpop.f32.mrb[0].mxu0
      %598 = vdwg.mxu0
      %v600 = vsel %vm451, %v428, 0
      %v602 = vand.u32 %v424, %v457
      %v605 = vand.u32 %v416, %v457
      %v608 = vand.u32 %v417, %v457
      %v611 = vand.u32 %v418, %v457
      %v614 = vand.u32 %v419, %v457
      %v616 = vand.u32 %v427, %v457
      %618 = vmatprep.subr.bf16.mxu0 %v605
      %619 = vmatpush1.bf16.msra.mxu0 %v602
      %620 = vmatprep.subr.bf16.mxu0 0
      %621 = vmatpush1.bf16.msra.mxu0 0
      %622 = vmatprep.subr.bf16.mxu0 0
      %623 = vmatpush1.bf16.msra.mxu0 0
      %624 = vmatprep.subr.bf16.mxu0 0
      %625 = vmatpush1.bf16.msra.mxu0 0
      %626 = vmatprep.subr.bf16.mxu0 0
      %627 = vmatpush1.bf16.msra.mxu0 0
      %628 = vmatprep.subr.bf16.mxu0 0
      %629 = vmatpush1.bf16.msra.mxu0 0
      %630 = vmatprep.subr.bf16.mxu0 0
      %631 = vmatpush1.bf16.msra.mxu0 0
      %632 = vmatprep.subr.bf16.mxu0 0
      %633 = vmatpush1.bf16.msra.mxu0 0
      %634 = vmatprep.subr.bf16.mxu0 0
      %635 = vmatpush1.bf16.msra.mxu0 0
      %636 = vmatprep.subr.bf16.mxu0 0
      %637 = vmatpush1.bf16.msra.mxu0 0
      %638 = vmatprep.subr.bf16.mxu0 0
      %639 = vmatpush1.bf16.msra.mxu0 0
      %640 = vmatprep.subr.bf16.mxu0 0
      %641 = vmatpush1.bf16.msra.mxu0 0
      %642 = vmatprep.subr.bf16.mxu0 0
      %643 = vmatpush1.bf16.msra.mxu0 0
      %644 = vmatprep.subr.bf16.mxu0 0
      %645 = vmatpush1.bf16.msra.mxu0 0
      %646 = vmatprep.subr.bf16.mxu0 0
      %647 = vmatpush1.bf16.msra.mxu0 0
      %648 = vmatprep.subr.bf16.mxu0 0
      %649 = vmatpush1.bf16.msra.mxu0 0
      %650 = vmatprep.mubr.bf16.mxu0 0
      %651 = vmatmul.mubr.bf16.gmra.mrb[0].mxu0 %v600
      %v652 = vpop.f32.mrb[0].mxu0
      %v653 = vadd.f32 %v511, %v652
      %v654 = vpop.f32.mrb[0].mxu0
      %v655 = vadd.f32 %v513, %v654
      %v656 = vpop.f32.mrb[0].mxu0
      %v657 = vpop.f32.mrb[0].mxu0
      %658 = vdwg.mxu0
      %659 = vmatprep.subr.bf16.mxu0 %v611
      %660 = vmatpush1.bf16.msra.mxu0 %v608
      %661 = vmatprep.subr.bf16.mxu0 0
      %662 = vmatpush1.bf16.msra.mxu0 0
      %663 = vmatprep.subr.bf16.mxu0 0
      %664 = vmatpush1.bf16.msra.mxu0 0
      %665 = vmatprep.subr.bf16.mxu0 0
      %666 = vmatpush1.bf16.msra.mxu0 0
      %667 = vmatprep.subr.bf16.mxu0 0
      %668 = vmatpush1.bf16.msra.mxu0 0
      %669 = vmatprep.subr.bf16.mxu0 0
      %670 = vmatpush1.bf16.msra.mxu0 0
      %671 = vmatprep.subr.bf16.mxu0 0
      %672 = vmatpush1.bf16.msra.mxu0 0
      %673 = vmatprep.subr.bf16.mxu0 0
      %674 = vmatpush1.bf16.msra.mxu0 0
      %675 = vmatprep.subr.bf16.mxu0 0
      %676 = vmatpush1.bf16.msra.mxu0 0
      %677 = vmatprep.subr.bf16.mxu0 0
      %678 = vmatpush1.bf16.msra.mxu0 0
      %679 = vmatprep.subr.bf16.mxu0 0
      %680 = vmatpush1.bf16.msra.mxu0 0
      %681 = vmatprep.subr.bf16.mxu0 0
      %682 = vmatpush1.bf16.msra.mxu0 0
      %683 = vmatprep.subr.bf16.mxu0 0
      %684 = vmatpush1.bf16.msra.mxu0 0
      %685 = vmatprep.subr.bf16.mxu0 0
      %686 = vmatpush1.bf16.msra.mxu0 0
      %687 = vmatprep.subr.bf16.mxu0 0
      %688 = vmatpush1.bf16.msra.mxu0 0
      %689 = vmatprep.subr.bf16.mxu0 0
      %690 = vmatpush1.bf16.msra.mxu0 0
      %691 = vmatprep.mubr.bf16.mxu0 0
      %692 = vmatmul.mubr.bf16.gmra.mrb[0].mxu0 %v600
      %v693 = vpop.f32.mrb[0].mxu0
      %v694 = vadd.f32 %v552, %v693
      %v695 = vpop.f32.mrb[0].mxu0
      %v696 = vadd.f32 %v554, %v695
      %v697 = vpop.f32.mrb[0].mxu0
      %v698 = vpop.f32.mrb[0].mxu0
      %699 = vdwg.mxu0
      %700 = vmatprep.subr.bf16.mxu0 %v616
      %701 = vmatpush1.bf16.msra.mxu0 %v614
      %702 = vmatprep.subr.bf16.mxu0 0
      %703 = vmatpush1.bf16.msra.mxu0 0
      %704 = vmatprep.subr.bf16.mxu0 0
      %705 = vmatpush1.bf16.msra.mxu0 0
      %706 = vmatprep.subr.bf16.mxu0 0
      %707 = vmatpush1.bf16.msra.mxu0 0
      %708 = vmatprep.subr.bf16.mxu0 0
      %709 = vmatpush1.bf16.msra.mxu0 0
      %710 = vmatprep.subr.bf16.mxu0 0
      %711 = vmatpush1.bf16.msra.mxu0 0
      %712 = vmatprep.subr.bf16.mxu0 0
      %713 = vmatpush1.bf16.msra.mxu0 0
      %714 = vmatprep.subr.bf16.mxu0 0
      %715 = vmatpush1.bf16.msra.mxu0 0
      %716 = vmatprep.subr.bf16.mxu0 0
      %717 = vmatpush1.bf16.msra.mxu0 0
      %718 = vmatprep.subr.bf16.mxu0 0
      %719 = vmatpush1.bf16.msra.mxu0 0
      %720 = vmatprep.subr.bf16.mxu0 0
      %721 = vmatpush1.bf16.msra.mxu0 0
      %722 = vmatprep.subr.bf16.mxu0 0
      %723 = vmatpush1.bf16.msra.mxu0 0
      %724 = vmatprep.subr.bf16.mxu0 0
      %725 = vmatpush1.bf16.msra.mxu0 0
      %726 = vmatprep.subr.bf16.mxu0 0
      %727 = vmatpush1.bf16.msra.mxu0 0
      %728 = vmatprep.subr.bf16.mxu0 0
      %729 = vmatpush1.bf16.msra.mxu0 0
      %730 = vmatprep.subr.bf16.mxu0 0
      %731 = vmatpush1.bf16.msra.mxu0 0
      %732 = vmatprep.mubr.bf16.mxu0 0
      %733 = vmatmul.mubr.bf16.gmra.mrb[0].mxu0 %v600
      %v734 = vpop.f32.mrb[0].mxu0
      %v735 = vadd.f32 %v593, %v734
      %v736 = vpop.f32.mrb[0].mxu0
      %v737 = vadd.f32 %v595, %v736
      %v738 = vpop.f32.mrb[0].mxu0
      %v739 = vpop.f32.mrb[0].mxu0
      %740 = vdwg.mxu0
      %s741 = scalar_lea.vmem %s332, 8
      %v742 = vld [vmem:[%s741] sm:$0xf]
      %743 = vrot.lane.b32.xlu0 %v424, 126
      %v744 = vpop.permute.xlu0 %743
      %745 = vrot.lane.b32.xlu0 %v416, 126
      %v746 = vpop.permute.xlu0 %745
      %747 = vrot.lane.b32.xlu0 %v417, 126
      %v748 = vpop.permute.xlu0 %747
      %749 = vrot.lane.b32.xlu0 %v418, 126
      %v750 = vpop.permute.xlu0 %749
      %751 = vrot.lane.b32.xlu0 %v419, 126
      %v752 = vpop.permute.xlu0 %751
      %753 = vrot.lane.b32.xlu0 %v427, 126
      %v754 = vpop.permute.xlu0 %753
      %vm755 = vcmask 1031168
      %v756 = vsel %vm755, %v744, %v746
      %v757 = vsel %vm755, %v746, %v748
      %v758 = vsel %vm755, %v748, %v750
      %v759 = vsel %vm755, %v750, %v752
      %v760 = vsel %vm755, %v752, %v754
      %v762 = vsel %vm451, %v742, 0
      %v765 = vand.u32 %v756, %v457
      %v768 = vand.u32 %v757, %v457
      %v771 = vand.u32 %v758, %v457
      %v774 = vand.u32 %v759, %v457
      %v777 = vand.u32 %v760, %v457
      %v780 = vand.u32 %v754, %v457
      %782 = vmatprep.subr.bf16.mxu0 %v768
      %783 = vmatpush1.bf16.msra.mxu0 %v765
      %784 = vmatprep.subr.bf16.mxu0 0
      %785 = vmatpush1.bf16.msra.mxu0 0
      %786 = vmatprep.subr.bf16.mxu0 0
      %787 = vmatpush1.bf16.msra.mxu0 0
      %788 = vmatprep.subr.bf16.mxu0 0
      %789 = vmatpush1.bf16.msra.mxu0 0
      %790 = vmatprep.subr.bf16.mxu0 0
      %791 = vmatpush1.bf16.msra.mxu0 0
      %792 = vmatprep.subr.bf16.mxu0 0
      %793 = vmatpush1.bf16.msra.mxu0 0
      %794 = vmatprep.subr.bf16.mxu0 0
      %795 = vmatpush1.bf16.msra.mxu0 0
      %796 = vmatprep.subr.bf16.mxu0 0
      %797 = vmatpush1.bf16.msra.mxu0 0
      %798 = vmatprep.subr.bf16.mxu0 0
      %799 = vmatpush1.bf16.msra.mxu0 0
      %800 = vmatprep.subr.bf16.mxu0 0
      %801 = vmatpush1.bf16.msra.mxu0 0
      %802 = vmatprep.subr.bf16.mxu0 0
      %803 = vmatpush1.bf16.msra.mxu0 0
      %804 = vmatprep.subr.bf16.mxu0 0
      %805 = vmatpush1.bf16.msra.mxu0 0
      %806 = vmatprep.subr.bf16.mxu0 0
      %807 = vmatpush1.bf16.msra.mxu0 0
      %808 = vmatprep.subr.bf16.mxu0 0
      %809 = vmatpush1.bf16.msra.mxu0 0
      %810 = vmatprep.subr.bf16.mxu0 0
      %811 = vmatpush1.bf16.msra.mxu0 0
      %812 = vmatprep.subr.bf16.mxu0 0
      %813 = vmatpush1.bf16.msra.mxu0 0
      %814 = vmatprep.mubr.bf16.mxu0 0
      %815 = vmatmul.mubr.bf16.gmra.mrb[0].mxu0 %v762
      %v816 = vpop.f32.mrb[0].mxu0
      %v817 = vadd.f32 0.0, %v816
      %v818 = vpop.f32.mrb[0].mxu0
      %v819 = vadd.f32 0.0, %v818
      %v820 = vpop.f32.mrb[0].mxu0
      %v821 = vpop.f32.mrb[0].mxu0
      %822 = vdwg.mxu0
      %823 = vmatprep.subr.bf16.mxu0 %v774
      %824 = vmatpush1.bf16.msra.mxu0 %v771
      %825 = vmatprep.subr.bf16.mxu0 0
      %826 = vmatpush1.bf16.msra.mxu0 0
      %827 = vmatprep.subr.bf16.mxu0 0
      %828 = vmatpush1.bf16.msra.mxu0 0
      %829 = vmatprep.subr.bf16.mxu0 0
      %830 = vmatpush1.bf16.msra.mxu0 0
      %831 = vmatprep.subr.bf16.mxu0 0
      %832 = vmatpush1.bf16.msra.mxu0 0
      %833 = vmatprep.subr.bf16.mxu0 0
      %834 = vmatpush1.bf16.msra.mxu0 0
      %835 = vmatprep.subr.bf16.mxu0 0
      %836 = vmatpush1.bf16.msra.mxu0 0
      %837 = vmatprep.subr.bf16.mxu0 0
      %838 = vmatpush1.bf16.msra.mxu0 0
      %839 = vmatprep.subr.bf16.mxu0 0
      %840 = vmatpush1.bf16.msra.mxu0 0
      %841 = vmatprep.subr.bf16.mxu0 0
      %842 = vmatpush1.bf16.msra.mxu0 0
      %843 = vmatprep.subr.bf16.mxu0 0
      %844 = vmatpush1.bf16.msra.mxu0 0
      %845 = vmatprep.subr.bf16.mxu0 0
      %846 = vmatpush1.bf16.msra.mxu0 0
      %847 = vmatprep.subr.bf16.mxu0 0
      %848 = vmatpush1.bf16.msra.mxu0 0
      %849 = vmatprep.subr.bf16.mxu0 0
      %850 = vmatpush1.bf16.msra.mxu0 0
      %851 = vmatprep.subr.bf16.mxu0 0
      %852 = vmatpush1.bf16.msra.mxu0 0
      %853 = vmatprep.subr.bf16.mxu0 0
      %854 = vmatpush1.bf16.msra.mxu0 0
      %855 = vmatprep.mubr.bf16.mxu0 0
      %856 = vmatmul.mubr.bf16.gmra.mrb[0].mxu0 %v762
      %v857 = vpop.f32.mrb[0].mxu0
      %v858 = vadd.f32 0.0, %v857
      %v859 = vpop.f32.mrb[0].mxu0
      %v860 = vadd.f32 0.0, %v859
      %v861 = vpop.f32.mrb[0].mxu0
      %v862 = vpop.f32.mrb[0].mxu0
      %863 = vdwg.mxu0
      %864 = vmatprep.subr.bf16.mxu0 %v780
      %865 = vmatpush1.bf16.msra.mxu0 %v777
      %866 = vmatprep.subr.bf16.mxu0 0
      %867 = vmatpush1.bf16.msra.mxu0 0
      %868 = vmatprep.subr.bf16.mxu0 0
      %869 = vmatpush1.bf16.msra.mxu0 0
      %870 = vmatprep.subr.bf16.mxu0 0
      %871 = vmatpush1.bf16.msra.mxu0 0
      %872 = vmatprep.subr.bf16.mxu0 0
      %873 = vmatpush1.bf16.msra.mxu0 0
      %874 = vmatprep.subr.bf16.mxu0 0
      %875 = vmatpush1.bf16.msra.mxu0 0
      %876 = vmatprep.subr.bf16.mxu0 0
      %877 = vmatpush1.bf16.msra.mxu0 0
      %878 = vmatprep.subr.bf16.mxu0 0
      %879 = vmatpush1.bf16.msra.mxu0 0
      %880 = vmatprep.subr.bf16.mxu0 0
      %881 = vmatpush1.bf16.msra.mxu0 0
      %882 = vmatprep.subr.bf16.mxu0 0
      %883 = vmatpush1.bf16.msra.mxu0 0
      %884 = vmatprep.subr.bf16.mxu0 0
      %885 = vmatpush1.bf16.msra.mxu0 0
      %886 = vmatprep.subr.bf16.mxu0 0
      %887 = vmatpush1.bf16.msra.mxu0 0
      %888 = vmatprep.subr.bf16.mxu0 0
      %889 = vmatpush1.bf16.msra.mxu0 0
      %890 = vmatprep.subr.bf16.mxu0 0
      %891 = vmatpush1.bf16.msra.mxu0 0
      %892 = vmatprep.subr.bf16.mxu0 0
      %893 = vmatpush1.bf16.msra.mxu0 0
      %894 = vmatprep.subr.bf16.mxu0 0
      %895 = vmatpush1.bf16.msra.mxu0 0
      %896 = vmatprep.mubr.bf16.mxu0 0
      %897 = vmatmul.mubr.bf16.gmra.mrb[0].mxu0 %v762
      %v898 = vpop.f32.mrb[0].mxu0
      %v899 = vadd.f32 0.0, %v898
      %v900 = vpop.f32.mrb[0].mxu0
      %v901 = vadd.f32 0.0, %v900
      %v902 = vpop.f32.mrb[0].mxu0
      %v903 = vpop.f32.mrb[0].mxu0
      %904 = vdwg.mxu0
      %v905 = vadd.f32 %v653, %v817
      %v906 = vadd.f32 %v655, %v819
      %v907 = vadd.f32 %v694, %v858
      %v908 = vadd.f32 %v696, %v860
      %v909 = vadd.f32 %v735, %v899
      %v910 = vadd.f32 %v737, %v901
      %s911 = scalar_lea.vmem %s332, 12
      %v912 = vld [vmem:[%s911] sm:$0xf]
      %913 = vrot.lane.b32.xlu0 %v424, 110
      %v914 = vpop.permute.xlu0 %913
      %915 = vrot.lane.b32.xlu0 %v416, 110
      %v916 = vpop.permute.xlu0 %915
      %917 = vrot.lane.b32.xlu0 %v417, 110
      %v918 = vpop.permute.xlu0 %917
      %919 = vrot.lane.b32.xlu0 %v418, 110
      %v920 = vpop.permute.xlu0 %919
      %921 = vrot.lane.b32.xlu0 %v419, 110
      %v922 = vpop.permute.xlu0 %921
      %923 = vrot.lane.b32.xlu0 %v427, 110
      %v924 = vpop.permute.xlu0 %923
      %vm925 = vcmask 900096
      %v926 = vsel %vm925, %v914, %v916
      %v927 = vsel %vm925, %v916, %v918
      %v928 = vsel %vm925, %v918, %v920
      %v929 = vsel %vm925, %v920, %v922
      %v930 = vsel %vm925, %v922, %v924
      %v932 = vsel %vm451, %v912, 0
      %v935 = vand.u32 %v926, %v457
      %v938 = vand.u32 %v927, %v457
      %v941 = vand.u32 %v928, %v457
      %v944 = vand.u32 %v929, %v457
      %v947 = vand.u32 %v930, %v457
      %v950 = vand.u32 %v924, %v457
      %952 = vmatprep.subr.bf16.mxu0 %v938
      %953 = vmatpush1.bf16.msra.mxu0 %v935
      %954 = vmatprep.subr.bf16.mxu0 0
      %955 = vmatpush1.bf16.msra.mxu0 0
      %956 = vmatprep.subr.bf16.mxu0 0
      %957 = vmatpush1.bf16.msra.mxu0 0
      %958 = vmatprep.subr.bf16.mxu0 0
      %959 = vmatpush1.bf16.msra.mxu0 0
      %960 = vmatprep.subr.bf16.mxu0 0
      %961 = vmatpush1.bf16.msra.mxu0 0
      %962 = vmatprep.subr.bf16.mxu0 0
      %963 = vmatpush1.bf16.msra.mxu0 0
      %964 = vmatprep.subr.bf16.mxu0 0
      %965 = vmatpush1.bf16.msra.mxu0 0
      %966 = vmatprep.subr.bf16.mxu0 0
      %967 = vmatpush1.bf16.msra.mxu0 0
      %968 = vmatprep.subr.bf16.mxu0 0
      %969 = vmatpush1.bf16.msra.mxu0 0
      %970 = vmatprep.subr.bf16.mxu0 0
      %971 = vmatpush1.bf16.msra.mxu0 0
      %972 = vmatprep.subr.bf16.mxu0 0
      %973 = vmatpush1.bf16.msra.mxu0 0
      %974 = vmatprep.subr.bf16.mxu0 0
      %975 = vmatpush1.bf16.msra.mxu0 0
      %976 = vmatprep.subr.bf16.mxu0 0
      %977 = vmatpush1.bf16.msra.mxu0 0
      %978 = vmatprep.subr.bf16.mxu0 0
      %979 = vmatpush1.bf16.msra.mxu0 0
      %980 = vmatprep.subr.bf16.mxu0 0
      %981 = vmatpush1.bf16.msra.mxu0 0
      %982 = vmatprep.subr.bf16.mxu0 0
      %983 = vmatpush1.bf16.msra.mxu0 0
      %984 = vmatprep.mubr.bf16.mxu0 0
      %985 = vmatmul.mubr.bf16.gmra.mrb[0].mxu0 %v932
      %v986 = vpop.f32.mrb[0].mxu0
      %v987 = vadd.f32 0.0, %v986
      %v988 = vpop.f32.mrb[0].mxu0
      %v989 = vadd.f32 0.0, %v988
      %v990 = vpop.f32.mrb[0].mxu0
      %v991 = vpop.f32.mrb[0].mxu0
      %992 = vdwg.mxu0
      %993 = vmatprep.subr.bf16.mxu0 %v944
      %994 = vmatpush1.bf16.msra.mxu0 %v941
      %995 = vmatprep.subr.bf16.mxu0 0
      %996 = vmatpush1.bf16.msra.mxu0 0
      %997 = vmatprep.subr.bf16.mxu0 0
      %998 = vmatpush1.bf16.msra.mxu0 0
      %999 = vmatprep.subr.bf16.mxu0 0
      %1000 = vmatpush1.bf16.msra.mxu0 0
      %1001 = vmatprep.subr.bf16.mxu0 0
      %1002 = vmatpush1.bf16.msra.mxu0 0
      %1003 = vmatprep.subr.bf16.mxu0 0
      %1004 = vmatpush1.bf16.msra.mxu0 0
      %1005 = vmatprep.subr.bf16.mxu0 0
      %1006 = vmatpush1.bf16.msra.mxu0 0
      %1007 = vmatprep.subr.bf16.mxu0 0
      %1008 = vmatpush1.bf16.msra.mxu0 0
      %1009 = vmatprep.subr.bf16.mxu0 0
      %1010 = vmatpush1.bf16.msra.mxu0 0
      %1011 = vmatprep.subr.bf16.mxu0 0
      %1012 = vmatpush1.bf16.msra.mxu0 0
      %1013 = vmatprep.subr.bf16.mxu0 0
      %1014 = vmatpush1.bf16.msra.mxu0 0
      %1015 = vmatprep.subr.bf16.mxu0 0
      %1016 = vmatpush1.bf16.msra.mxu0 0
      %1017 = vmatprep.subr.bf16.mxu0 0
      %1018 = vmatpush1.bf16.msra.mxu0 0
      %1019 = vmatprep.subr.bf16.mxu0 0
      %1020 = vmatpush1.bf16.msra.mxu0 0
      %1021 = vmatprep.subr.bf16.mxu0 0
      %1022 = vmatpush1.bf16.msra.mxu0 0
      %1023 = vmatprep.subr.bf16.mxu0 0
      %1024 = vmatpush1.bf16.msra.mxu0 0
      %1025 = vmatprep.mubr.bf16.mxu0 0
      %1026 = vmatmul.mubr.bf16.gmra.mrb[0].mxu0 %v932
      %v1027 = vpop.f32.mrb[0].mxu0
      %v1028 = vadd.f32 0.0, %v1027
      %v1029 = vpop.f32.mrb[0].mxu0
      %v1030 = vadd.f32 0.0, %v1029
      %v1031 = vpop.f32.mrb[0].mxu0
      %v1032 = vpop.f32.mrb[0].mxu0
      %1033 = vdwg.mxu0
      %1034 = vmatprep.subr.bf16.mxu0 %v950
      %1035 = vmatpush1.bf16.msra.mxu0 %v947
      %1036 = vmatprep.subr.bf16.mxu0 0
      %1037 = vmatpush1.bf16.msra.mxu0 0
      %1038 = vmatprep.subr.bf16.mxu0 0
      %1039 = vmatpush1.bf16.msra.mxu0 0
      %1040 = vmatprep.subr.bf16.mxu0 0
      %1041 = vmatpush1.bf16.msra.mxu0 0
      %1042 = vmatprep.subr.bf16.mxu0 0
      %1043 = vmatpush1.bf16.msra.mxu0 0
      %1044 = vmatprep.subr.bf16.mxu0 0
      %1045 = vmatpush1.bf16.msra.mxu0 0
      %1046 = vmatprep.subr.bf16.mxu0 0
      %1047 = vmatpush1.bf16.msra.mxu0 0
      %1048 = vmatprep.subr.bf16.mxu0 0
      %1049 = vmatpush1.bf16.msra.mxu0 0
      %1050 = vmatprep.subr.bf16.mxu0 0
      %1051 = vmatpush1.bf16.msra.mxu0 0
      %1052 = vmatprep.subr.bf16.mxu0 0
      %1053 = vmatpush1.bf16.msra.mxu0 0
      %1054 = vmatprep.subr.bf16.mxu0 0
      %1055 = vmatpush1.bf16.msra.mxu0 0
      %1056 = vmatprep.subr.bf16.mxu0 0
      %1057 = vmatpush1.bf16.msra.mxu0 0
      %1058 = vmatprep.subr.bf16.mxu0 0
      %1059 = vmatpush1.bf16.msra.mxu0 0
      %1060 = vmatprep.subr.bf16.mxu0 0
      %1061 = vmatpush1.bf16.msra.mxu0 0
      %1062 = vmatprep.subr.bf16.mxu0 0
      %1063 = vmatpush1.bf16.msra.mxu0 0
      %1064 = vmatprep.subr.bf16.mxu0 0
      %1065 = vmatpush1.bf16.msra.mxu0 0
      %1066 = vmatprep.mubr.bf16.mxu0 0
      %1067 = vmatmul.mubr.bf16.gmra.mrb[0].mxu0 %v932
      %v1068 = vpop.f32.mrb[0].mxu0
      %v1069 = vadd.f32 0.0, %v1068
      %v1070 = vpop.f32.mrb[0].mxu0
      %v1071 = vadd.f32 0.0, %v1070
      %v1072 = vpop.f32.mrb[0].mxu0
      %v1073 = vpop.f32.mrb[0].mxu0
      %1074 = vdwg.mxu0
      %v1075 = vadd.f32 %v905, %v987
      %v1076 = vadd.f32 %v906, %v989
      %v1077 = vadd.f32 %v907, %v1028
      %v1078 = vadd.f32 %v908, %v1030
      %v1079 = vadd.f32 %v909, %v1069
      %v1080 = vadd.f32 %v910, %v1071
      %s1081 = scalar_lea.vmem %s332, 16
      %v1082 = vld [vmem:[%s1081] sm:$0xf]
      %1083 = vrot.lane.b32.xlu0 %v424, 109
      %v1084 = vpop.permute.xlu0 %1083
      %1085 = vrot.lane.b32.xlu0 %v416, 109
      %v1086 = vpop.permute.xlu0 %1085
      %1087 = vrot.lane.b32.xlu0 %v417, 109
      %v1088 = vpop.permute.xlu0 %1087
      %1089 = vrot.lane.b32.xlu0 %v418, 109
      %v1090 = vpop.permute.xlu0 %1089
      %1091 = vrot.lane.b32.xlu0 %v419, 109
      %v1092 = vpop.permute.xlu0 %1091
      %1093 = vrot.lane.b32.xlu0 %v427, 109
      %v1094 = vpop.permute.xlu0 %1093
      %vm1095 = vcmask 891904
      %v1096 = vsel %vm1095, %v1084, %v1086
      %v1097 = vsel %vm1095, %v1086, %v1088
      %v1098 = vsel %vm1095, %v1088, %v1090
      %v1099 = vsel %vm1095, %v1090, %v1092
      %v1100 = vsel %vm1095, %v1092, %v1094
      %v1102 = vsel %vm451, %v1082, 0
      %v1105 = vand.u32 %v1096, %v457
      %v1108 = vand.u32 %v1097, %v457
      %v1111 = vand.u32 %v1098, %v457
      %v1114 = vand.u32 %v1099, %v457
      %v1117 = vand.u32 %v1100, %v457
      %v1120 = vand.u32 %v1094, %v457
      %1122 = vmatprep.subr.bf16.mxu0 %v1108
      %1123 = vmatpush1.bf16.msra.mxu0 %v1105
      %1124 = vmatprep.subr.bf16.mxu0 0
      %1125 = vmatpush1.bf16.msra.mxu0 0
      %1126 = vmatprep.subr.bf16.mxu0 0
      %1127 = vmatpush1.bf16.msra.mxu0 0
      %1128 = vmatprep.subr.bf16.mxu0 0
      %1129 = vmatpush1.bf16.msra.mxu0 0
      %1130 = vmatprep.subr.bf16.mxu0 0
      %1131 = vmatpush1.bf16.msra.mxu0 0
      %1132 = vmatprep.subr.bf16.mxu0 0
      %1133 = vmatpush1.bf16.msra.mxu0 0
      %1134 = vmatprep.subr.bf16.mxu0 0
      %1135 = vmatpush1.bf16.msra.mxu0 0
      %1136 = vmatprep.subr.bf16.mxu0 0
      %1137 = vmatpush1.bf16.msra.mxu0 0
      %1138 = vmatprep.subr.bf16.mxu0 0
      %1139 = vmatpush1.bf16.msra.mxu0 0
      %1140 = vmatprep.subr.bf16.mxu0 0
      %1141 = vmatpush1.bf16.msra.mxu0 0
      %1142 = vmatprep.subr.bf16.mxu0 0
      %1143 = vmatpush1.bf16.msra.mxu0 0
      %1144 = vmatprep.subr.bf16.mxu0 0
      %1145 = vmatpush1.bf16.msra.mxu0 0
      %1146 = vmatprep.subr.bf16.mxu0 0
      %1147 = vmatpush1.bf16.msra.mxu0 0
      %1148 = vmatprep.subr.bf16.mxu0 0
      %1149 = vmatpush1.bf16.msra.mxu0 0
      %1150 = vmatprep.subr.bf16.mxu0 0
      %1151 = vmatpush1.bf16.msra.mxu0 0
      %1152 = vmatprep.subr.bf16.mxu0 0
      %1153 = vmatpush1.bf16.msra.mxu0 0
      %1154 = vmatprep.mubr.bf16.mxu0 0
      %1155 = vmatmul.mubr.bf16.gmra.mrb[0].mxu0 %v1102
      %v1156 = vpop.f32.mrb[0].mxu0
      %v1157 = vadd.f32 0.0, %v1156
      %v1158 = vpop.f32.mrb[0].mxu0
      %v1159 = vadd.f32 0.0, %v1158
      %v1160 = vpop.f32.mrb[0].mxu0
      %v1161 = vpop.f32.mrb[0].mxu0
      %1162 = vdwg.mxu0
      %1163 = vmatprep.subr.bf16.mxu0 %v1114
      %1164 = vmatpush1.bf16.msra.mxu0 %v1111
      %1165 = vmatprep.subr.bf16.mxu0 0
      %1166 = vmatpush1.bf16.msra.mxu0 0
      %1167 = vmatprep.subr.bf16.mxu0 0
      %1168 = vmatpush1.bf16.msra.mxu0 0
      %1169 = vmatprep.subr.bf16.mxu0 0
      %1170 = vmatpush1.bf16.msra.mxu0 0
      %1171 = vmatprep.subr.bf16.mxu0 0
      %1172 = vmatpush1.bf16.msra.mxu0 0
      %1173 = vmatprep.subr.bf16.mxu0 0
      %1174 = vmatpush1.bf16.msra.mxu0 0
      %1175 = vmatprep.subr.bf16.mxu0 0
      %1176 = vmatpush1.bf16.msra.mxu0 0
      %1177 = vmatprep.subr.bf16.mxu0 0
      %1178 = vmatpush1.bf16.msra.mxu0 0
      %1179 = vmatprep.subr.bf16.mxu0 0
      %1180 = vmatpush1.bf16.msra.mxu0 0
      %1181 = vmatprep.subr.bf16.mxu0 0
      %1182 = vmatpush1.bf16.msra.mxu0 0
      %1183 = vmatprep.subr.bf16.mxu0 0
      %1184 = vmatpush1.bf16.msra.mxu0 0
      %1185 = vmatprep.subr.bf16.mxu0 0
      %1186 = vmatpush1.bf16.msra.mxu0 0
      %1187 = vmatprep.subr.bf16.mxu0 0
      %1188 = vmatpush1.bf16.msra.mxu0 0
      %1189 = vmatprep.subr.bf16.mxu0 0
      %1190 = vmatpush1.bf16.msra.mxu0 0
      %1191 = vmatprep.subr.bf16.mxu0 0
      %1192 = vmatpush1.bf16.msra.mxu0 0
      %1193 = vmatprep.subr.bf16.mxu0 0
      %1194 = vmatpush1.bf16.msra.mxu0 0
      %1195 = vmatprep.mubr.bf16.mxu0 0
      %1196 = vmatmul.mubr.bf16.gmra.mrb[0].mxu0 %v1102
      %v1197 = vpop.f32.mrb[0].mxu0
      %v1198 = vadd.f32 0.0, %v1197
      %v1199 = vpop.f32.mrb[0].mxu0
      %v1200 = vadd.f32 0.0, %v1199
      %v1201 = vpop.f32.mrb[0].mxu0
      %v1202 = vpop.f32.mrb[0].mxu0
      %1203 = vdwg.mxu0
      %1204 = vmatprep.subr.bf16.mxu0 %v1120
      %1205 = vmatpush1.bf16.msra.mxu0 %v1117
      %1206 = vmatprep.subr.bf16.mxu0 0
      %1207 = vmatpush1.bf16.msra.mxu0 0
      %1208 = vmatprep.subr.bf16.mxu0 0
      %1209 = vmatpush1.bf16.msra.mxu0 0
      %1210 = vmatprep.subr.bf16.mxu0 0
      %1211 = vmatpush1.bf16.msra.mxu0 0
      %1212 = vmatprep.subr.bf16.mxu0 0
      %1213 = vmatpush1.bf16.msra.mxu0 0
      %1214 = vmatprep.subr.bf16.mxu0 0
      %1215 = vmatpush1.bf16.msra.mxu0 0
      %1216 = vmatprep.subr.bf16.mxu0 0
      %1217 = vmatpush1.bf16.msra.mxu0 0
      %1218 = vmatprep.subr.bf16.mxu0 0
      %1219 = vmatpush1.bf16.msra.mxu0 0
      %1220 = vmatprep.subr.bf16.mxu0 0
      %1221 = vmatpush1.bf16.msra.mxu0 0
      %1222 = vmatprep.subr.bf16.mxu0 0
      %1223 = vmatpush1.bf16.msra.mxu0 0
      %1224 = vmatprep.subr.bf16.mxu0 0
      %1225 = vmatpush1.bf16.msra.mxu0 0
      %1226 = vmatprep.subr.bf16.mxu0 0
      %1227 = vmatpush1.bf16.msra.mxu0 0
      %1228 = vmatprep.subr.bf16.mxu0 0
      %1229 = vmatpush1.bf16.msra.mxu0 0
      %1230 = vmatprep.subr.bf16.mxu0 0
      %1231 = vmatpush1.bf16.msra.mxu0 0
      %1232 = vmatprep.subr.bf16.mxu0 0
      %1233 = vmatpush1.bf16.msra.mxu0 0
      %1234 = vmatprep.subr.bf16.mxu0 0
      %1235 = vmatpush1.bf16.msra.mxu0 0
      %1236 = vmatprep.mubr.bf16.mxu0 0
      %1237 = vmatmul.mubr.bf16.gmra.mrb[0].mxu0 %v1102
      %v1238 = vpop.f32.mrb[0].mxu0
      %v1239 = vadd.f32 0.0, %v1238
      %v1240 = vpop.f32.mrb[0].mxu0
      %v1241 = vadd.f32 0.0, %v1240
      %v1242 = vpop.f32.mrb[0].mxu0
      %v1243 = vpop.f32.mrb[0].mxu0
      %1244 = vdwg.mxu0
      %v1245 = vadd.f32 %v1075, %v1157
      %v1246 = vadd.f32 %v1076, %v1159
      %v1247 = vadd.f32 %v1077, %v1198
      %v1248 = vadd.f32 %v1078, %v1200
      %v1249 = vadd.f32 %v1079, %v1239
      %v1250 = vadd.f32 %v1080, %v1241
      %s1251 = scalar_lea.vmem %s332, 20
      %v1252 = vld [vmem:[%s1251] sm:$0xf]
      %1253 = vrot.lane.b32.xlu0 %v424, 108
      %v1254 = vpop.permute.xlu0 %1253
      %1255 = vrot.lane.b32.xlu0 %v416, 108
      %v1256 = vpop.permute.xlu0 %1255
      %1257 = vrot.lane.b32.xlu0 %v417, 108
      %v1258 = vpop.permute.xlu0 %1257
      %1259 = vrot.lane.b32.xlu0 %v418, 108
      %v1260 = vpop.permute.xlu0 %1259
      %1261 = vrot.lane.b32.xlu0 %v419, 108
      %v1262 = vpop.permute.xlu0 %1261
      %1263 = vrot.lane.b32.xlu0 %v427, 108
      %v1264 = vpop.permute.xlu0 %1263
      %vm1265 = vcmask 883712
      %v1266 = vsel %vm1265, %v1254, %v1256
      %v1267 = vsel %vm1265, %v1256, %v1258
      %v1268 = vsel %vm1265, %v1258, %v1260
      %v1269 = vsel %vm1265, %v1260, %v1262
      %v1270 = vsel %vm1265, %v1262, %v1264
      %v1272 = vsel %vm451, %v1252, 0
      %v1275 = vand.u32 %v1266, %v457
      %v1278 = vand.u32 %v1267, %v457
      %v1281 = vand.u32 %v1268, %v457
      %v1284 = vand.u32 %v1269, %v457
      %v1287 = vand.u32 %v1270, %v457
      %v1290 = vand.u32 %v1264, %v457
      %1292 = vmatprep.subr.bf16.mxu0 %v1278
      %1293 = vmatpush1.bf16.msra.mxu0 %v1275
      %1294 = vmatprep.subr.bf16.mxu0 0
      %1295 = vmatpush1.bf16.msra.mxu0 0
      %1296 = vmatprep.subr.bf16.mxu0 0
      %1297 = vmatpush1.bf16.msra.mxu0 0
      %1298 = vmatprep.subr.bf16.mxu0 0
      %1299 = vmatpush1.bf16.msra.mxu0 0
      %1300 = vmatprep.subr.bf16.mxu0 0
      %1301 = vmatpush1.bf16.msra.mxu0 0
      %1302 = vmatprep.subr.bf16.mxu0 0
      %1303 = vmatpush1.bf16.msra.mxu0 0
      %1304 = vmatprep.subr.bf16.mxu0 0
      %1305 = vmatpush1.bf16.msra.mxu0 0
      %1306 = vmatprep.subr.bf16.mxu0 0
      %1307 = vmatpush1.bf16.msra.mxu0 0
      %1308 = vmatprep.subr.bf16.mxu0 0
      %1309 = vmatpush1.bf16.msra.mxu0 0
      %1310 = vmatprep.subr.bf16.mxu0 0
      %1311 = vmatpush1.bf16.msra.mxu0 0
      %1312 = vmatprep.subr.bf16.mxu0 0
      %1313 = vmatpush1.bf16.msra.mxu0 0
      %1314 = vmatprep.subr.bf16.mxu0 0
      %1315 = vmatpush1.bf16.msra.mxu0 0
      %1316 = vmatprep.subr.bf16.mxu0 0
      %1317 = vmatpush1.bf16.msra.mxu0 0
      %1318 = vmatprep.subr.bf16.mxu0 0
      %1319 = vmatpush1.bf16.msra.mxu0 0
      %1320 = vmatprep.subr.bf16.mxu0 0
      %1321 = vmatpush1.bf16.msra.mxu0 0
      %1322 = vmatprep.subr.bf16.mxu0 0
      %1323 = vmatpush1.bf16.msra.mxu0 0
      %1324 = vmatprep.mubr.bf16.mxu0 0
      %1325 = vmatmul.mubr.bf16.gmra.mrb[0].mxu0 %v1272
      %v1326 = vpop.f32.mrb[0].mxu0
      %v1327 = vadd.f32 0.0, %v1326
      %v1328 = vpop.f32.mrb[0].mxu0
      %v1329 = vadd.f32 0.0, %v1328
      %v1330 = vpop.f32.mrb[0].mxu0
      %v1331 = vpop.f32.mrb[0].mxu0
      %1332 = vdwg.mxu0
      %1333 = vmatprep.subr.bf16.mxu0 %v1284
      %1334 = vmatpush1.bf16.msra.mxu0 %v1281
      %1335 = vmatprep.subr.bf16.mxu0 0
      %1336 = vmatpush1.bf16.msra.mxu0 0
      %1337 = vmatprep.subr.bf16.mxu0 0
      %1338 = vmatpush1.bf16.msra.mxu0 0
      %1339 = vmatprep.subr.bf16.mxu0 0
      %1340 = vmatpush1.bf16.msra.mxu0 0
      %1341 = vmatprep.subr.bf16.mxu0 0
      %1342 = vmatpush1.bf16.msra.mxu0 0
      %1343 = vmatprep.subr.bf16.mxu0 0
      %1344 = vmatpush1.bf16.msra.mxu0 0
      %1345 = vmatprep.subr.bf16.mxu0 0
      %1346 = vmatpush1.bf16.msra.mxu0 0
      %1347 = vmatprep.subr.bf16.mxu0 0
      %1348 = vmatpush1.bf16.msra.mxu0 0
      %1349 = vmatprep.subr.bf16.mxu0 0
      %1350 = vmatpush1.bf16.msra.mxu0 0
      %1351 = vmatprep.subr.bf16.mxu0 0
      %1352 = vmatpush1.bf16.msra.mxu0 0
      %1353 = vmatprep.subr.bf16.mxu0 0
      %1354 = vmatpush1.bf16.msra.mxu0 0
      %1355 = vmatprep.subr.bf16.mxu0 0
      %1356 = vmatpush1.bf16.msra.mxu0 0
      %1357 = vmatprep.subr.bf16.mxu0 0
      %1358 = vmatpush1.bf16.msra.mxu0 0
      %1359 = vmatprep.subr.bf16.mxu0 0
      %1360 = vmatpush1.bf16.msra.mxu0 0
      %1361 = vmatprep.subr.bf16.mxu0 0
      %1362 = vmatpush1.bf16.msra.mxu0 0
      %1363 = vmatprep.subr.bf16.mxu0 0
      %1364 = vmatpush1.bf16.msra.mxu0 0
      %1365 = vmatprep.mubr.bf16.mxu0 0
      %1366 = vmatmul.mubr.bf16.gmra.mrb[0].mxu0 %v1272
      %v1367 = vpop.f32.mrb[0].mxu0
      %v1368 = vadd.f32 0.0, %v1367
      %v1369 = vpop.f32.mrb[0].mxu0
      %v1370 = vadd.f32 0.0, %v1369
      %v1371 = vpop.f32.mrb[0].mxu0
      %v1372 = vpop.f32.mrb[0].mxu0
      %1373 = vdwg.mxu0
      %1374 = vmatprep.subr.bf16.mxu0 %v1290
      %1375 = vmatpush1.bf16.msra.mxu0 %v1287
      %1376 = vmatprep.subr.bf16.mxu0 0
      %1377 = vmatpush1.bf16.msra.mxu0 0
      %1378 = vmatprep.subr.bf16.mxu0 0
      %1379 = vmatpush1.bf16.msra.mxu0 0
      %1380 = vmatprep.subr.bf16.mxu0 0
      %1381 = vmatpush1.bf16.msra.mxu0 0
      %1382 = vmatprep.subr.bf16.mxu0 0
      %1383 = vmatpush1.bf16.msra.mxu0 0
      %1384 = vmatprep.subr.bf16.mxu0 0
      %1385 = vmatpush1.bf16.msra.mxu0 0
      %1386 = vmatprep.subr.bf16.mxu0 0
      %1387 = vmatpush1.bf16.msra.mxu0 0
      %1388 = vmatprep.subr.bf16.mxu0 0
      %1389 = vmatpush1.bf16.msra.mxu0 0
      %1390 = vmatprep.subr.bf16.mxu0 0
      %1391 = vmatpush1.bf16.msra.mxu0 0
      %1392 = vmatprep.subr.bf16.mxu0 0
      %1393 = vmatpush1.bf16.msra.mxu0 0
      %1394 = vmatprep.subr.bf16.mxu0 0
      %1395 = vmatpush1.bf16.msra.mxu0 0
      %1396 = vmatprep.subr.bf16.mxu0 0
      %1397 = vmatpush1.bf16.msra.mxu0 0
      %1398 = vmatprep.subr.bf16.mxu0 0
      %1399 = vmatpush1.bf16.msra.mxu0 0
      %1400 = vmatprep.subr.bf16.mxu0 0
      %1401 = vmatpush1.bf16.msra.mxu0 0
      %1402 = vmatprep.subr.bf16.mxu0 0
      %1403 = vmatpush1.bf16.msra.mxu0 0
      %1404 = vmatprep.subr.bf16.mxu0 0
      %1405 = vmatpush1.bf16.msra.mxu0 0
      %1406 = vmatprep.mubr.bf16.mxu0 0
      %1407 = vmatmul.mubr.bf16.gmra.mrb[0].mxu0 %v1272
      %v1408 = vpop.f32.mrb[0].mxu0
      %v1409 = vadd.f32 0.0, %v1408
      %v1410 = vpop.f32.mrb[0].mxu0
      %v1411 = vadd.f32 0.0, %v1410
      %v1412 = vpop.f32.mrb[0].mxu0
      %v1413 = vpop.f32.mrb[0].mxu0
      %1414 = vdwg.mxu0
      %v1415 = vadd.f32 %v1245, %v1327
      %v1416 = vadd.f32 %v1246, %v1329
      %v1417 = vadd.f32 %v1247, %v1368
      %v1418 = vadd.f32 %v1248, %v1370
      %v1419 = vadd.f32 %v1249, %v1409
      %v1420 = vadd.f32 %v1250, %v1411
      %s1421 = scalar_lea.vmem %s332, 24
      %v1422 = vld [vmem:[%s1421] sm:$0xf]
      %1423 = vrot.lane.b32.xlu0 %v424, 92
      %v1424 = vpop.permute.xlu0 %1423
      %1425 = vrot.lane.b32.xlu0 %v416, 92
      %v1426 = vpop.permute.xlu0 %1425
      %1427 = vrot.lane.b32.xlu0 %v417, 92
      %v1428 = vpop.permute.xlu0 %1427
      %1429 = vrot.lane.b32.xlu0 %v418, 92
      %v1430 = vpop.permute.xlu0 %1429
      %1431 = vrot.lane.b32.xlu0 %v419, 92
      %v1432 = vpop.permute.xlu0 %1431
      %1433 = vrot.lane.b32.xlu0 %v427, 92
      %v1434 = vpop.permute.xlu0 %1433
      %vm1435 = vcmask 752640
      %v1436 = vsel %vm1435, %v1424, %v1426
      %v1437 = vsel %vm1435, %v1426, %v1428
      %v1438 = vsel %vm1435, %v1428, %v1430
      %v1439 = vsel %vm1435, %v1430, %v1432
      %v1440 = vsel %vm1435, %v1432, %v1434
      %v1442 = vsel %vm451, %v1422, 0
      %v1445 = vand.u32 %v1436, %v457
      %v1448 = vand.u32 %v1437, %v457
      %v1451 = vand.u32 %v1438, %v457
      %v1454 = vand.u32 %v1439, %v457
      %v1457 = vand.u32 %v1440, %v457
      %v1460 = vand.u32 %v1434, %v457
      %1462 = vmatprep.subr.bf16.mxu0 %v1448
      %1463 = vmatpush1.bf16.msra.mxu0 %v1445
      %1464 = vmatprep.subr.bf16.mxu0 0
      %1465 = vmatpush1.bf16.msra.mxu0 0
      %1466 = vmatprep.subr.bf16.mxu0 0
      %1467 = vmatpush1.bf16.msra.mxu0 0
      %1468 = vmatprep.subr.bf16.mxu0 0
      %1469 = vmatpush1.bf16.msra.mxu0 0
      %1470 = vmatprep.subr.bf16.mxu0 0
      %1471 = vmatpush1.bf16.msra.mxu0 0
      %1472 = vmatprep.subr.bf16.mxu0 0
      %1473 = vmatpush1.bf16.msra.mxu0 0
      %1474 = vmatprep.subr.bf16.mxu0 0
      %1475 = vmatpush1.bf16.msra.mxu0 0
      %1476 = vmatprep.subr.bf16.mxu0 0
      %1477 = vmatpush1.bf16.msra.mxu0 0
      %1478 = vmatprep.subr.bf16.mxu0 0
      %1479 = vmatpush1.bf16.msra.mxu0 0
      %1480 = vmatprep.subr.bf16.mxu0 0
      %1481 = vmatpush1.bf16.msra.mxu0 0
      %1482 = vmatprep.subr.bf16.mxu0 0
      %1483 = vmatpush1.bf16.msra.mxu0 0
      %1484 = vmatprep.subr.bf16.mxu0 0
      %1485 = vmatpush1.bf16.msra.mxu0 0
      %1486 = vmatprep.subr.bf16.mxu0 0
      %1487 = vmatpush1.bf16.msra.mxu0 0
      %1488 = vmatprep.subr.bf16.mxu0 0
      %1489 = vmatpush1.bf16.msra.mxu0 0
      %1490 = vmatprep.subr.bf16.mxu0 0
      %1491 = vmatpush1.bf16.msra.mxu0 0
      %1492 = vmatprep.subr.bf16.mxu0 0
      %1493 = vmatpush1.bf16.msra.mxu0 0
      %1494 = vmatprep.mubr.bf16.mxu0 0
      %1495 = vmatmul.mubr.bf16.gmra.mrb[0].mxu0 %v1442
      %v1496 = vpop.f32.mrb[0].mxu0
      %v1497 = vadd.f32 0.0, %v1496
      %v1498 = vpop.f32.mrb[0].mxu0
      %v1499 = vadd.f32 0.0, %v1498
      %v1500 = vpop.f32.mrb[0].mxu0
      %v1501 = vpop.f32.mrb[0].mxu0
      %1502 = vdwg.mxu0
      %1503 = vmatprep.subr.bf16.mxu0 %v1454
      %1504 = vmatpush1.bf16.msra.mxu0 %v1451
      %1505 = vmatprep.subr.bf16.mxu0 0
      %1506 = vmatpush1.bf16.msra.mxu0 0
      %1507 = vmatprep.subr.bf16.mxu0 0
      %1508 = vmatpush1.bf16.msra.mxu0 0
      %1509 = vmatprep.subr.bf16.mxu0 0
      %1510 = vmatpush1.bf16.msra.mxu0 0
      %1511 = vmatprep.subr.bf16.mxu0 0
      %1512 = vmatpush1.bf16.msra.mxu0 0
      %1513 = vmatprep.subr.bf16.mxu0 0
      %1514 = vmatpush1.bf16.msra.mxu0 0
      %1515 = vmatprep.subr.bf16.mxu0 0
      %1516 = vmatpush1.bf16.msra.mxu0 0
      %1517 = vmatprep.subr.bf16.mxu0 0
      %1518 = vmatpush1.bf16.msra.mxu0 0
      %1519 = vmatprep.subr.bf16.mxu0 0
      %1520 = vmatpush1.bf16.msra.mxu0 0
      %1521 = vmatprep.subr.bf16.mxu0 0
      %1522 = vmatpush1.bf16.msra.mxu0 0
      %1523 = vmatprep.subr.bf16.mxu0 0
      %1524 = vmatpush1.bf16.msra.mxu0 0
      %1525 = vmatprep.subr.bf16.mxu0 0
      %1526 = vmatpush1.bf16.msra.mxu0 0
      %1527 = vmatprep.subr.bf16.mxu0 0
      %1528 = vmatpush1.bf16.msra.mxu0 0
      %1529 = vmatprep.subr.bf16.mxu0 0
      %1530 = vmatpush1.bf16.msra.mxu0 0
      %1531 = vmatprep.subr.bf16.mxu0 0
      %1532 = vmatpush1.bf16.msra.mxu0 0
      %1533 = vmatprep.subr.bf16.mxu0 0
      %1534 = vmatpush1.bf16.msra.mxu0 0
      %1535 = vmatprep.mubr.bf16.mxu0 0
      %1536 = vmatmul.mubr.bf16.gmra.mrb[0].mxu0 %v1442
      %v1537 = vpop.f32.mrb[0].mxu0
      %v1538 = vadd.f32 0.0, %v1537
      %v1539 = vpop.f32.mrb[0].mxu0
      %v1540 = vadd.f32 0.0, %v1539
      %v1541 = vpop.f32.mrb[0].mxu0
      %v1542 = vpop.f32.mrb[0].mxu0
      %1543 = vdwg.mxu0
      %1544 = vmatprep.subr.bf16.mxu0 %v1460
      %1545 = vmatpush1.bf16.msra.mxu0 %v1457
      %1546 = vmatprep.subr.bf16.mxu0 0
      %1547 = vmatpush1.bf16.msra.mxu0 0
      %1548 = vmatprep.subr.bf16.mxu0 0
      %1549 = vmatpush1.bf16.msra.mxu0 0
      %1550 = vmatprep.subr.bf16.mxu0 0
      %1551 = vmatpush1.bf16.msra.mxu0 0
      %1552 = vmatprep.subr.bf16.mxu0 0
      %1553 = vmatpush1.bf16.msra.mxu0 0
      %1554 = vmatprep.subr.bf16.mxu0 0
      %1555 = vmatpush1.bf16.msra.mxu0 0
      %1556 = vmatprep.subr.bf16.mxu0 0
      %1557 = vmatpush1.bf16.msra.mxu0 0
      %1558 = vmatprep.subr.bf16.mxu0 0
      %1559 = vmatpush1.bf16.msra.mxu0 0
      %1560 = vmatprep.subr.bf16.mxu0 0
      %1561 = vmatpush1.bf16.msra.mxu0 0
      %1562 = vmatprep.subr.bf16.mxu0 0
      %1563 = vmatpush1.bf16.msra.mxu0 0
      %1564 = vmatprep.subr.bf16.mxu0 0
      %1565 = vmatpush1.bf16.msra.mxu0 0
      %1566 = vmatprep.subr.bf16.mxu0 0
      %1567 = vmatpush1.bf16.msra.mxu0 0
      %1568 = vmatprep.subr.bf16.mxu0 0
      %1569 = vmatpush1.bf16.msra.mxu0 0
      %1570 = vmatprep.subr.bf16.mxu0 0
      %1571 = vmatpush1.bf16.msra.mxu0 0
      %1572 = vmatprep.subr.bf16.mxu0 0
      %1573 = vmatpush1.bf16.msra.mxu0 0
      %1574 = vmatprep.subr.bf16.mxu0 0
      %1575 = vmatpush1.bf16.msra.mxu0 0
      %1576 = vmatprep.mubr.bf16.mxu0 0
      %1577 = vmatmul.mubr.bf16.gmra.mrb[0].mxu0 %v1442
      %v1578 = vpop.f32.mrb[0].mxu0
      %v1579 = vadd.f32 0.0, %v1578
      %v1580 = vpop.f32.mrb[0].mxu0
      %v1581 = vadd.f32 0.0, %v1580
      %v1582 = vpop.f32.mrb[0].mxu0
      %v1583 = vpop.f32.mrb[0].mxu0
      %1584 = vdwg.mxu0
      %v1585 = vadd.f32 %v1415, %v1497
      %v1586 = vadd.f32 %v1416, %v1499
      %v1587 = vadd.f32 %v1417, %v1538
      %v1588 = vadd.f32 %v1418, %v1540
      %v1589 = vadd.f32 %v1419, %v1579
      %v1590 = vadd.f32 %v1420, %v1581
      %s1591 = scalar_lea.vmem %s332, 28
      %v1592 = vld [vmem:[%s1591] sm:$0xf]
      %1593 = vrot.lane.b32.xlu0 %v424, 91
      %v1594 = vpop.permute.xlu0 %1593
      %1595 = vrot.lane.b32.xlu0 %v416, 91
      %v1596 = vpop.permute.xlu0 %1595
      %1597 = vrot.lane.b32.xlu0 %v417, 91
      %v1598 = vpop.permute.xlu0 %1597
      %1599 = vrot.lane.b32.xlu0 %v418, 91
      %v1600 = vpop.permute.xlu0 %1599
      %1601 = vrot.lane.b32.xlu0 %v419, 91
      %v1602 = vpop.permute.xlu0 %1601
      %1603 = vrot.lane.b32.xlu0 %v427, 91
      %v1604 = vpop.permute.xlu0 %1603
      %vm1605 = vcmask 744448
      %v1606 = vsel %vm1605, %v1594, %v1596
      %v1607 = vsel %vm1605, %v1596, %v1598
      %v1608 = vsel %vm1605, %v1598, %v1600
      %v1609 = vsel %vm1605, %v1600, %v1602
      %v1610 = vsel %vm1605, %v1602, %v1604
      %v1612 = vsel %vm451, %v1592, 0
      %v1615 = vand.u32 %v1606, %v457
      %v1618 = vand.u32 %v1607, %v457
      %v1621 = vand.u32 %v1608, %v457
      %v1624 = vand.u32 %v1609, %v457
      %v1627 = vand.u32 %v1610, %v457
      %v1630 = vand.u32 %v1604, %v457
      %1632 = vmatprep.subr.bf16.mxu0 %v1618
      %1633 = vmatpush1.bf16.msra.mxu0 %v1615
      %1634 = vmatprep.subr.bf16.mxu0 0
      %1635 = vmatpush1.bf16.msra.mxu0 0
      %1636 = vmatprep.subr.bf16.mxu0 0
      %1637 = vmatpush1.bf16.msra.mxu0 0
      %1638 = vmatprep.subr.bf16.mxu0 0
      %1639 = vmatpush1.bf16.msra.mxu0 0
      %1640 = vmatprep.subr.bf16.mxu0 0
      %1641 = vmatpush1.bf16.msra.mxu0 0
      %1642 = vmatprep.subr.bf16.mxu0 0
      %1643 = vmatpush1.bf16.msra.mxu0 0
      %1644 = vmatprep.subr.bf16.mxu0 0
      %1645 = vmatpush1.bf16.msra.mxu0 0
      %1646 = vmatprep.subr.bf16.mxu0 0
      %1647 = vmatpush1.bf16.msra.mxu0 0
      %1648 = vmatprep.subr.bf16.mxu0 0
      %1649 = vmatpush1.bf16.msra.mxu0 0
      %1650 = vmatprep.subr.bf16.mxu0 0
      %1651 = vmatpush1.bf16.msra.mxu0 0
      %1652 = vmatprep.subr.bf16.mxu0 0
      %1653 = vmatpush1.bf16.msra.mxu0 0
      %1654 = vmatprep.subr.bf16.mxu0 0
      %1655 = vmatpush1.bf16.msra.mxu0 0
      %1656 = vmatprep.subr.bf16.mxu0 0
      %1657 = vmatpush1.bf16.msra.mxu0 0
      %1658 = vmatprep.subr.bf16.mxu0 0
      %1659 = vmatpush1.bf16.msra.mxu0 0
      %1660 = vmatprep.subr.bf16.mxu0 0
      %1661 = vmatpush1.bf16.msra.mxu0 0
      %1662 = vmatprep.subr.bf16.mxu0 0
      %1663 = vmatpush1.bf16.msra.mxu0 0
      %1664 = vmatprep.mubr.bf16.mxu0 0
      %1665 = vmatmul.mubr.bf16.gmra.mrb[0].mxu0 %v1612
      %v1666 = vpop.f32.mrb[0].mxu0
      %v1667 = vadd.f32 0.0, %v1666
      %v1668 = vpop.f32.mrb[0].mxu0
      %v1669 = vadd.f32 0.0, %v1668
      %v1670 = vpop.f32.mrb[0].mxu0
      %v1671 = vpop.f32.mrb[0].mxu0
      %1672 = vdwg.mxu0
      %1673 = vmatprep.subr.bf16.mxu0 %v1624
      %1674 = vmatpush1.bf16.msra.mxu0 %v1621
      %1675 = vmatprep.subr.bf16.mxu0 0
      %1676 = vmatpush1.bf16.msra.mxu0 0
      %1677 = vmatprep.subr.bf16.mxu0 0
      %1678 = vmatpush1.bf16.msra.mxu0 0
      %1679 = vmatprep.subr.bf16.mxu0 0
      %1680 = vmatpush1.bf16.msra.mxu0 0
      %1681 = vmatprep.subr.bf16.mxu0 0
      %1682 = vmatpush1.bf16.msra.mxu0 0
      %1683 = vmatprep.subr.bf16.mxu0 0
      %1684 = vmatpush1.bf16.msra.mxu0 0
      %1685 = vmatprep.subr.bf16.mxu0 0
      %1686 = vmatpush1.bf16.msra.mxu0 0
      %1687 = vmatprep.subr.bf16.mxu0 0
      %1688 = vmatpush1.bf16.msra.mxu0 0
      %1689 = vmatprep.subr.bf16.mxu0 0
      %1690 = vmatpush1.bf16.msra.mxu0 0
      %1691 = vmatprep.subr.bf16.mxu0 0
      %1692 = vmatpush1.bf16.msra.mxu0 0
      %1693 = vmatprep.subr.bf16.mxu0 0
      %1694 = vmatpush1.bf16.msra.mxu0 0
      %1695 = vmatprep.subr.bf16.mxu0 0
      %1696 = vmatpush1.bf16.msra.mxu0 0
      %1697 = vmatprep.subr.bf16.mxu0 0
      %1698 = vmatpush1.bf16.msra.mxu0 0
      %1699 = vmatprep.subr.bf16.mxu0 0
      %1700 = vmatpush1.bf16.msra.mxu0 0
      %1701 = vmatprep.subr.bf16.mxu0 0
      %1702 = vmatpush1.bf16.msra.mxu0 0
      %1703 = vmatprep.subr.bf16.mxu0 0
      %1704 = vmatpush1.bf16.msra.mxu0 0
      %1705 = vmatprep.mubr.bf16.mxu0 0
      %1706 = vmatmul.mubr.bf16.gmra.mrb[0].mxu0 %v1612
      %v1707 = vpop.f32.mrb[0].mxu0
      %v1708 = vadd.f32 0.0, %v1707
      %v1709 = vpop.f32.mrb[0].mxu0
      %v1710 = vadd.f32 0.0, %v1709
      %v1711 = vpop.f32.mrb[0].mxu0
      %v1712 = vpop.f32.mrb[0].mxu0
      %1713 = vdwg.mxu0
      %1714 = vmatprep.subr.bf16.mxu0 %v1630
      %1715 = vmatpush1.bf16.msra.mxu0 %v1627
      %1716 = vmatprep.subr.bf16.mxu0 0
      %1717 = vmatpush1.bf16.msra.mxu0 0
      %1718 = vmatprep.subr.bf16.mxu0 0
      %1719 = vmatpush1.bf16.msra.mxu0 0
      %1720 = vmatprep.subr.bf16.mxu0 0
      %1721 = vmatpush1.bf16.msra.mxu0 0
      %1722 = vmatprep.subr.bf16.mxu0 0
      %1723 = vmatpush1.bf16.msra.mxu0 0
      %1724 = vmatprep.subr.bf16.mxu0 0
      %1725 = vmatpush1.bf16.msra.mxu0 0
      %1726 = vmatprep.subr.bf16.mxu0 0
      %1727 = vmatpush1.bf16.msra.mxu0 0
      %1728 = vmatprep.subr.bf16.mxu0 0
      %1729 = vmatpush1.bf16.msra.mxu0 0
      %1730 = vmatprep.subr.bf16.mxu0 0
      %1731 = vmatpush1.bf16.msra.mxu0 0
      %1732 = vmatprep.subr.bf16.mxu0 0
      %1733 = vmatpush1.bf16.msra.mxu0 0
      %1734 = vmatprep.subr.bf16.mxu0 0
      %1735 = vmatpush1.bf16.msra.mxu0 0
      %1736 = vmatprep.subr.bf16.mxu0 0
      %1737 = vmatpush1.bf16.msra.mxu0 0
      %1738 = vmatprep.subr.bf16.mxu0 0
      %1739 = vmatpush1.bf16.msra.mxu0 0
      %1740 = vmatprep.subr.bf16.mxu0 0
      %1741 = vmatpush1.bf16.msra.mxu0 0
      %1742 = vmatprep.subr.bf16.mxu0 0
      %1743 = vmatpush1.bf16.msra.mxu0 0
      %1744 = vmatprep.subr.bf16.mxu0 0
      %1745 = vmatpush1.bf16.msra.mxu0 0
      %1746 = vmatprep.mubr.bf16.mxu0 0
      %1747 = vmatmul.mubr.bf16.gmra.mrb[0].mxu0 %v1612
      %v1748 = vpop.f32.mrb[0].mxu0
      %v1749 = vadd.f32 0.0, %v1748
      %v1750 = vpop.f32.mrb[0].mxu0
      %v1751 = vadd.f32 0.0, %v1750
      %v1752 = vpop.f32.mrb[0].mxu0
      %v1753 = vpop.f32.mrb[0].mxu0
      %1754 = vdwg.mxu0
      %v1755 = vadd.f32 %v1585, %v1667
      %v1756 = vadd.f32 %v1586, %v1669
      %v1757 = vadd.f32 %v1587, %v1708
      %v1758 = vadd.f32 %v1588, %v1710
      %v1759 = vadd.f32 %v1589, %v1749
      %v1760 = vadd.f32 %v1590, %v1751
      %s1761 = scalar_lea.vmem %s332, 32
      %v1762 = vld [vmem:[%s1761] sm:$0xf]
      %1763 = vrot.lane.b32.xlu0 %v424, 90
      %v1764 = vpop.permute.xlu0 %1763
      %1765 = vrot.lane.b32.xlu0 %v416, 90
      %v1766 = vpop.permute.xlu0 %1765
      %1767 = vrot.lane.b32.xlu0 %v417, 90
      %v1768 = vpop.permute.xlu0 %1767
      %1769 = vrot.lane.b32.xlu0 %v418, 90
      %v1770 = vpop.permute.xlu0 %1769
      %1771 = vrot.lane.b32.xlu0 %v419, 90
      %v1772 = vpop.permute.xlu0 %1771
      %1773 = vrot.lane.b32.xlu0 %v427, 90
      %v1774 = vpop.permute.xlu0 %1773
      %vm1775 = vcmask 736256
      %v1776 = vsel %vm1775, %v1764, %v1766
      %v1777 = vsel %vm1775, %v1766, %v1768
      %v1778 = vsel %vm1775, %v1768, %v1770
      %v1779 = vsel %vm1775, %v1770, %v1772
      %v1780 = vsel %vm1775, %v1772, %v1774
      %v1782 = vsel %vm451, %v1762, 0
      %v1785 = vand.u32 %v1776, %v457
      %v1788 = vand.u32 %v1777, %v457
      %v1791 = vand.u32 %v1778, %v457
      %v1794 = vand.u32 %v1779, %v457
      %v1797 = vand.u32 %v1780, %v457
      %v1800 = vand.u32 %v1774, %v457
      %1802 = vmatprep.subr.bf16.mxu0 %v1788
      %1803 = vmatpush1.bf16.msra.mxu0 %v1785
      %1804 = vmatprep.subr.bf16.mxu0 0
      %1805 = vmatpush1.bf16.msra.mxu0 0
      %1806 = vmatprep.subr.bf16.mxu0 0
      %1807 = vmatpush1.bf16.msra.mxu0 0
      %1808 = vmatprep.subr.bf16.mxu0 0
      %1809 = vmatpush1.bf16.msra.mxu0 0
      %1810 = vmatprep.subr.bf16.mxu0 0
      %1811 = vmatpush1.bf16.msra.mxu0 0
      %1812 = vmatprep.subr.bf16.mxu0 0
      %1813 = vmatpush1.bf16.msra.mxu0 0
      %1814 = vmatprep.subr.bf16.mxu0 0
      %1815 = vmatpush1.bf16.msra.mxu0 0
      %1816 = vmatprep.subr.bf16.mxu0 0
      %1817 = vmatpush1.bf16.msra.mxu0 0
      %1818 = vmatprep.subr.bf16.mxu0 0
      %1819 = vmatpush1.bf16.msra.mxu0 0
      %1820 = vmatprep.subr.bf16.mxu0 0
      %1821 = vmatpush1.bf16.msra.mxu0 0
      %1822 = vmatprep.subr.bf16.mxu0 0
      %1823 = vmatpush1.bf16.msra.mxu0 0
      %1824 = vmatprep.subr.bf16.mxu0 0
      %1825 = vmatpush1.bf16.msra.mxu0 0
      %1826 = vmatprep.subr.bf16.mxu0 0
      %1827 = vmatpush1.bf16.msra.mxu0 0
      %1828 = vmatprep.subr.bf16.mxu0 0
      %1829 = vmatpush1.bf16.msra.mxu0 0
      %1830 = vmatprep.subr.bf16.mxu0 0
      %1831 = vmatpush1.bf16.msra.mxu0 0
      %1832 = vmatprep.subr.bf16.mxu0 0
      %1833 = vmatpush1.bf16.msra.mxu0 0
      %1834 = vmatprep.mubr.bf16.mxu0 0
      %1835 = vmatmul.mubr.bf16.gmra.mrb[0].mxu0 %v1782
      %v1836 = vpop.f32.mrb[0].mxu0
      %v1837 = vadd.f32 0.0, %v1836
      %v1838 = vpop.f32.mrb[0].mxu0
      %v1839 = vadd.f32 0.0, %v1838
      %v1840 = vpop.f32.mrb[0].mxu0
      %v1841 = vpop.f32.mrb[0].mxu0
      %1842 = vdwg.mxu0
      %1843 = vmatprep.subr.bf16.mxu0 %v1794
      %1844 = vmatpush1.bf16.msra.mxu0 %v1791
      %1845 = vmatprep.subr.bf16.mxu0 0
      %1846 = vmatpush1.bf16.msra.mxu0 0
      %1847 = vmatprep.subr.bf16.mxu0 0
      %1848 = vmatpush1.bf16.msra.mxu0 0
      %1849 = vmatprep.subr.bf16.mxu0 0
      %1850 = vmatpush1.bf16.msra.mxu0 0
      %1851 = vmatprep.subr.bf16.mxu0 0
      %1852 = vmatpush1.bf16.msra.mxu0 0
      %1853 = vmatprep.subr.bf16.mxu0 0
      %1854 = vmatpush1.bf16.msra.mxu0 0
      %1855 = vmatprep.subr.bf16.mxu0 0
      %1856 = vmatpush1.bf16.msra.mxu0 0
      %1857 = vmatprep.subr.bf16.mxu0 0
      %1858 = vmatpush1.bf16.msra.mxu0 0
      %1859 = vmatprep.subr.bf16.mxu0 0
      %1860 = vmatpush1.bf16.msra.mxu0 0
      %1861 = vmatprep.subr.bf16.mxu0 0
      %1862 = vmatpush1.bf16.msra.mxu0 0
      %1863 = vmatprep.subr.bf16.mxu0 0
      %1864 = vmatpush1.bf16.msra.mxu0 0
      %1865 = vmatprep.subr.bf16.mxu0 0
      %1866 = vmatpush1.bf16.msra.mxu0 0
      %1867 = vmatprep.subr.bf16.mxu0 0
      %1868 = vmatpush1.bf16.msra.mxu0 0
      %1869 = vmatprep.subr.bf16.mxu0 0
      %1870 = vmatpush1.bf16.msra.mxu0 0
      %1871 = vmatprep.subr.bf16.mxu0 0
      %1872 = vmatpush1.bf16.msra.mxu0 0
      %1873 = vmatprep.subr.bf16.mxu0 0
      %1874 = vmatpush1.bf16.msra.mxu0 0
      %1875 = vmatprep.mubr.bf16.mxu0 0
      %1876 = vmatmul.mubr.bf16.gmra.mrb[0].mxu0 %v1782
      %v1877 = vpop.f32.mrb[0].mxu0
      %v1878 = vadd.f32 0.0, %v1877
      %v1879 = vpop.f32.mrb[0].mxu0
      %v1880 = vadd.f32 0.0, %v1879
      %v1881 = vpop.f32.mrb[0].mxu0
      %v1882 = vpop.f32.mrb[0].mxu0
      %1883 = vdwg.mxu0
      %1884 = vmatprep.subr.bf16.mxu0 %v1800
      %1885 = vmatpush1.bf16.msra.mxu0 %v1797
      %1886 = vmatprep.subr.bf16.mxu0 0
      %1887 = vmatpush1.bf16.msra.mxu0 0
      %1888 = vmatprep.subr.bf16.mxu0 0
      %1889 = vmatpush1.bf16.msra.mxu0 0
      %1890 = vmatprep.subr.bf16.mxu0 0
      %1891 = vmatpush1.bf16.msra.mxu0 0
      %1892 = vmatprep.subr.bf16.mxu0 0
      %1893 = vmatpush1.bf16.msra.mxu0 0
      %1894 = vmatprep.subr.bf16.mxu0 0
      %1895 = vmatpush1.bf16.msra.mxu0 0
      %1896 = vmatprep.subr.bf16.mxu0 0
      %1897 = vmatpush1.bf16.msra.mxu0 0
      %1898 = vmatprep.subr.bf16.mxu0 0
      %1899 = vmatpush1.bf16.msra.mxu0 0
      %1900 = vmatprep.subr.bf16.mxu0 0
      %1901 = vmatpush1.bf16.msra.mxu0 0
      %1902 = vmatprep.subr.bf16.mxu0 0
      %1903 = vmatpush1.bf16.msra.mxu0 0
      %1904 = vmatprep.subr.bf16.mxu0 0
      %1905 = vmatpush1.bf16.msra.mxu0 0
      %1906 = vmatprep.subr.bf16.mxu0 0
      %1907 = vmatpush1.bf16.msra.mxu0 0
      %1908 = vmatprep.subr.bf16.mxu0 0
      %1909 = vmatpush1.bf16.msra.mxu0 0
      %1910 = vmatprep.subr.bf16.mxu0 0
      %1911 = vmatpush1.bf16.msra.mxu0 0
      %1912 = vmatprep.subr.bf16.mxu0 0
      %1913 = vmatpush1.bf16.msra.mxu0 0
      %1914 = vmatprep.subr.bf16.mxu0 0
      %1915 = vmatpush1.bf16.msra.mxu0 0
      %1916 = vmatprep.mubr.bf16.mxu0 0
      %1917 = vmatmul.mubr.bf16.gmra.mrb[0].mxu0 %v1782
      %v1918 = vpop.f32.mrb[0].mxu0
      %v1919 = vadd.f32 0.0, %v1918
      %v1920 = vpop.f32.mrb[0].mxu0
      %v1921 = vadd.f32 0.0, %v1920
      %v1922 = vpop.f32.mrb[0].mxu0
      %v1923 = vpop.f32.mrb[0].mxu0
      %1924 = vdwg.mxu0
      %v1925 = vadd.f32 %v1755, %v1837
      %v1926 = vadd.f32 %v1756, %v1839
      %v1927 = vadd.f32 %v1757, %v1878
      %v1928 = vadd.f32 %v1758, %v1880
      %v1929 = vadd.f32 %v1759, %v1919
      %v1930 = vadd.f32 %v1760, %v1921
      %1932 = vset.pattern.permute.xlu0 0
      %1933 = vperm.xlu0 %1932, %v354
      %v1934 = vpop.permute.xlu0 %1933
      %v1936 = vadd.f32 %v1925, %v1934
      %v1937 = vadd.f32 %v1926, %v1934
      %v1938 = vadd.f32 %v1927, %v1934
      %v1939 = vadd.f32 %v1928, %v1934
      %v1940 = vadd.f32 %v1929, %v1934
      %v1941 = vadd.f32 %v1930, %v1934
      %v1942 = vmax.f32 %v1936, 0.0
      %v1943 = vmax.f32 %v1937, 0.0
      %v1944 = vmax.f32 %v1938, 0.0
      %v1945 = vmax.f32 %v1939, 0.0
      %v1946 = vmax.f32 %v1940, 0.0
      %v1947 = vmax.f32 %v1941, 0.0
      %v1949 = vlaneseq
      %v1950 = vshrl.u32 %v1949, 7
      %v1951 = vsub.s32 0, %v1950
      %v1952 = vrot.slane %v353, %v1951
      %v1953 = vlaneseq
      %v1954 = vshrl.u32 %v1953, 7
      %v1955 = vsub.s32 1, %v1954
      %v1956 = vrot.slane %v353, %v1955
      %v1957 = vlaneseq
      %v1958 = vshrl.u32 %v1957, 7
      %v1959 = vsub.s32 2, %v1958
      %v1960 = vrot.slane %v353, %v1959
      %v1961 = vlaneseq
      %v1962 = vshrl.u32 %v1961, 7
      %v1963 = vsub.s32 3, %v1962
      %v1964 = vrot.slane %v353, %v1963
      %v1965 = vlaneseq
      %v1966 = vshrl.u32 %v1965, 7
      %v1967 = vsub.s32 4, %v1966
      %v1968 = vrot.slane %v353, %v1967
      %v1969 = vlaneseq
      %v1970 = vshrl.u32 %v1969, 7
      %v1971 = vsub.s32 5, %v1970
      %v1972 = vrot.slane %v353, %v1971
      %v1979 = vmul.f32 %v1942, %v1952
      %v1980 = vmul.f32 %v1943, %v1956
      %v1981 = vmul.f32 %v1944, %v1960
      %v1982 = vmul.f32 %v1945, %v1964
      %v1983 = vmul.f32 %v1946, %v1968
      %v1984 = vmul.f32 %v1947, %v1972
      %v1985 = vpack.c.bf16 %v1979, %v1979
      %v1986 = vpack.c.bf16 %v1980, %v1980
      %v1987 = vpack.c.bf16 %v1981, %v1981
      %v1988 = vpack.c.bf16 %v1982, %v1982
      %v1989 = vpack.c.bf16 %v1983, %v1983
      %v1990 = vpack.c.bf16 %v1984, %v1984
      %v1991 = vld [vmem:[%s346] sm:$0xff]
      %v1992 = vld [vmem:[%s346 + $0x8] sm:$0xff]
      %1999 = vrot.lane.b32.xlu0 %v1985, 19
      %v2000 = vpop.permute.xlu0 %1999
      %2001 = vrot.lane.b32.xlu0 %v1986, 19
      %v2002 = vpop.permute.xlu0 %2001
      %2003 = vrot.lane.b32.xlu0 %v1987, 19
      %v2004 = vpop.permute.xlu0 %2003
      %2005 = vrot.lane.b32.xlu0 %v1988, 19
      %v2006 = vpop.permute.xlu0 %2005
      %2007 = vrot.lane.b32.xlu0 %v1989, 19
      %v2008 = vpop.permute.xlu0 %2007
      %2009 = vrot.lane.b32.xlu0 %v1990, 19
      %v2010 = vpop.permute.xlu0 %2009
      %v2011 = vsel %vm415, %v2000, %v2002
      %v2012 = vsel %vm415, %v2002, %v2004
      %v2013 = vsel %vm415, %v2004, %v2006
      %v2014 = vsel %vm415, %v2006, %v2008
      %v2015 = vsel %vm415, %v2008, %v2010
      %v2017 = vsel %vm421, 0, %v2000
      %v2019 = vsel %vm425, %v2015, 0
      %v2020 = vld [vmem:[%s341] sm:$0xf]
      %v2021 = vld [vmem:[%s341 + $0x4] sm:$0xf]
      %s2022 = scalar_lea.vmem %s341, 8
      %v2023 = vld [vmem:[%s2022] sm:$0xf]
      %v2024 = vld [vmem:[%s2022 + $0x4] sm:$0xf]
      %v2027 = vunpack.c.l.b16 %v2023
      %v2028 = vunpack.c.l.b16 %v2024
      %v2029 = vpack.c.b16 %v2028, %v2027
      %2032 = vrot.lane.b32.xlu0 %v2017, 127
      %v2033 = vpop.permute.xlu0 %2032
      %2034 = vrot.lane.b32.xlu0 %v2011, 127
      %v2035 = vpop.permute.xlu0 %2034
      %2036 = vrot.lane.b32.xlu0 %v2012, 127
      %v2037 = vpop.permute.xlu0 %2036
      %2038 = vrot.lane.b32.xlu0 %v2013, 127
      %v2039 = vpop.permute.xlu0 %2038
      %2040 = vrot.lane.b32.xlu0 %v2014, 127
      %v2041 = vpop.permute.xlu0 %2040
      %2042 = vrot.lane.b32.xlu0 %v2019, 127
      %v2043 = vpop.permute.xlu0 %2042
      %v2044 = vsel %vm445, %v2033, %v2035
      %v2045 = vsel %vm445, %v2035, %v2037
      %v2046 = vsel %vm445, %v2037, %v2039
      %v2047 = vsel %vm445, %v2039, %v2041
      %v2048 = vsel %vm445, %v2041, %v2043
      %vm2049 = vcmask 64512
      %v2051 = vsel %vm2049, %v2029, 0
      %vm2053 = vcmask 1043456
      %v2055 = vsel %vm2053, %v2044, 0
      %v2058 = vsel %vm2053, %v2045, 0
      %v2061 = vsel %vm2053, %v2046, 0
      %v2064 = vsel %vm2053, %v2047, 0
      %v2067 = vsel %vm2053, %v2048, 0
      %v2070 = vsel %vm2053, %v2043, 0
      %2072 = vmatprep.subr.bf16.mxu0 %v2058
      %2073 = vmatpush1.bf16.msra.mxu0 %v2055
      %2074 = vmatprep.subr.bf16.mxu0 0
      %2075 = vmatpush1.bf16.msra.mxu0 0
      %2076 = vmatprep.subr.bf16.mxu0 0
      %2077 = vmatpush1.bf16.msra.mxu0 0
      %2078 = vmatprep.subr.bf16.mxu0 0
      %2079 = vmatpush1.bf16.msra.mxu0 0
      %2080 = vmatprep.subr.bf16.mxu0 0
      %2081 = vmatpush1.bf16.msra.mxu0 0
      %2082 = vmatprep.subr.bf16.mxu0 0
      %2083 = vmatpush1.bf16.msra.mxu0 0
      %2084 = vmatprep.subr.bf16.mxu0 0
      %2085 = vmatpush1.bf16.msra.mxu0 0
      %2086 = vmatprep.subr.bf16.mxu0 0
      %2087 = vmatpush1.bf16.msra.mxu0 0
      %2088 = vmatprep.subr.bf16.mxu0 0
      %2089 = vmatpush1.bf16.msra.mxu0 0
      %2090 = vmatprep.subr.bf16.mxu0 0
      %2091 = vmatpush1.bf16.msra.mxu0 0
      %2092 = vmatprep.subr.bf16.mxu0 0
      %2093 = vmatpush1.bf16.msra.mxu0 0
      %2094 = vmatprep.subr.bf16.mxu0 0
      %2095 = vmatpush1.bf16.msra.mxu0 0
      %2096 = vmatprep.subr.bf16.mxu0 0
      %2097 = vmatpush1.bf16.msra.mxu0 0
      %2098 = vmatprep.subr.bf16.mxu0 0
      %2099 = vmatpush1.bf16.msra.mxu0 0
      %2100 = vmatprep.subr.bf16.mxu0 0
      %2101 = vmatpush1.bf16.msra.mxu0 0
      %2102 = vmatprep.subr.bf16.mxu0 0
      %2103 = vmatpush1.bf16.msra.mxu0 0
      %2104 = vmatprep.mubr.bf16.mxu0 0
      %2105 = vmatmul.mubr.bf16.gmra.mrb[0].mxu0 %v2051
      %v2106 = vpop.f32.mrb[0].mxu0
      %v2107 = vadd.f32 0.0, %v2106
      %v2108 = vpop.f32.mrb[0].mxu0
      %v2109 = vadd.f32 0.0, %v2108
      %v2110 = vpop.f32.mrb[0].mxu0
      %v2111 = vadd.f32 0.0, %v2110
      %v2112 = vpop.f32.mrb[0].mxu0
      %v2113 = vadd.f32 0.0, %v2112
      %2114 = vdwg.mxu0
      %2115 = vmatprep.subr.bf16.mxu0 %v2064
      %2116 = vmatpush1.bf16.msra.mxu0 %v2061
      %2117 = vmatprep.subr.bf16.mxu0 0
      %2118 = vmatpush1.bf16.msra.mxu0 0
      %2119 = vmatprep.subr.bf16.mxu0 0
      %2120 = vmatpush1.bf16.msra.mxu0 0
      %2121 = vmatprep.subr.bf16.mxu0 0
      %2122 = vmatpush1.bf16.msra.mxu0 0
      %2123 = vmatprep.subr.bf16.mxu0 0
      %2124 = vmatpush1.bf16.msra.mxu0 0
      %2125 = vmatprep.subr.bf16.mxu0 0
      %2126 = vmatpush1.bf16.msra.mxu0 0
      %2127 = vmatprep.subr.bf16.mxu0 0
      %2128 = vmatpush1.bf16.msra.mxu0 0
      %2129 = vmatprep.subr.bf16.mxu0 0
      %2130 = vmatpush1.bf16.msra.mxu0 0
      %2131 = vmatprep.subr.bf16.mxu0 0
      %2132 = vmatpush1.bf16.msra.mxu0 0
      %2133 = vmatprep.subr.bf16.mxu0 0
      %2134 = vmatpush1.bf16.msra.mxu0 0
      %2135 = vmatprep.subr.bf16.mxu0 0
      %2136 = vmatpush1.bf16.msra.mxu0 0
      %2137 = vmatprep.subr.bf16.mxu0 0
      %2138 = vmatpush1.bf16.msra.mxu0 0
      %2139 = vmatprep.subr.bf16.mxu0 0
      %2140 = vmatpush1.bf16.msra.mxu0 0
      %2141 = vmatprep.subr.bf16.mxu0 0
      %2142 = vmatpush1.bf16.msra.mxu0 0
      %2143 = vmatprep.subr.bf16.mxu0 0
      %2144 = vmatpush1.bf16.msra.mxu0 0
      %2145 = vmatprep.subr.bf16.mxu0 0
      %2146 = vmatpush1.bf16.msra.mxu0 0
      %2147 = vmatprep.mubr.bf16.mxu0 0
      %2148 = vmatmul.mubr.bf16.gmra.mrb[0].mxu0 %v2051
      %v2149 = vpop.f32.mrb[0].mxu0
      %v2150 = vadd.f32 0.0, %v2149
      %v2151 = vpop.f32.mrb[0].mxu0
      %v2152 = vadd.f32 0.0, %v2151
      %v2153 = vpop.f32.mrb[0].mxu0
      %v2154 = vadd.f32 0.0, %v2153
      %v2155 = vpop.f32.mrb[0].mxu0
      %v2156 = vadd.f32 0.0, %v2155
      %2157 = vdwg.mxu0
      %2158 = vmatprep.subr.bf16.mxu0 %v2070
      %2159 = vmatpush1.bf16.msra.mxu0 %v2067
      %2160 = vmatprep.subr.bf16.mxu0 0
      %2161 = vmatpush1.bf16.msra.mxu0 0
      %2162 = vmatprep.subr.bf16.mxu0 0
      %2163 = vmatpush1.bf16.msra.mxu0 0
      %2164 = vmatprep.subr.bf16.mxu0 0
      %2165 = vmatpush1.bf16.msra.mxu0 0
      %2166 = vmatprep.subr.bf16.mxu0 0
      %2167 = vmatpush1.bf16.msra.mxu0 0
      %2168 = vmatprep.subr.bf16.mxu0 0
      %2169 = vmatpush1.bf16.msra.mxu0 0
      %2170 = vmatprep.subr.bf16.mxu0 0
      %2171 = vmatpush1.bf16.msra.mxu0 0
      %2172 = vmatprep.subr.bf16.mxu0 0
      %2173 = vmatpush1.bf16.msra.mxu0 0
      %2174 = vmatprep.subr.bf16.mxu0 0
      %2175 = vmatpush1.bf16.msra.mxu0 0
      %2176 = vmatprep.subr.bf16.mxu0 0
      %2177 = vmatpush1.bf16.msra.mxu0 0
      %2178 = vmatprep.subr.bf16.mxu0 0
      %2179 = vmatpush1.bf16.msra.mxu0 0
      %2180 = vmatprep.subr.bf16.mxu0 0
      %2181 = vmatpush1.bf16.msra.mxu0 0
      %2182 = vmatprep.subr.bf16.mxu0 0
      %2183 = vmatpush1.bf16.msra.mxu0 0
      %2184 = vmatprep.subr.bf16.mxu0 0
      %2185 = vmatpush1.bf16.msra.mxu0 0
      %2186 = vmatprep.subr.bf16.mxu0 0
      %2187 = vmatpush1.bf16.msra.mxu0 0
      %2188 = vmatprep.subr.bf16.mxu0 0
      %2189 = vmatpush1.bf16.msra.mxu0 0
      %2190 = vmatprep.mubr.bf16.mxu0 0
      %2191 = vmatmul.mubr.bf16.gmra.mrb[0].mxu0 %v2051
      %v2192 = vpop.f32.mrb[0].mxu0
      %v2193 = vadd.f32 0.0, %v2192
      %v2194 = vpop.f32.mrb[0].mxu0
      %v2195 = vadd.f32 0.0, %v2194
      %v2196 = vpop.f32.mrb[0].mxu0
      %v2197 = vadd.f32 0.0, %v2196
      %v2198 = vpop.f32.mrb[0].mxu0
      %v2199 = vadd.f32 0.0, %v2198
      %2200 = vdwg.mxu0
      %v2203 = vunpack.c.l.b16 %v2020
      %v2204 = vunpack.c.l.b16 %v2021
      %v2205 = vpack.c.b16 %v2204, %v2203
      %v2207 = vsel %vm2049, %v2205, 0
      %v2209 = vsel %vm2053, %v2017, 0
      %v2212 = vsel %vm2053, %v2011, 0
      %v2215 = vsel %vm2053, %v2012, 0
      %v2218 = vsel %vm2053, %v2013, 0
      %v2221 = vsel %vm2053, %v2014, 0
      %v2223 = vsel %vm2053, %v2019, 0
      %2225 = vmatprep.subr.bf16.mxu0 %v2212
      %2226 = vmatpush1.bf16.msra.mxu0 %v2209
      %2227 = vmatprep.subr.bf16.mxu0 0
      %2228 = vmatpush1.bf16.msra.mxu0 0
      %2229 = vmatprep.subr.bf16.mxu0 0
      %2230 = vmatpush1.bf16.msra.mxu0 0
      %2231 = vmatprep.subr.bf16.mxu0 0
      %2232 = vmatpush1.bf16.msra.mxu0 0
      %2233 = vmatprep.subr.bf16.mxu0 0
      %2234 = vmatpush1.bf16.msra.mxu0 0
      %2235 = vmatprep.subr.bf16.mxu0 0
      %2236 = vmatpush1.bf16.msra.mxu0 0
      %2237 = vmatprep.subr.bf16.mxu0 0
      %2238 = vmatpush1.bf16.msra.mxu0 0
      %2239 = vmatprep.subr.bf16.mxu0 0
      %2240 = vmatpush1.bf16.msra.mxu0 0
      %2241 = vmatprep.subr.bf16.mxu0 0
      %2242 = vmatpush1.bf16.msra.mxu0 0
      %2243 = vmatprep.subr.bf16.mxu0 0
      %2244 = vmatpush1.bf16.msra.mxu0 0
      %2245 = vmatprep.subr.bf16.mxu0 0
      %2246 = vmatpush1.bf16.msra.mxu0 0
      %2247 = vmatprep.subr.bf16.mxu0 0
      %2248 = vmatpush1.bf16.msra.mxu0 0
      %2249 = vmatprep.subr.bf16.mxu0 0
      %2250 = vmatpush1.bf16.msra.mxu0 0
      %2251 = vmatprep.subr.bf16.mxu0 0
      %2252 = vmatpush1.bf16.msra.mxu0 0
      %2253 = vmatprep.subr.bf16.mxu0 0
      %2254 = vmatpush1.bf16.msra.mxu0 0
      %2255 = vmatprep.subr.bf16.mxu0 0
      %2256 = vmatpush1.bf16.msra.mxu0 0
      %2257 = vmatprep.mubr.bf16.mxu0 0
      %2258 = vmatmul.mubr.bf16.gmra.mrb[0].mxu0 %v2207
      %v2259 = vpop.f32.mrb[0].mxu0
      %v2260 = vadd.f32 %v2107, %v2259
      %v2261 = vpop.f32.mrb[0].mxu0
      %v2262 = vadd.f32 %v2109, %v2261
      %v2263 = vpop.f32.mrb[0].mxu0
      %v2264 = vadd.f32 %v2111, %v2263
      %v2265 = vpop.f32.mrb[0].mxu0
      %v2266 = vadd.f32 %v2113, %v2265
      %2267 = vdwg.mxu0
      %2268 = vmatprep.subr.bf16.mxu0 %v2218
      %2269 = vmatpush1.bf16.msra.mxu0 %v2215
      %2270 = vmatprep.subr.bf16.mxu0 0
      %2271 = vmatpush1.bf16.msra.mxu0 0
      %2272 = vmatprep.subr.bf16.mxu0 0
      %2273 = vmatpush1.bf16.msra.mxu0 0
      %2274 = vmatprep.subr.bf16.mxu0 0
      %2275 = vmatpush1.bf16.msra.mxu0 0
      %2276 = vmatprep.subr.bf16.mxu0 0
      %2277 = vmatpush1.bf16.msra.mxu0 0
      %2278 = vmatprep.subr.bf16.mxu0 0
      %2279 = vmatpush1.bf16.msra.mxu0 0
      %2280 = vmatprep.subr.bf16.mxu0 0
      %2281 = vmatpush1.bf16.msra.mxu0 0
      %2282 = vmatprep.subr.bf16.mxu0 0
      %2283 = vmatpush1.bf16.msra.mxu0 0
      %2284 = vmatprep.subr.bf16.mxu0 0
      %2285 = vmatpush1.bf16.msra.mxu0 0
      %2286 = vmatprep.subr.bf16.mxu0 0
      %2287 = vmatpush1.bf16.msra.mxu0 0
      %2288 = vmatprep.subr.bf16.mxu0 0
      %2289 = vmatpush1.bf16.msra.mxu0 0
      %2290 = vmatprep.subr.bf16.mxu0 0
      %2291 = vmatpush1.bf16.msra.mxu0 0
      %2292 = vmatprep.subr.bf16.mxu0 0
      %2293 = vmatpush1.bf16.msra.mxu0 0
      %2294 = vmatprep.subr.bf16.mxu0 0
      %2295 = vmatpush1.bf16.msra.mxu0 0
      %2296 = vmatprep.subr.bf16.mxu0 0
      %2297 = vmatpush1.bf16.msra.mxu0 0
      %2298 = vmatprep.subr.bf16.mxu0 0
      %2299 = vmatpush1.bf16.msra.mxu0 0
      %2300 = vmatprep.mubr.bf16.mxu0 0
      %2301 = vmatmul.mubr.bf16.gmra.mrb[0].mxu0 %v2207
      %v2302 = vpop.f32.mrb[0].mxu0
      %v2303 = vadd.f32 %v2150, %v2302
      %v2304 = vpop.f32.mrb[0].mxu0
      %v2305 = vadd.f32 %v2152, %v2304
      %v2306 = vpop.f32.mrb[0].mxu0
      %v2307 = vadd.f32 %v2154, %v2306
      %v2308 = vpop.f32.mrb[0].mxu0
      %v2309 = vadd.f32 %v2156, %v2308
      %2310 = vdwg.mxu0
      %2311 = vmatprep.subr.bf16.mxu0 %v2223
      %2312 = vmatpush1.bf16.msra.mxu0 %v2221
      %2313 = vmatprep.subr.bf16.mxu0 0
      %2314 = vmatpush1.bf16.msra.mxu0 0
      %2315 = vmatprep.subr.bf16.mxu0 0
      %2316 = vmatpush1.bf16.msra.mxu0 0
      %2317 = vmatprep.subr.bf16.mxu0 0
      %2318 = vmatpush1.bf16.msra.mxu0 0
      %2319 = vmatprep.subr.bf16.mxu0 0
      %2320 = vmatpush1.bf16.msra.mxu0 0
      %2321 = vmatprep.subr.bf16.mxu0 0
      %2322 = vmatpush1.bf16.msra.mxu0 0
      %2323 = vmatprep.subr.bf16.mxu0 0
      %2324 = vmatpush1.bf16.msra.mxu0 0
      %2325 = vmatprep.subr.bf16.mxu0 0
      %2326 = vmatpush1.bf16.msra.mxu0 0
      %2327 = vmatprep.subr.bf16.mxu0 0
      %2328 = vmatpush1.bf16.msra.mxu0 0
      %2329 = vmatprep.subr.bf16.mxu0 0
      %2330 = vmatpush1.bf16.msra.mxu0 0
      %2331 = vmatprep.subr.bf16.mxu0 0
      %2332 = vmatpush1.bf16.msra.mxu0 0
      %2333 = vmatprep.subr.bf16.mxu0 0
      %2334 = vmatpush1.bf16.msra.mxu0 0
      %2335 = vmatprep.subr.bf16.mxu0 0
      %2336 = vmatpush1.bf16.msra.mxu0 0
      %2337 = vmatprep.subr.bf16.mxu0 0
      %2338 = vmatpush1.bf16.msra.mxu0 0
      %2339 = vmatprep.subr.bf16.mxu0 0
      %2340 = vmatpush1.bf16.msra.mxu0 0
      %2341 = vmatprep.subr.bf16.mxu0 0
      %2342 = vmatpush1.bf16.msra.mxu0 0
      %2343 = vmatprep.mubr.bf16.mxu0 0
      %2344 = vmatmul.mubr.bf16.gmra.mrb[0].mxu0 %v2207
      %v2345 = vpop.f32.mrb[0].mxu0
      %v2346 = vadd.f32 %v2193, %v2345
      %v2347 = vpop.f32.mrb[0].mxu0
      %v2348 = vadd.f32 %v2195, %v2347
      %v2349 = vpop.f32.mrb[0].mxu0
      %v2350 = vadd.f32 %v2197, %v2349
      %v2351 = vpop.f32.mrb[0].mxu0
      %v2352 = vadd.f32 %v2199, %v2351
      %2353 = vdwg.mxu0
      %s2354 = scalar_lea.vmem %s341, 16
      %v2355 = vld [vmem:[%s2354] sm:$0xf]
      %v2356 = vld [vmem:[%s2354 + $0x4] sm:$0xf]
      %v2359 = vunpack.c.l.b16 %v2355
      %v2360 = vunpack.c.l.b16 %v2356
      %v2361 = vpack.c.b16 %v2360, %v2359
      %2362 = vrot.lane.b32.xlu0 %v2017, 126
      %v2363 = vpop.permute.xlu0 %2362
      %2364 = vrot.lane.b32.xlu0 %v2011, 126
      %v2365 = vpop.permute.xlu0 %2364
      %2366 = vrot.lane.b32.xlu0 %v2012, 126
      %v2367 = vpop.permute.xlu0 %2366
      %2368 = vrot.lane.b32.xlu0 %v2013, 126
      %v2369 = vpop.permute.xlu0 %2368
      %2370 = vrot.lane.b32.xlu0 %v2014, 126
      %v2371 = vpop.permute.xlu0 %2370
      %2372 = vrot.lane.b32.xlu0 %v2019, 126
      %v2373 = vpop.permute.xlu0 %2372
      %v2374 = vsel %vm755, %v2363, %v2365
      %v2375 = vsel %vm755, %v2365, %v2367
      %v2376 = vsel %vm755, %v2367, %v2369
      %v2377 = vsel %vm755, %v2369, %v2371
      %v2378 = vsel %vm755, %v2371, %v2373
      %v2380 = vsel %vm2049, %v2361, 0
      %v2383 = vsel %vm2053, %v2374, 0
      %v2386 = vsel %vm2053, %v2375, 0
      %v2389 = vsel %vm2053, %v2376, 0
      %v2392 = vsel %vm2053, %v2377, 0
      %v2395 = vsel %vm2053, %v2378, 0
      %v2398 = vsel %vm2053, %v2373, 0
      %2400 = vmatprep.subr.bf16.mxu0 %v2386
      %2401 = vmatpush1.bf16.msra.mxu0 %v2383
      %2402 = vmatprep.subr.bf16.mxu0 0
      %2403 = vmatpush1.bf16.msra.mxu0 0
      %2404 = vmatprep.subr.bf16.mxu0 0
      %2405 = vmatpush1.bf16.msra.mxu0 0
      %2406 = vmatprep.subr.bf16.mxu0 0
      %2407 = vmatpush1.bf16.msra.mxu0 0
      %2408 = vmatprep.subr.bf16.mxu0 0
      %2409 = vmatpush1.bf16.msra.mxu0 0
      %2410 = vmatprep.subr.bf16.mxu0 0
      %2411 = vmatpush1.bf16.msra.mxu0 0
      %2412 = vmatprep.subr.bf16.mxu0 0
      %2413 = vmatpush1.bf16.msra.mxu0 0
      %2414 = vmatprep.subr.bf16.mxu0 0
      %2415 = vmatpush1.bf16.msra.mxu0 0
      %2416 = vmatprep.subr.bf16.mxu0 0
      %2417 = vmatpush1.bf16.msra.mxu0 0
      %2418 = vmatprep.subr.bf16.mxu0 0
      %2419 = vmatpush1.bf16.msra.mxu0 0
      %2420 = vmatprep.subr.bf16.mxu0 0
      %2421 = vmatpush1.bf16.msra.mxu0 0
      %2422 = vmatprep.subr.bf16.mxu0 0
      %2423 = vmatpush1.bf16.msra.mxu0 0
      %2424 = vmatprep.subr.bf16.mxu0 0
      %2425 = vmatpush1.bf16.msra.mxu0 0
      %2426 = vmatprep.subr.bf16.mxu0 0
      %2427 = vmatpush1.bf16.msra.mxu0 0
      %2428 = vmatprep.subr.bf16.mxu0 0
      %2429 = vmatpush1.bf16.msra.mxu0 0
      %2430 = vmatprep.subr.bf16.mxu0 0
      %2431 = vmatpush1.bf16.msra.mxu0 0
      %2432 = vmatprep.mubr.bf16.mxu0 0
      %2433 = vmatmul.mubr.bf16.gmra.mrb[0].mxu0 %v2380
      %v2434 = vpop.f32.mrb[0].mxu0
      %v2435 = vadd.f32 0.0, %v2434
      %v2436 = vpop.f32.mrb[0].mxu0
      %v2437 = vadd.f32 0.0, %v2436
      %v2438 = vpop.f32.mrb[0].mxu0
      %v2439 = vadd.f32 0.0, %v2438
      %v2440 = vpop.f32.mrb[0].mxu0
      %v2441 = vadd.f32 0.0, %v2440
      %2442 = vdwg.mxu0
      %2443 = vmatprep.subr.bf16.mxu0 %v2392
      %2444 = vmatpush1.bf16.msra.mxu0 %v2389
      %2445 = vmatprep.subr.bf16.mxu0 0
      %2446 = vmatpush1.bf16.msra.mxu0 0
      %2447 = vmatprep.subr.bf16.mxu0 0
      %2448 = vmatpush1.bf16.msra.mxu0 0
      %2449 = vmatprep.subr.bf16.mxu0 0
      %2450 = vmatpush1.bf16.msra.mxu0 0
      %2451 = vmatprep.subr.bf16.mxu0 0
      %2452 = vmatpush1.bf16.msra.mxu0 0
      %2453 = vmatprep.subr.bf16.mxu0 0
      %2454 = vmatpush1.bf16.msra.mxu0 0
      %2455 = vmatprep.subr.bf16.mxu0 0
      %2456 = vmatpush1.bf16.msra.mxu0 0
      %2457 = vmatprep.subr.bf16.mxu0 0
      %2458 = vmatpush1.bf16.msra.mxu0 0
      %2459 = vmatprep.subr.bf16.mxu0 0
      %2460 = vmatpush1.bf16.msra.mxu0 0
      %2461 = vmatprep.subr.bf16.mxu0 0
      %2462 = vmatpush1.bf16.msra.mxu0 0
      %2463 = vmatprep.subr.bf16.mxu0 0
      %2464 = vmatpush1.bf16.msra.mxu0 0
      %2465 = vmatprep.subr.bf16.mxu0 0
      %2466 = vmatpush1.bf16.msra.mxu0 0
      %2467 = vmatprep.subr.bf16.mxu0 0
      %2468 = vmatpush1.bf16.msra.mxu0 0
      %2469 = vmatprep.subr.bf16.mxu0 0
      %2470 = vmatpush1.bf16.msra.mxu0 0
      %2471 = vmatprep.subr.bf16.mxu0 0
      %2472 = vmatpush1.bf16.msra.mxu0 0
      %2473 = vmatprep.subr.bf16.mxu0 0
      %2474 = vmatpush1.bf16.msra.mxu0 0
      %2475 = vmatprep.mubr.bf16.mxu0 0
      %2476 = vmatmul.mubr.bf16.gmra.mrb[0].mxu0 %v2380
      %v2477 = vpop.f32.mrb[0].mxu0
      %v2478 = vadd.f32 0.0, %v2477
      %v2479 = vpop.f32.mrb[0].mxu0
      %v2480 = vadd.f32 0.0, %v2479
      %v2481 = vpop.f32.mrb[0].mxu0
      %v2482 = vadd.f32 0.0, %v2481
      %v2483 = vpop.f32.mrb[0].mxu0
      %v2484 = vadd.f32 0.0, %v2483
      %2485 = vdwg.mxu0
      %2486 = vmatprep.subr.bf16.mxu0 %v2398
      %2487 = vmatpush1.bf16.msra.mxu0 %v2395
      %2488 = vmatprep.subr.bf16.mxu0 0
      %2489 = vmatpush1.bf16.msra.mxu0 0
      %2490 = vmatprep.subr.bf16.mxu0 0
      %2491 = vmatpush1.bf16.msra.mxu0 0
      %2492 = vmatprep.subr.bf16.mxu0 0
      %2493 = vmatpush1.bf16.msra.mxu0 0
      %2494 = vmatprep.subr.bf16.mxu0 0
      %2495 = vmatpush1.bf16.msra.mxu0 0
      %2496 = vmatprep.subr.bf16.mxu0 0
      %2497 = vmatpush1.bf16.msra.mxu0 0
      %2498 = vmatprep.subr.bf16.mxu0 0
      %2499 = vmatpush1.bf16.msra.mxu0 0
      %2500 = vmatprep.subr.bf16.mxu0 0
      %2501 = vmatpush1.bf16.msra.mxu0 0
      %2502 = vmatprep.subr.bf16.mxu0 0
      %2503 = vmatpush1.bf16.msra.mxu0 0
      %2504 = vmatprep.subr.bf16.mxu0 0
      %2505 = vmatpush1.bf16.msra.mxu0 0
      %2506 = vmatprep.subr.bf16.mxu0 0
      %2507 = vmatpush1.bf16.msra.mxu0 0
      %2508 = vmatprep.subr.bf16.mxu0 0
      %2509 = vmatpush1.bf16.msra.mxu0 0
      %2510 = vmatprep.subr.bf16.mxu0 0
      %2511 = vmatpush1.bf16.msra.mxu0 0
      %2512 = vmatprep.subr.bf16.mxu0 0
      %2513 = vmatpush1.bf16.msra.mxu0 0
      %2514 = vmatprep.subr.bf16.mxu0 0
      %2515 = vmatpush1.bf16.msra.mxu0 0
      %2516 = vmatprep.subr.bf16.mxu0 0
      %2517 = vmatpush1.bf16.msra.mxu0 0
      %2518 = vmatprep.mubr.bf16.mxu0 0
      %2519 = vmatmul.mubr.bf16.gmra.mrb[0].mxu0 %v2380
      %v2520 = vpop.f32.mrb[0].mxu0
      %v2521 = vadd.f32 0.0, %v2520
      %v2522 = vpop.f32.mrb[0].mxu0
      %v2523 = vadd.f32 0.0, %v2522
      %v2524 = vpop.f32.mrb[0].mxu0
      %v2525 = vadd.f32 0.0, %v2524
      %v2526 = vpop.f32.mrb[0].mxu0
      %v2527 = vadd.f32 0.0, %v2526
      %2528 = vdwg.mxu0
      %v2529 = vadd.f32 %v2260, %v2435
      %v2530 = vadd.f32 %v2262, %v2437
      %v2531 = vadd.f32 %v2303, %v2478
      %v2532 = vadd.f32 %v2305, %v2480
      %v2533 = vadd.f32 %v2346, %v2521
      %v2534 = vadd.f32 %v2348, %v2523
      %v2535 = vadd.f32 %v2264, %v2439
      %v2536 = vadd.f32 %v2266, %v2441
      %v2537 = vadd.f32 %v2307, %v2482
      %v2538 = vadd.f32 %v2309, %v2484
      %v2539 = vadd.f32 %v2350, %v2525
      %v2540 = vadd.f32 %v2352, %v2527
      %s2541 = scalar_lea.vmem %s341, 24
      %v2542 = vld [vmem:[%s2541] sm:$0xf]
      %v2543 = vld [vmem:[%s2541 + $0x4] sm:$0xf]
      %v2546 = vunpack.c.l.b16 %v2542
      %v2547 = vunpack.c.l.b16 %v2543
      %v2548 = vpack.c.b16 %v2547, %v2546
      %2549 = vrot.lane.b32.xlu0 %v2017, 110
      %v2550 = vpop.permute.xlu0 %2549
      %2551 = vrot.lane.b32.xlu0 %v2011, 110
      %v2552 = vpop.permute.xlu0 %2551
      %2553 = vrot.lane.b32.xlu0 %v2012, 110
      %v2554 = vpop.permute.xlu0 %2553
      %2555 = vrot.lane.b32.xlu0 %v2013, 110
      %v2556 = vpop.permute.xlu0 %2555
      %2557 = vrot.lane.b32.xlu0 %v2014, 110
      %v2558 = vpop.permute.xlu0 %2557
      %2559 = vrot.lane.b32.xlu0 %v2019, 110
      %v2560 = vpop.permute.xlu0 %2559
      %v2561 = vsel %vm925, %v2550, %v2552
      %v2562 = vsel %vm925, %v2552, %v2554
      %v2563 = vsel %vm925, %v2554, %v2556
      %v2564 = vsel %vm925, %v2556, %v2558
      %v2565 = vsel %vm925, %v2558, %v2560
      %v2567 = vsel %vm2049, %v2548, 0
      %v2570 = vsel %vm2053, %v2561, 0
      %v2573 = vsel %vm2053, %v2562, 0
      %v2576 = vsel %vm2053, %v2563, 0
      %v2579 = vsel %vm2053, %v2564, 0
      %v2582 = vsel %vm2053, %v2565, 0
      %v2585 = vsel %vm2053, %v2560, 0
      %2587 = vmatprep.subr.bf16.mxu0 %v2573
      %2588 = vmatpush1.bf16.msra.mxu0 %v2570
      %2589 = vmatprep.subr.bf16.mxu0 0
      %2590 = vmatpush1.bf16.msra.mxu0 0
      %2591 = vmatprep.subr.bf16.mxu0 0
      %2592 = vmatpush1.bf16.msra.mxu0 0
      %2593 = vmatprep.subr.bf16.mxu0 0
      %2594 = vmatpush1.bf16.msra.mxu0 0
      %2595 = vmatprep.subr.bf16.mxu0 0
      %2596 = vmatpush1.bf16.msra.mxu0 0
      %2597 = vmatprep.subr.bf16.mxu0 0
      %2598 = vmatpush1.bf16.msra.mxu0 0
      %2599 = vmatprep.subr.bf16.mxu0 0
      %2600 = vmatpush1.bf16.msra.mxu0 0
      %2601 = vmatprep.subr.bf16.mxu0 0
      %2602 = vmatpush1.bf16.msra.mxu0 0
      %2603 = vmatprep.subr.bf16.mxu0 0
      %2604 = vmatpush1.bf16.msra.mxu0 0
      %2605 = vmatprep.subr.bf16.mxu0 0
      %2606 = vmatpush1.bf16.msra.mxu0 0
      %2607 = vmatprep.subr.bf16.mxu0 0
      %2608 = vmatpush1.bf16.msra.mxu0 0
      %2609 = vmatprep.subr.bf16.mxu0 0
      %2610 = vmatpush1.bf16.msra.mxu0 0
      %2611 = vmatprep.subr.bf16.mxu0 0
      %2612 = vmatpush1.bf16.msra.mxu0 0
      %2613 = vmatprep.subr.bf16.mxu0 0
      %2614 = vmatpush1.bf16.msra.mxu0 0
      %2615 = vmatprep.subr.bf16.mxu0 0
      %2616 = vmatpush1.bf16.msra.mxu0 0
      %2617 = vmatprep.subr.bf16.mxu0 0
      %2618 = vmatpush1.bf16.msra.mxu0 0
      %2619 = vmatprep.mubr.bf16.mxu0 0
      %2620 = vmatmul.mubr.bf16.gmra.mrb[0].mxu0 %v2567
      %v2621 = vpop.f32.mrb[0].mxu0
      %v2622 = vadd.f32 0.0, %v2621
      %v2623 = vpop.f32.mrb[0].mxu0
      %v2624 = vadd.f32 0.0, %v2623
      %v2625 = vpop.f32.mrb[0].mxu0
      %v2626 = vadd.f32 0.0, %v2625
      %v2627 = vpop.f32.mrb[0].mxu0
      %v2628 = vadd.f32 0.0, %v2627
      %2629 = vdwg.mxu0
      %2630 = vmatprep.subr.bf16.mxu0 %v2579
      %2631 = vmatpush1.bf16.msra.mxu0 %v2576
      %2632 = vmatprep.subr.bf16.mxu0 0
      %2633 = vmatpush1.bf16.msra.mxu0 0
      %2634 = vmatprep.subr.bf16.mxu0 0
      %2635 = vmatpush1.bf16.msra.mxu0 0
      %2636 = vmatprep.subr.bf16.mxu0 0
      %2637 = vmatpush1.bf16.msra.mxu0 0
      %2638 = vmatprep.subr.bf16.mxu0 0
      %2639 = vmatpush1.bf16.msra.mxu0 0
      %2640 = vmatprep.subr.bf16.mxu0 0
      %2641 = vmatpush1.bf16.msra.mxu0 0
      %2642 = vmatprep.subr.bf16.mxu0 0
      %2643 = vmatpush1.bf16.msra.mxu0 0
      %2644 = vmatprep.subr.bf16.mxu0 0
      %2645 = vmatpush1.bf16.msra.mxu0 0
      %2646 = vmatprep.subr.bf16.mxu0 0
      %2647 = vmatpush1.bf16.msra.mxu0 0
      %2648 = vmatprep.subr.bf16.mxu0 0
      %2649 = vmatpush1.bf16.msra.mxu0 0
      %2650 = vmatprep.subr.bf16.mxu0 0
      %2651 = vmatpush1.bf16.msra.mxu0 0
      %2652 = vmatprep.subr.bf16.mxu0 0
      %2653 = vmatpush1.bf16.msra.mxu0 0
      %2654 = vmatprep.subr.bf16.mxu0 0
      %2655 = vmatpush1.bf16.msra.mxu0 0
      %2656 = vmatprep.subr.bf16.mxu0 0
      %2657 = vmatpush1.bf16.msra.mxu0 0
      %2658 = vmatprep.subr.bf16.mxu0 0
      %2659 = vmatpush1.bf16.msra.mxu0 0
      %2660 = vmatprep.subr.bf16.mxu0 0
      %2661 = vmatpush1.bf16.msra.mxu0 0
      %2662 = vmatprep.mubr.bf16.mxu0 0
      %2663 = vmatmul.mubr.bf16.gmra.mrb[0].mxu0 %v2567
      %v2664 = vpop.f32.mrb[0].mxu0
      %v2665 = vadd.f32 0.0, %v2664
      %v2666 = vpop.f32.mrb[0].mxu0
      %v2667 = vadd.f32 0.0, %v2666
      %v2668 = vpop.f32.mrb[0].mxu0
      %v2669 = vadd.f32 0.0, %v2668
      %v2670 = vpop.f32.mrb[0].mxu0
      %v2671 = vadd.f32 0.0, %v2670
      %2672 = vdwg.mxu0
      %2673 = vmatprep.subr.bf16.mxu0 %v2585
      %2674 = vmatpush1.bf16.msra.mxu0 %v2582
      %2675 = vmatprep.subr.bf16.mxu0 0
      %2676 = vmatpush1.bf16.msra.mxu0 0
      %2677 = vmatprep.subr.bf16.mxu0 0
      %2678 = vmatpush1.bf16.msra.mxu0 0
      %2679 = vmatprep.subr.bf16.mxu0 0
      %2680 = vmatpush1.bf16.msra.mxu0 0
      %2681 = vmatprep.subr.bf16.mxu0 0
      %2682 = vmatpush1.bf16.msra.mxu0 0
      %2683 = vmatprep.subr.bf16.mxu0 0
      %2684 = vmatpush1.bf16.msra.mxu0 0
      %2685 = vmatprep.subr.bf16.mxu0 0
      %2686 = vmatpush1.bf16.msra.mxu0 0
      %2687 = vmatprep.subr.bf16.mxu0 0
      %2688 = vmatpush1.bf16.msra.mxu0 0
      %2689 = vmatprep.subr.bf16.mxu0 0
      %2690 = vmatpush1.bf16.msra.mxu0 0
      %2691 = vmatprep.subr.bf16.mxu0 0
      %2692 = vmatpush1.bf16.msra.mxu0 0
      %2693 = vmatprep.subr.bf16.mxu0 0
      %2694 = vmatpush1.bf16.msra.mxu0 0
      %2695 = vmatprep.subr.bf16.mxu0 0
      %2696 = vmatpush1.bf16.msra.mxu0 0
      %2697 = vmatprep.subr.bf16.mxu0 0
      %2698 = vmatpush1.bf16.msra.mxu0 0
      %2699 = vmatprep.subr.bf16.mxu0 0
      %2700 = vmatpush1.bf16.msra.mxu0 0
      %2701 = vmatprep.subr.bf16.mxu0 0
      %2702 = vmatpush1.bf16.msra.mxu0 0
      %2703 = vmatprep.subr.bf16.mxu0 0
      %2704 = vmatpush1.bf16.msra.mxu0 0
      %2705 = vmatprep.mubr.bf16.mxu0 0
      %2706 = vmatmul.mubr.bf16.gmra.mrb[0].mxu0 %v2567
      %v2707 = vpop.f32.mrb[0].mxu0
      %v2708 = vadd.f32 0.0, %v2707
      %v2709 = vpop.f32.mrb[0].mxu0
      %v2710 = vadd.f32 0.0, %v2709
      %v2711 = vpop.f32.mrb[0].mxu0
      %v2712 = vadd.f32 0.0, %v2711
      %v2713 = vpop.f32.mrb[0].mxu0
      %v2714 = vadd.f32 0.0, %v2713
      %2715 = vdwg.mxu0
      %v2716 = vadd.f32 %v2529, %v2622
      %v2717 = vadd.f32 %v2530, %v2624
      %v2718 = vadd.f32 %v2531, %v2665
      %v2719 = vadd.f32 %v2532, %v2667
      %v2720 = vadd.f32 %v2533, %v2708
      %v2721 = vadd.f32 %v2534, %v2710
      %v2722 = vadd.f32 %v2535, %v2626
      %v2723 = vadd.f32 %v2536, %v2628
      %v2724 = vadd.f32 %v2537, %v2669
      %v2725 = vadd.f32 %v2538, %v2671
      %v2726 = vadd.f32 %v2539, %v2712
      %v2727 = vadd.f32 %v2540, %v2714
      %s2728 = scalar_lea.vmem %s341, 32
      %v2729 = vld [vmem:[%s2728] sm:$0xf]
      %v2730 = vld [vmem:[%s2728 + $0x4] sm:$0xf]
      %v2733 = vunpack.c.l.b16 %v2729
      %v2734 = vunpack.c.l.b16 %v2730
      %v2735 = vpack.c.b16 %v2734, %v2733
      %2736 = vrot.lane.b32.xlu0 %v2017, 109
      %v2737 = vpop.permute.xlu0 %2736
      %2738 = vrot.lane.b32.xlu0 %v2011, 109
      %v2739 = vpop.permute.xlu0 %2738
      %2740 = vrot.lane.b32.xlu0 %v2012, 109
      %v2741 = vpop.permute.xlu0 %2740
      %2742 = vrot.lane.b32.xlu0 %v2013, 109
      %v2743 = vpop.permute.xlu0 %2742
      %2744 = vrot.lane.b32.xlu0 %v2014, 109
      %v2745 = vpop.permute.xlu0 %2744
      %2746 = vrot.lane.b32.xlu0 %v2019, 109
      %v2747 = vpop.permute.xlu0 %2746
      %v2748 = vsel %vm1095, %v2737, %v2739
      %v2749 = vsel %vm1095, %v2739, %v2741
      %v2750 = vsel %vm1095, %v2741, %v2743
      %v2751 = vsel %vm1095, %v2743, %v2745
      %v2752 = vsel %vm1095, %v2745, %v2747
      %v2754 = vsel %vm2049, %v2735, 0
      %v2757 = vsel %vm2053, %v2748, 0
      %v2760 = vsel %vm2053, %v2749, 0
      %v2763 = vsel %vm2053, %v2750, 0
      %v2766 = vsel %vm2053, %v2751, 0
      %v2769 = vsel %vm2053, %v2752, 0
      %v2772 = vsel %vm2053, %v2747, 0
      %2774 = vmatprep.subr.bf16.mxu0 %v2760
      %2775 = vmatpush1.bf16.msra.mxu0 %v2757
      %2776 = vmatprep.subr.bf16.mxu0 0
      %2777 = vmatpush1.bf16.msra.mxu0 0
      %2778 = vmatprep.subr.bf16.mxu0 0
      %2779 = vmatpush1.bf16.msra.mxu0 0
      %2780 = vmatprep.subr.bf16.mxu0 0
      %2781 = vmatpush1.bf16.msra.mxu0 0
      %2782 = vmatprep.subr.bf16.mxu0 0
      %2783 = vmatpush1.bf16.msra.mxu0 0
      %2784 = vmatprep.subr.bf16.mxu0 0
      %2785 = vmatpush1.bf16.msra.mxu0 0
      %2786 = vmatprep.subr.bf16.mxu0 0
      %2787 = vmatpush1.bf16.msra.mxu0 0
      %2788 = vmatprep.subr.bf16.mxu0 0
      %2789 = vmatpush1.bf16.msra.mxu0 0
      %2790 = vmatprep.subr.bf16.mxu0 0
      %2791 = vmatpush1.bf16.msra.mxu0 0
      %2792 = vmatprep.subr.bf16.mxu0 0
      %2793 = vmatpush1.bf16.msra.mxu0 0
      %2794 = vmatprep.subr.bf16.mxu0 0
      %2795 = vmatpush1.bf16.msra.mxu0 0
      %2796 = vmatprep.subr.bf16.mxu0 0
      %2797 = vmatpush1.bf16.msra.mxu0 0
      %2798 = vmatprep.subr.bf16.mxu0 0
      %2799 = vmatpush1.bf16.msra.mxu0 0
      %2800 = vmatprep.subr.bf16.mxu0 0
      %2801 = vmatpush1.bf16.msra.mxu0 0
      %2802 = vmatprep.subr.bf16.mxu0 0
      %2803 = vmatpush1.bf16.msra.mxu0 0
      %2804 = vmatprep.subr.bf16.mxu0 0
      %2805 = vmatpush1.bf16.msra.mxu0 0
      %2806 = vmatprep.mubr.bf16.mxu0 0
      %2807 = vmatmul.mubr.bf16.gmra.mrb[0].mxu0 %v2754
      %v2808 = vpop.f32.mrb[0].mxu0
      %v2809 = vadd.f32 0.0, %v2808
      %v2810 = vpop.f32.mrb[0].mxu0
      %v2811 = vadd.f32 0.0, %v2810
      %v2812 = vpop.f32.mrb[0].mxu0
      %v2813 = vadd.f32 0.0, %v2812
      %v2814 = vpop.f32.mrb[0].mxu0
      %v2815 = vadd.f32 0.0, %v2814
      %2816 = vdwg.mxu0
      %2817 = vmatprep.subr.bf16.mxu0 %v2766
      %2818 = vmatpush1.bf16.msra.mxu0 %v2763
      %2819 = vmatprep.subr.bf16.mxu0 0
      %2820 = vmatpush1.bf16.msra.mxu0 0
      %2821 = vmatprep.subr.bf16.mxu0 0
      %2822 = vmatpush1.bf16.msra.mxu0 0
      %2823 = vmatprep.subr.bf16.mxu0 0
      %2824 = vmatpush1.bf16.msra.mxu0 0
      %2825 = vmatprep.subr.bf16.mxu0 0
      %2826 = vmatpush1.bf16.msra.mxu0 0
      %2827 = vmatprep.subr.bf16.mxu0 0
      %2828 = vmatpush1.bf16.msra.mxu0 0
      %2829 = vmatprep.subr.bf16.mxu0 0
      %2830 = vmatpush1.bf16.msra.mxu0 0
      %2831 = vmatprep.subr.bf16.mxu0 0
      %2832 = vmatpush1.bf16.msra.mxu0 0
      %2833 = vmatprep.subr.bf16.mxu0 0
      %2834 = vmatpush1.bf16.msra.mxu0 0
      %2835 = vmatprep.subr.bf16.mxu0 0
      %2836 = vmatpush1.bf16.msra.mxu0 0
      %2837 = vmatprep.subr.bf16.mxu0 0
      %2838 = vmatpush1.bf16.msra.mxu0 0
      %2839 = vmatprep.subr.bf16.mxu0 0
      %2840 = vmatpush1.bf16.msra.mxu0 0
      %2841 = vmatprep.subr.bf16.mxu0 0
      %2842 = vmatpush1.bf16.msra.mxu0 0
      %2843 = vmatprep.subr.bf16.mxu0 0
      %2844 = vmatpush1.bf16.msra.mxu0 0
      %2845 = vmatprep.subr.bf16.mxu0 0
      %2846 = vmatpush1.bf16.msra.mxu0 0
      %2847 = vmatprep.subr.bf16.mxu0 0
      %2848 = vmatpush1.bf16.msra.mxu0 0
      %2849 = vmatprep.mubr.bf16.mxu0 0
      %2850 = vmatmul.mubr.bf16.gmra.mrb[0].mxu0 %v2754
      %v2851 = vpop.f32.mrb[0].mxu0
      %v2852 = vadd.f32 0.0, %v2851
      %v2853 = vpop.f32.mrb[0].mxu0
      %v2854 = vadd.f32 0.0, %v2853
      %v2855 = vpop.f32.mrb[0].mxu0
      %v2856 = vadd.f32 0.0, %v2855
      %v2857 = vpop.f32.mrb[0].mxu0
      %v2858 = vadd.f32 0.0, %v2857
      %2859 = vdwg.mxu0
      %2860 = vmatprep.subr.bf16.mxu0 %v2772
      %2861 = vmatpush1.bf16.msra.mxu0 %v2769
      %2862 = vmatprep.subr.bf16.mxu0 0
      %2863 = vmatpush1.bf16.msra.mxu0 0
      %2864 = vmatprep.subr.bf16.mxu0 0
      %2865 = vmatpush1.bf16.msra.mxu0 0
      %2866 = vmatprep.subr.bf16.mxu0 0
      %2867 = vmatpush1.bf16.msra.mxu0 0
      %2868 = vmatprep.subr.bf16.mxu0 0
      %2869 = vmatpush1.bf16.msra.mxu0 0
      %2870 = vmatprep.subr.bf16.mxu0 0
      %2871 = vmatpush1.bf16.msra.mxu0 0
      %2872 = vmatprep.subr.bf16.mxu0 0
      %2873 = vmatpush1.bf16.msra.mxu0 0
      %2874 = vmatprep.subr.bf16.mxu0 0
      %2875 = vmatpush1.bf16.msra.mxu0 0
      %2876 = vmatprep.subr.bf16.mxu0 0
      %2877 = vmatpush1.bf16.msra.mxu0 0
      %2878 = vmatprep.subr.bf16.mxu0 0
      %2879 = vmatpush1.bf16.msra.mxu0 0
      %2880 = vmatprep.subr.bf16.mxu0 0
      %2881 = vmatpush1.bf16.msra.mxu0 0
      %2882 = vmatprep.subr.bf16.mxu0 0
      %2883 = vmatpush1.bf16.msra.mxu0 0
      %2884 = vmatprep.subr.bf16.mxu0 0
      %2885 = vmatpush1.bf16.msra.mxu0 0
      %2886 = vmatprep.subr.bf16.mxu0 0
      %2887 = vmatpush1.bf16.msra.mxu0 0
      %2888 = vmatprep.subr.bf16.mxu0 0
      %2889 = vmatpush1.bf16.msra.mxu0 0
      %2890 = vmatprep.subr.bf16.mxu0 0
      %2891 = vmatpush1.bf16.msra.mxu0 0
      %2892 = vmatprep.mubr.bf16.mxu0 0
      %2893 = vmatmul.mubr.bf16.gmra.mrb[0].mxu0 %v2754
      %v2894 = vpop.f32.mrb[0].mxu0
      %v2895 = vadd.f32 0.0, %v2894
      %v2896 = vpop.f32.mrb[0].mxu0
      %v2897 = vadd.f32 0.0, %v2896
      %v2898 = vpop.f32.mrb[0].mxu0
      %v2899 = vadd.f32 0.0, %v2898
      %v2900 = vpop.f32.mrb[0].mxu0
      %v2901 = vadd.f32 0.0, %v2900
      %2902 = vdwg.mxu0
      %v2903 = vadd.f32 %v2716, %v2809
      %v2904 = vadd.f32 %v2717, %v2811
      %v2905 = vadd.f32 %v2718, %v2852
      %v2906 = vadd.f32 %v2719, %v2854
      %v2907 = vadd.f32 %v2720, %v2895
      %v2908 = vadd.f32 %v2721, %v2897
      %v2909 = vadd.f32 %v2722, %v2813
      %v2910 = vadd.f32 %v2723, %v2815
      %v2911 = vadd.f32 %v2724, %v2856
      %v2912 = vadd.f32 %v2725, %v2858
      %v2913 = vadd.f32 %v2726, %v2899
      %v2914 = vadd.f32 %v2727, %v2901
      %s2915 = scalar_lea.vmem %s341, 40
      %v2916 = vld [vmem:[%s2915] sm:$0xf]
      %v2917 = vld [vmem:[%s2915 + $0x4] sm:$0xf]
      %v2920 = vunpack.c.l.b16 %v2916
      %v2921 = vunpack.c.l.b16 %v2917
      %v2922 = vpack.c.b16 %v2921, %v2920
      %2923 = vrot.lane.b32.xlu0 %v2017, 108
      %v2924 = vpop.permute.xlu0 %2923
      %2925 = vrot.lane.b32.xlu0 %v2011, 108
      %v2926 = vpop.permute.xlu0 %2925
      %2927 = vrot.lane.b32.xlu0 %v2012, 108
      %v2928 = vpop.permute.xlu0 %2927
      %2929 = vrot.lane.b32.xlu0 %v2013, 108
      %v2930 = vpop.permute.xlu0 %2929
      %2931 = vrot.lane.b32.xlu0 %v2014, 108
      %v2932 = vpop.permute.xlu0 %2931
      %2933 = vrot.lane.b32.xlu0 %v2019, 108
      %v2934 = vpop.permute.xlu0 %2933
      %v2935 = vsel %vm1265, %v2924, %v2926
      %v2936 = vsel %vm1265, %v2926, %v2928
      %v2937 = vsel %vm1265, %v2928, %v2930
      %v2938 = vsel %vm1265, %v2930, %v2932
      %v2939 = vsel %vm1265, %v2932, %v2934
      %v2941 = vsel %vm2049, %v2922, 0
      %v2944 = vsel %vm2053, %v2935, 0
      %v2947 = vsel %vm2053, %v2936, 0
      %v2950 = vsel %vm2053, %v2937, 0
      %v2953 = vsel %vm2053, %v2938, 0
      %v2956 = vsel %vm2053, %v2939, 0
      %v2959 = vsel %vm2053, %v2934, 0
      %2961 = vmatprep.subr.bf16.mxu0 %v2947
      %2962 = vmatpush1.bf16.msra.mxu0 %v2944
      %2963 = vmatprep.subr.bf16.mxu0 0
      %2964 = vmatpush1.bf16.msra.mxu0 0
      %2965 = vmatprep.subr.bf16.mxu0 0
      %2966 = vmatpush1.bf16.msra.mxu0 0
      %2967 = vmatprep.subr.bf16.mxu0 0
      %2968 = vmatpush1.bf16.msra.mxu0 0
      %2969 = vmatprep.subr.bf16.mxu0 0
      %2970 = vmatpush1.bf16.msra.mxu0 0
      %2971 = vmatprep.subr.bf16.mxu0 0
      %2972 = vmatpush1.bf16.msra.mxu0 0
      %2973 = vmatprep.subr.bf16.mxu0 0
      %2974 = vmatpush1.bf16.msra.mxu0 0
      %2975 = vmatprep.subr.bf16.mxu0 0
      %2976 = vmatpush1.bf16.msra.mxu0 0
      %2977 = vmatprep.subr.bf16.mxu0 0
      %2978 = vmatpush1.bf16.msra.mxu0 0
      %2979 = vmatprep.subr.bf16.mxu0 0
      %2980 = vmatpush1.bf16.msra.mxu0 0
      %2981 = vmatprep.subr.bf16.mxu0 0
      %2982 = vmatpush1.bf16.msra.mxu0 0
      %2983 = vmatprep.subr.bf16.mxu0 0
      %2984 = vmatpush1.bf16.msra.mxu0 0
      %2985 = vmatprep.subr.bf16.mxu0 0
      %2986 = vmatpush1.bf16.msra.mxu0 0
      %2987 = vmatprep.subr.bf16.mxu0 0
      %2988 = vmatpush1.bf16.msra.mxu0 0
      %2989 = vmatprep.subr.bf16.mxu0 0
      %2990 = vmatpush1.bf16.msra.mxu0 0
      %2991 = vmatprep.subr.bf16.mxu0 0
      %2992 = vmatpush1.bf16.msra.mxu0 0
      %2993 = vmatprep.mubr.bf16.mxu0 0
      %2994 = vmatmul.mubr.bf16.gmra.mrb[0].mxu0 %v2941
      %v2995 = vpop.f32.mrb[0].mxu0
      %v2996 = vadd.f32 0.0, %v2995
      %v2997 = vpop.f32.mrb[0].mxu0
      %v2998 = vadd.f32 0.0, %v2997
      %v2999 = vpop.f32.mrb[0].mxu0
      %v3000 = vadd.f32 0.0, %v2999
      %v3001 = vpop.f32.mrb[0].mxu0
      %v3002 = vadd.f32 0.0, %v3001
      %3003 = vdwg.mxu0
      %3004 = vmatprep.subr.bf16.mxu0 %v2953
      %3005 = vmatpush1.bf16.msra.mxu0 %v2950
      %3006 = vmatprep.subr.bf16.mxu0 0
      %3007 = vmatpush1.bf16.msra.mxu0 0
      %3008 = vmatprep.subr.bf16.mxu0 0
      %3009 = vmatpush1.bf16.msra.mxu0 0
      %3010 = vmatprep.subr.bf16.mxu0 0
      %3011 = vmatpush1.bf16.msra.mxu0 0
      %3012 = vmatprep.subr.bf16.mxu0 0
      %3013 = vmatpush1.bf16.msra.mxu0 0
      %3014 = vmatprep.subr.bf16.mxu0 0
      %3015 = vmatpush1.bf16.msra.mxu0 0
      %3016 = vmatprep.subr.bf16.mxu0 0
      %3017 = vmatpush1.bf16.msra.mxu0 0
      %3018 = vmatprep.subr.bf16.mxu0 0
      %3019 = vmatpush1.bf16.msra.mxu0 0
      %3020 = vmatprep.subr.bf16.mxu0 0
      %3021 = vmatpush1.bf16.msra.mxu0 0
      %3022 = vmatprep.subr.bf16.mxu0 0
      %3023 = vmatpush1.bf16.msra.mxu0 0
      %3024 = vmatprep.subr.bf16.mxu0 0
      %3025 = vmatpush1.bf16.msra.mxu0 0
      %3026 = vmatprep.subr.bf16.mxu0 0
      %3027 = vmatpush1.bf16.msra.mxu0 0
      %3028 = vmatprep.subr.bf16.mxu0 0
      %3029 = vmatpush1.bf16.msra.mxu0 0
      %3030 = vmatprep.subr.bf16.mxu0 0
      %3031 = vmatpush1.bf16.msra.mxu0 0
      %3032 = vmatprep.subr.bf16.mxu0 0
      %3033 = vmatpush1.bf16.msra.mxu0 0
      %3034 = vmatprep.subr.bf16.mxu0 0
      %3035 = vmatpush1.bf16.msra.mxu0 0
      %3036 = vmatprep.mubr.bf16.mxu0 0
      %3037 = vmatmul.mubr.bf16.gmra.mrb[0].mxu0 %v2941
      %v3038 = vpop.f32.mrb[0].mxu0
      %v3039 = vadd.f32 0.0, %v3038
      %v3040 = vpop.f32.mrb[0].mxu0
      %v3041 = vadd.f32 0.0, %v3040
      %v3042 = vpop.f32.mrb[0].mxu0
      %v3043 = vadd.f32 0.0, %v3042
      %v3044 = vpop.f32.mrb[0].mxu0
      %v3045 = vadd.f32 0.0, %v3044
      %3046 = vdwg.mxu0
      %3047 = vmatprep.subr.bf16.mxu0 %v2959
      %3048 = vmatpush1.bf16.msra.mxu0 %v2956
      %3049 = vmatprep.subr.bf16.mxu0 0
      %3050 = vmatpush1.bf16.msra.mxu0 0
      %3051 = vmatprep.subr.bf16.mxu0 0
      %3052 = vmatpush1.bf16.msra.mxu0 0
      %3053 = vmatprep.subr.bf16.mxu0 0
      %3054 = vmatpush1.bf16.msra.mxu0 0
      %3055 = vmatprep.subr.bf16.mxu0 0
      %3056 = vmatpush1.bf16.msra.mxu0 0
      %3057 = vmatprep.subr.bf16.mxu0 0
      %3058 = vmatpush1.bf16.msra.mxu0 0
      %3059 = vmatprep.subr.bf16.mxu0 0
      %3060 = vmatpush1.bf16.msra.mxu0 0
      %3061 = vmatprep.subr.bf16.mxu0 0
      %3062 = vmatpush1.bf16.msra.mxu0 0
      %3063 = vmatprep.subr.bf16.mxu0 0
      %3064 = vmatpush1.bf16.msra.mxu0 0
      %3065 = vmatprep.subr.bf16.mxu0 0
      %3066 = vmatpush1.bf16.msra.mxu0 0
      %3067 = vmatprep.subr.bf16.mxu0 0
      %3068 = vmatpush1.bf16.msra.mxu0 0
      %3069 = vmatprep.subr.bf16.mxu0 0
      %3070 = vmatpush1.bf16.msra.mxu0 0
      %3071 = vmatprep.subr.bf16.mxu0 0
      %3072 = vmatpush1.bf16.msra.mxu0 0
      %3073 = vmatprep.subr.bf16.mxu0 0
      %3074 = vmatpush1.bf16.msra.mxu0 0
      %3075 = vmatprep.subr.bf16.mxu0 0
      %3076 = vmatpush1.bf16.msra.mxu0 0
      %3077 = vmatprep.subr.bf16.mxu0 0
      %3078 = vmatpush1.bf16.msra.mxu0 0
      %3079 = vmatprep.mubr.bf16.mxu0 0
      %3080 = vmatmul.mubr.bf16.gmra.mrb[0].mxu0 %v2941
      %v3081 = vpop.f32.mrb[0].mxu0
      %v3082 = vadd.f32 0.0, %v3081
      %v3083 = vpop.f32.mrb[0].mxu0
      %v3084 = vadd.f32 0.0, %v3083
      %v3085 = vpop.f32.mrb[0].mxu0
      %v3086 = vadd.f32 0.0, %v3085
      %v3087 = vpop.f32.mrb[0].mxu0
      %v3088 = vadd.f32 0.0, %v3087
      %3089 = vdwg.mxu0
      %v3090 = vadd.f32 %v2903, %v2996
      %v3091 = vadd.f32 %v2904, %v2998
      %v3092 = vadd.f32 %v2905, %v3039
      %v3093 = vadd.f32 %v2906, %v3041
      %v3094 = vadd.f32 %v2907, %v3082
      %v3095 = vadd.f32 %v2908, %v3084
      %v3096 = vadd.f32 %v2909, %v3000
      %v3097 = vadd.f32 %v2910, %v3002
      %v3098 = vadd.f32 %v2911, %v3043
      %v3099 = vadd.f32 %v2912, %v3045
      %v3100 = vadd.f32 %v2913, %v3086
      %v3101 = vadd.f32 %v2914, %v3088
      %s3102 = scalar_lea.vmem %s341, 48
      %v3103 = vld [vmem:[%s3102] sm:$0xf]
      %v3104 = vld [vmem:[%s3102 + $0x4] sm:$0xf]
      %v3107 = vunpack.c.l.b16 %v3103
      %v3108 = vunpack.c.l.b16 %v3104
      %v3109 = vpack.c.b16 %v3108, %v3107
      %3110 = vrot.lane.b32.xlu0 %v2017, 92
      %v3111 = vpop.permute.xlu0 %3110
      %3112 = vrot.lane.b32.xlu0 %v2011, 92
      %v3113 = vpop.permute.xlu0 %3112
      %3114 = vrot.lane.b32.xlu0 %v2012, 92
      %v3115 = vpop.permute.xlu0 %3114
      %3116 = vrot.lane.b32.xlu0 %v2013, 92
      %v3117 = vpop.permute.xlu0 %3116
      %3118 = vrot.lane.b32.xlu0 %v2014, 92
      %v3119 = vpop.permute.xlu0 %3118
      %3120 = vrot.lane.b32.xlu0 %v2019, 92
      %v3121 = vpop.permute.xlu0 %3120
      %v3122 = vsel %vm1435, %v3111, %v3113
      %v3123 = vsel %vm1435, %v3113, %v3115
      %v3124 = vsel %vm1435, %v3115, %v3117
      %v3125 = vsel %vm1435, %v3117, %v3119
      %v3126 = vsel %vm1435, %v3119, %v3121
      %v3128 = vsel %vm2049, %v3109, 0
      %v3131 = vsel %vm2053, %v3122, 0
      %v3134 = vsel %vm2053, %v3123, 0
      %v3137 = vsel %vm2053, %v3124, 0
      %v3140 = vsel %vm2053, %v3125, 0
      %v3143 = vsel %vm2053, %v3126, 0
      %v3146 = vsel %vm2053, %v3121, 0
      %3148 = vmatprep.subr.bf16.mxu0 %v3134
      %3149 = vmatpush1.bf16.msra.mxu0 %v3131
      %3150 = vmatprep.subr.bf16.mxu0 0
      %3151 = vmatpush1.bf16.msra.mxu0 0
      %3152 = vmatprep.subr.bf16.mxu0 0
      %3153 = vmatpush1.bf16.msra.mxu0 0
      %3154 = vmatprep.subr.bf16.mxu0 0
      %3155 = vmatpush1.bf16.msra.mxu0 0
      %3156 = vmatprep.subr.bf16.mxu0 0
      %3157 = vmatpush1.bf16.msra.mxu0 0
      %3158 = vmatprep.subr.bf16.mxu0 0
      %3159 = vmatpush1.bf16.msra.mxu0 0
      %3160 = vmatprep.subr.bf16.mxu0 0
      %3161 = vmatpush1.bf16.msra.mxu0 0
      %3162 = vmatprep.subr.bf16.mxu0 0
      %3163 = vmatpush1.bf16.msra.mxu0 0
      %3164 = vmatprep.subr.bf16.mxu0 0
      %3165 = vmatpush1.bf16.msra.mxu0 0
      %3166 = vmatprep.subr.bf16.mxu0 0
      %3167 = vmatpush1.bf16.msra.mxu0 0
      %3168 = vmatprep.subr.bf16.mxu0 0
      %3169 = vmatpush1.bf16.msra.mxu0 0
      %3170 = vmatprep.subr.bf16.mxu0 0
      %3171 = vmatpush1.bf16.msra.mxu0 0
      %3172 = vmatprep.subr.bf16.mxu0 0
      %3173 = vmatpush1.bf16.msra.mxu0 0
      %3174 = vmatprep.subr.bf16.mxu0 0
      %3175 = vmatpush1.bf16.msra.mxu0 0
      %3176 = vmatprep.subr.bf16.mxu0 0
      %3177 = vmatpush1.bf16.msra.mxu0 0
      %3178 = vmatprep.subr.bf16.mxu0 0
      %3179 = vmatpush1.bf16.msra.mxu0 0
      %3180 = vmatprep.mubr.bf16.mxu0 0
      %3181 = vmatmul.mubr.bf16.gmra.mrb[0].mxu0 %v3128
      %v3182 = vpop.f32.mrb[0].mxu0
      %v3183 = vadd.f32 0.0, %v3182
      %v3184 = vpop.f32.mrb[0].mxu0
      %v3185 = vadd.f32 0.0, %v3184
      %v3186 = vpop.f32.mrb[0].mxu0
      %v3187 = vadd.f32 0.0, %v3186
      %v3188 = vpop.f32.mrb[0].mxu0
      %v3189 = vadd.f32 0.0, %v3188
      %3190 = vdwg.mxu0
      %3191 = vmatprep.subr.bf16.mxu0 %v3140
      %3192 = vmatpush1.bf16.msra.mxu0 %v3137
      %3193 = vmatprep.subr.bf16.mxu0 0
      %3194 = vmatpush1.bf16.msra.mxu0 0
      %3195 = vmatprep.subr.bf16.mxu0 0
      %3196 = vmatpush1.bf16.msra.mxu0 0
      %3197 = vmatprep.subr.bf16.mxu0 0
      %3198 = vmatpush1.bf16.msra.mxu0 0
      %3199 = vmatprep.subr.bf16.mxu0 0
      %3200 = vmatpush1.bf16.msra.mxu0 0
      %3201 = vmatprep.subr.bf16.mxu0 0
      %3202 = vmatpush1.bf16.msra.mxu0 0
      %3203 = vmatprep.subr.bf16.mxu0 0
      %3204 = vmatpush1.bf16.msra.mxu0 0
      %3205 = vmatprep.subr.bf16.mxu0 0
      %3206 = vmatpush1.bf16.msra.mxu0 0
      %3207 = vmatprep.subr.bf16.mxu0 0
      %3208 = vmatpush1.bf16.msra.mxu0 0
      %3209 = vmatprep.subr.bf16.mxu0 0
      %3210 = vmatpush1.bf16.msra.mxu0 0
      %3211 = vmatprep.subr.bf16.mxu0 0
      %3212 = vmatpush1.bf16.msra.mxu0 0
      %3213 = vmatprep.subr.bf16.mxu0 0
      %3214 = vmatpush1.bf16.msra.mxu0 0
      %3215 = vmatprep.subr.bf16.mxu0 0
      %3216 = vmatpush1.bf16.msra.mxu0 0
      %3217 = vmatprep.subr.bf16.mxu0 0
      %3218 = vmatpush1.bf16.msra.mxu0 0
      %3219 = vmatprep.subr.bf16.mxu0 0
      %3220 = vmatpush1.bf16.msra.mxu0 0
      %3221 = vmatprep.subr.bf16.mxu0 0
      %3222 = vmatpush1.bf16.msra.mxu0 0
      %3223 = vmatprep.mubr.bf16.mxu0 0
      %3224 = vmatmul.mubr.bf16.gmra.mrb[0].mxu0 %v3128
      %v3225 = vpop.f32.mrb[0].mxu0
      %v3226 = vadd.f32 0.0, %v3225
      %v3227 = vpop.f32.mrb[0].mxu0
      %v3228 = vadd.f32 0.0, %v3227
      %v3229 = vpop.f32.mrb[0].mxu0
      %v3230 = vadd.f32 0.0, %v3229
      %v3231 = vpop.f32.mrb[0].mxu0
      %v3232 = vadd.f32 0.0, %v3231
      %3233 = vdwg.mxu0
      %3234 = vmatprep.subr.bf16.mxu0 %v3146
      %3235 = vmatpush1.bf16.msra.mxu0 %v3143
      %3236 = vmatprep.subr.bf16.mxu0 0
      %3237 = vmatpush1.bf16.msra.mxu0 0
      %3238 = vmatprep.subr.bf16.mxu0 0
      %3239 = vmatpush1.bf16.msra.mxu0 0
      %3240 = vmatprep.subr.bf16.mxu0 0
      %3241 = vmatpush1.bf16.msra.mxu0 0
      %3242 = vmatprep.subr.bf16.mxu0 0
      %3243 = vmatpush1.bf16.msra.mxu0 0
      %3244 = vmatprep.subr.bf16.mxu0 0
      %3245 = vmatpush1.bf16.msra.mxu0 0
      %3246 = vmatprep.subr.bf16.mxu0 0
      %3247 = vmatpush1.bf16.msra.mxu0 0
      %3248 = vmatprep.subr.bf16.mxu0 0
      %3249 = vmatpush1.bf16.msra.mxu0 0
      %3250 = vmatprep.subr.bf16.mxu0 0
      %3251 = vmatpush1.bf16.msra.mxu0 0
      %3252 = vmatprep.subr.bf16.mxu0 0
      %3253 = vmatpush1.bf16.msra.mxu0 0
      %3254 = vmatprep.subr.bf16.mxu0 0
      %3255 = vmatpush1.bf16.msra.mxu0 0
      %3256 = vmatprep.subr.bf16.mxu0 0
      %3257 = vmatpush1.bf16.msra.mxu0 0
      %3258 = vmatprep.subr.bf16.mxu0 0
      %3259 = vmatpush1.bf16.msra.mxu0 0
      %3260 = vmatprep.subr.bf16.mxu0 0
      %3261 = vmatpush1.bf16.msra.mxu0 0
      %3262 = vmatprep.subr.bf16.mxu0 0
      %3263 = vmatpush1.bf16.msra.mxu0 0
      %3264 = vmatprep.subr.bf16.mxu0 0
      %3265 = vmatpush1.bf16.msra.mxu0 0
      %3266 = vmatprep.mubr.bf16.mxu0 0
      %3267 = vmatmul.mubr.bf16.gmra.mrb[0].mxu0 %v3128
      %v3268 = vpop.f32.mrb[0].mxu0
      %v3269 = vadd.f32 0.0, %v3268
      %v3270 = vpop.f32.mrb[0].mxu0
      %v3271 = vadd.f32 0.0, %v3270
      %v3272 = vpop.f32.mrb[0].mxu0
      %v3273 = vadd.f32 0.0, %v3272
      %v3274 = vpop.f32.mrb[0].mxu0
      %v3275 = vadd.f32 0.0, %v3274
      %3276 = vdwg.mxu0
      %v3277 = vadd.f32 %v3090, %v3183
      %v3278 = vadd.f32 %v3091, %v3185
      %v3279 = vadd.f32 %v3092, %v3226
      %v3280 = vadd.f32 %v3093, %v3228
      %v3281 = vadd.f32 %v3094, %v3269
      %v3282 = vadd.f32 %v3095, %v3271
      %v3283 = vadd.f32 %v3096, %v3187
      %v3284 = vadd.f32 %v3097, %v3189
      %v3285 = vadd.f32 %v3098, %v3230
      %v3286 = vadd.f32 %v3099, %v3232
      %v3287 = vadd.f32 %v3100, %v3273
      %v3288 = vadd.f32 %v3101, %v3275
      %s3289 = scalar_lea.vmem %s341, 56
      %v3290 = vld [vmem:[%s3289] sm:$0xf]
      %v3291 = vld [vmem:[%s3289 + $0x4] sm:$0xf]
      %v3294 = vunpack.c.l.b16 %v3290
      %v3295 = vunpack.c.l.b16 %v3291
      %v3296 = vpack.c.b16 %v3295, %v3294
      %3297 = vrot.lane.b32.xlu0 %v2017, 91
      %v3298 = vpop.permute.xlu0 %3297
      %3299 = vrot.lane.b32.xlu0 %v2011, 91
      %v3300 = vpop.permute.xlu0 %3299
      %3301 = vrot.lane.b32.xlu0 %v2012, 91
      %v3302 = vpop.permute.xlu0 %3301
      %3303 = vrot.lane.b32.xlu0 %v2013, 91
      %v3304 = vpop.permute.xlu0 %3303
      %3305 = vrot.lane.b32.xlu0 %v2014, 91
      %v3306 = vpop.permute.xlu0 %3305
      %3307 = vrot.lane.b32.xlu0 %v2019, 91
      %v3308 = vpop.permute.xlu0 %3307
      %v3309 = vsel %vm1605, %v3298, %v3300
      %v3310 = vsel %vm1605, %v3300, %v3302
      %v3311 = vsel %vm1605, %v3302, %v3304
      %v3312 = vsel %vm1605, %v3304, %v3306
      %v3313 = vsel %vm1605, %v3306, %v3308
      %v3315 = vsel %vm2049, %v3296, 0
      %v3318 = vsel %vm2053, %v3309, 0
      %v3321 = vsel %vm2053, %v3310, 0
      %v3324 = vsel %vm2053, %v3311, 0
      %v3327 = vsel %vm2053, %v3312, 0
      %v3330 = vsel %vm2053, %v3313, 0
      %v3333 = vsel %vm2053, %v3308, 0
      %3335 = vmatprep.subr.bf16.mxu0 %v3321
      %3336 = vmatpush1.bf16.msra.mxu0 %v3318
      %3337 = vmatprep.subr.bf16.mxu0 0
      %3338 = vmatpush1.bf16.msra.mxu0 0
      %3339 = vmatprep.subr.bf16.mxu0 0
      %3340 = vmatpush1.bf16.msra.mxu0 0
      %3341 = vmatprep.subr.bf16.mxu0 0
      %3342 = vmatpush1.bf16.msra.mxu0 0
      %3343 = vmatprep.subr.bf16.mxu0 0
      %3344 = vmatpush1.bf16.msra.mxu0 0
      %3345 = vmatprep.subr.bf16.mxu0 0
      %3346 = vmatpush1.bf16.msra.mxu0 0
      %3347 = vmatprep.subr.bf16.mxu0 0
      %3348 = vmatpush1.bf16.msra.mxu0 0
      %3349 = vmatprep.subr.bf16.mxu0 0
      %3350 = vmatpush1.bf16.msra.mxu0 0
      %3351 = vmatprep.subr.bf16.mxu0 0
      %3352 = vmatpush1.bf16.msra.mxu0 0
      %3353 = vmatprep.subr.bf16.mxu0 0
      %3354 = vmatpush1.bf16.msra.mxu0 0
      %3355 = vmatprep.subr.bf16.mxu0 0
      %3356 = vmatpush1.bf16.msra.mxu0 0
      %3357 = vmatprep.subr.bf16.mxu0 0
      %3358 = vmatpush1.bf16.msra.mxu0 0
      %3359 = vmatprep.subr.bf16.mxu0 0
      %3360 = vmatpush1.bf16.msra.mxu0 0
      %3361 = vmatprep.subr.bf16.mxu0 0
      %3362 = vmatpush1.bf16.msra.mxu0 0
      %3363 = vmatprep.subr.bf16.mxu0 0
      %3364 = vmatpush1.bf16.msra.mxu0 0
      %3365 = vmatprep.subr.bf16.mxu0 0
      %3366 = vmatpush1.bf16.msra.mxu0 0
      %3367 = vmatprep.mubr.bf16.mxu0 0
      %3368 = vmatmul.mubr.bf16.gmra.mrb[0].mxu0 %v3315
      %v3369 = vpop.f32.mrb[0].mxu0
      %v3370 = vadd.f32 0.0, %v3369
      %v3371 = vpop.f32.mrb[0].mxu0
      %v3372 = vadd.f32 0.0, %v3371
      %v3373 = vpop.f32.mrb[0].mxu0
      %v3374 = vadd.f32 0.0, %v3373
      %v3375 = vpop.f32.mrb[0].mxu0
      %v3376 = vadd.f32 0.0, %v3375
      %3377 = vdwg.mxu0
      %3378 = vmatprep.subr.bf16.mxu0 %v3327
      %3379 = vmatpush1.bf16.msra.mxu0 %v3324
      %3380 = vmatprep.subr.bf16.mxu0 0
      %3381 = vmatpush1.bf16.msra.mxu0 0
      %3382 = vmatprep.subr.bf16.mxu0 0
      %3383 = vmatpush1.bf16.msra.mxu0 0
      %3384 = vmatprep.subr.bf16.mxu0 0
      %3385 = vmatpush1.bf16.msra.mxu0 0
      %3386 = vmatprep.subr.bf16.mxu0 0
      %3387 = vmatpush1.bf16.msra.mxu0 0
      %3388 = vmatprep.subr.bf16.mxu0 0
      %3389 = vmatpush1.bf16.msra.mxu0 0
      %3390 = vmatprep.subr.bf16.mxu0 0
      %3391 = vmatpush1.bf16.msra.mxu0 0
      %3392 = vmatprep.subr.bf16.mxu0 0
      %3393 = vmatpush1.bf16.msra.mxu0 0
      %3394 = vmatprep.subr.bf16.mxu0 0
      %3395 = vmatpush1.bf16.msra.mxu0 0
      %3396 = vmatprep.subr.bf16.mxu0 0
      %3397 = vmatpush1.bf16.msra.mxu0 0
      %3398 = vmatprep.subr.bf16.mxu0 0
      %3399 = vmatpush1.bf16.msra.mxu0 0
      %3400 = vmatprep.subr.bf16.mxu0 0
      %3401 = vmatpush1.bf16.msra.mxu0 0
      %3402 = vmatprep.subr.bf16.mxu0 0
      %3403 = vmatpush1.bf16.msra.mxu0 0
      %3404 = vmatprep.subr.bf16.mxu0 0
      %3405 = vmatpush1.bf16.msra.mxu0 0
      %3406 = vmatprep.subr.bf16.mxu0 0
      %3407 = vmatpush1.bf16.msra.mxu0 0
      %3408 = vmatprep.subr.bf16.mxu0 0
      %3409 = vmatpush1.bf16.msra.mxu0 0
      %3410 = vmatprep.mubr.bf16.mxu0 0
      %3411 = vmatmul.mubr.bf16.gmra.mrb[0].mxu0 %v3315
      %v3412 = vpop.f32.mrb[0].mxu0
      %v3413 = vadd.f32 0.0, %v3412
      %v3414 = vpop.f32.mrb[0].mxu0
      %v3415 = vadd.f32 0.0, %v3414
      %v3416 = vpop.f32.mrb[0].mxu0
      %v3417 = vadd.f32 0.0, %v3416
      %v3418 = vpop.f32.mrb[0].mxu0
      %v3419 = vadd.f32 0.0, %v3418
      %3420 = vdwg.mxu0
      %3421 = vmatprep.subr.bf16.mxu0 %v3333
      %3422 = vmatpush1.bf16.msra.mxu0 %v3330
      %3423 = vmatprep.subr.bf16.mxu0 0
      %3424 = vmatpush1.bf16.msra.mxu0 0
      %3425 = vmatprep.subr.bf16.mxu0 0
      %3426 = vmatpush1.bf16.msra.mxu0 0
      %3427 = vmatprep.subr.bf16.mxu0 0
      %3428 = vmatpush1.bf16.msra.mxu0 0
      %3429 = vmatprep.subr.bf16.mxu0 0
      %3430 = vmatpush1.bf16.msra.mxu0 0
      %3431 = vmatprep.subr.bf16.mxu0 0
      %3432 = vmatpush1.bf16.msra.mxu0 0
      %3433 = vmatprep.subr.bf16.mxu0 0
      %3434 = vmatpush1.bf16.msra.mxu0 0
      %3435 = vmatprep.subr.bf16.mxu0 0
      %3436 = vmatpush1.bf16.msra.mxu0 0
      %3437 = vmatprep.subr.bf16.mxu0 0
      %3438 = vmatpush1.bf16.msra.mxu0 0
      %3439 = vmatprep.subr.bf16.mxu0 0
      %3440 = vmatpush1.bf16.msra.mxu0 0
      %3441 = vmatprep.subr.bf16.mxu0 0
      %3442 = vmatpush1.bf16.msra.mxu0 0
      %3443 = vmatprep.subr.bf16.mxu0 0
      %3444 = vmatpush1.bf16.msra.mxu0 0
      %3445 = vmatprep.subr.bf16.mxu0 0
      %3446 = vmatpush1.bf16.msra.mxu0 0
      %3447 = vmatprep.subr.bf16.mxu0 0
      %3448 = vmatpush1.bf16.msra.mxu0 0
      %3449 = vmatprep.subr.bf16.mxu0 0
      %3450 = vmatpush1.bf16.msra.mxu0 0
      %3451 = vmatprep.subr.bf16.mxu0 0
      %3452 = vmatpush1.bf16.msra.mxu0 0
      %3453 = vmatprep.mubr.bf16.mxu0 0
      %3454 = vmatmul.mubr.bf16.gmra.mrb[0].mxu0 %v3315
      %v3455 = vpop.f32.mrb[0].mxu0
      %v3456 = vadd.f32 0.0, %v3455
      %v3457 = vpop.f32.mrb[0].mxu0
      %v3458 = vadd.f32 0.0, %v3457
      %v3459 = vpop.f32.mrb[0].mxu0
      %v3460 = vadd.f32 0.0, %v3459
      %v3461 = vpop.f32.mrb[0].mxu0
      %v3462 = vadd.f32 0.0, %v3461
      %3463 = vdwg.mxu0
      %v3464 = vadd.f32 %v3277, %v3370
      %v3465 = vadd.f32 %v3278, %v3372
      %v3466 = vadd.f32 %v3279, %v3413
      %v3467 = vadd.f32 %v3280, %v3415
      %v3468 = vadd.f32 %v3281, %v3456
      %v3469 = vadd.f32 %v3282, %v3458
      %v3470 = vadd.f32 %v3283, %v3374
      %v3471 = vadd.f32 %v3284, %v3376
      %v3472 = vadd.f32 %v3285, %v3417
      %v3473 = vadd.f32 %v3286, %v3419
      %v3474 = vadd.f32 %v3287, %v3460
      %v3475 = vadd.f32 %v3288, %v3462
      %s3476 = scalar_lea.vmem %s341, 64
      %v3477 = vld [vmem:[%s3476] sm:$0xf]
      %v3478 = vld [vmem:[%s3476 + $0x4] sm:$0xf]
      %v3481 = vunpack.c.l.b16 %v3477
      %v3482 = vunpack.c.l.b16 %v3478
      %v3483 = vpack.c.b16 %v3482, %v3481
      %3484 = vrot.lane.b32.xlu0 %v2017, 90
      %v3485 = vpop.permute.xlu0 %3484
      %3486 = vrot.lane.b32.xlu0 %v2011, 90
      %v3487 = vpop.permute.xlu0 %3486
      %3488 = vrot.lane.b32.xlu0 %v2012, 90
      %v3489 = vpop.permute.xlu0 %3488
      %3490 = vrot.lane.b32.xlu0 %v2013, 90
      %v3491 = vpop.permute.xlu0 %3490
      %3492 = vrot.lane.b32.xlu0 %v2014, 90
      %v3493 = vpop.permute.xlu0 %3492
      %3494 = vrot.lane.b32.xlu0 %v2019, 90
      %v3495 = vpop.permute.xlu0 %3494
      %v3496 = vsel %vm1775, %v3485, %v3487
      %v3497 = vsel %vm1775, %v3487, %v3489
      %v3498 = vsel %vm1775, %v3489, %v3491
      %v3499 = vsel %vm1775, %v3491, %v3493
      %v3500 = vsel %vm1775, %v3493, %v3495
      %v3502 = vsel %vm2049, %v3483, 0
      %v3505 = vsel %vm2053, %v3496, 0
      %v3508 = vsel %vm2053, %v3497, 0
      %v3511 = vsel %vm2053, %v3498, 0
      %v3514 = vsel %vm2053, %v3499, 0
      %v3517 = vsel %vm2053, %v3500, 0
      %v3520 = vsel %vm2053, %v3495, 0
      %3522 = vmatprep.subr.bf16.mxu0 %v3508
      %3523 = vmatpush1.bf16.msra.mxu0 %v3505
      %3524 = vmatprep.subr.bf16.mxu0 0
      %3525 = vmatpush1.bf16.msra.mxu0 0
      %3526 = vmatprep.subr.bf16.mxu0 0
      %3527 = vmatpush1.bf16.msra.mxu0 0
      %3528 = vmatprep.subr.bf16.mxu0 0
      %3529 = vmatpush1.bf16.msra.mxu0 0
      %3530 = vmatprep.subr.bf16.mxu0 0
      %3531 = vmatpush1.bf16.msra.mxu0 0
      %3532 = vmatprep.subr.bf16.mxu0 0
      %3533 = vmatpush1.bf16.msra.mxu0 0
      %3534 = vmatprep.subr.bf16.mxu0 0
      %3535 = vmatpush1.bf16.msra.mxu0 0
      %3536 = vmatprep.subr.bf16.mxu0 0
      %3537 = vmatpush1.bf16.msra.mxu0 0
      %3538 = vmatprep.subr.bf16.mxu0 0
      %3539 = vmatpush1.bf16.msra.mxu0 0
      %3540 = vmatprep.subr.bf16.mxu0 0
      %3541 = vmatpush1.bf16.msra.mxu0 0
      %3542 = vmatprep.subr.bf16.mxu0 0
      %3543 = vmatpush1.bf16.msra.mxu0 0
      %3544 = vmatprep.subr.bf16.mxu0 0
      %3545 = vmatpush1.bf16.msra.mxu0 0
      %3546 = vmatprep.subr.bf16.mxu0 0
      %3547 = vmatpush1.bf16.msra.mxu0 0
      %3548 = vmatprep.subr.bf16.mxu0 0
      %3549 = vmatpush1.bf16.msra.mxu0 0
      %3550 = vmatprep.subr.bf16.mxu0 0
      %3551 = vmatpush1.bf16.msra.mxu0 0
      %3552 = vmatprep.subr.bf16.mxu0 0
      %3553 = vmatpush1.bf16.msra.mxu0 0
      %3554 = vmatprep.mubr.bf16.mxu0 0
      %3555 = vmatmul.mubr.bf16.gmra.mrb[0].mxu0 %v3502
      %v3556 = vpop.f32.mrb[0].mxu0
      %v3557 = vadd.f32 0.0, %v3556
      %v3558 = vpop.f32.mrb[0].mxu0
      %v3559 = vadd.f32 0.0, %v3558
      %v3560 = vpop.f32.mrb[0].mxu0
      %v3561 = vadd.f32 0.0, %v3560
      %v3562 = vpop.f32.mrb[0].mxu0
      %v3563 = vadd.f32 0.0, %v3562
      %3564 = vdwg.mxu0
      %3565 = vmatprep.subr.bf16.mxu0 %v3514
      %3566 = vmatpush1.bf16.msra.mxu0 %v3511
      %3567 = vmatprep.subr.bf16.mxu0 0
      %3568 = vmatpush1.bf16.msra.mxu0 0
      %3569 = vmatprep.subr.bf16.mxu0 0
      %3570 = vmatpush1.bf16.msra.mxu0 0
      %3571 = vmatprep.subr.bf16.mxu0 0
      %3572 = vmatpush1.bf16.msra.mxu0 0
      %3573 = vmatprep.subr.bf16.mxu0 0
      %3574 = vmatpush1.bf16.msra.mxu0 0
      %3575 = vmatprep.subr.bf16.mxu0 0
      %3576 = vmatpush1.bf16.msra.mxu0 0
      %3577 = vmatprep.subr.bf16.mxu0 0
      %3578 = vmatpush1.bf16.msra.mxu0 0
      %3579 = vmatprep.subr.bf16.mxu0 0
      %3580 = vmatpush1.bf16.msra.mxu0 0
      %3581 = vmatprep.subr.bf16.mxu0 0
      %3582 = vmatpush1.bf16.msra.mxu0 0
      %3583 = vmatprep.subr.bf16.mxu0 0
      %3584 = vmatpush1.bf16.msra.mxu0 0
      %3585 = vmatprep.subr.bf16.mxu0 0
      %3586 = vmatpush1.bf16.msra.mxu0 0
      %3587 = vmatprep.subr.bf16.mxu0 0
      %3588 = vmatpush1.bf16.msra.mxu0 0
      %3589 = vmatprep.subr.bf16.mxu0 0
      %3590 = vmatpush1.bf16.msra.mxu0 0
      %3591 = vmatprep.subr.bf16.mxu0 0
      %3592 = vmatpush1.bf16.msra.mxu0 0
      %3593 = vmatprep.subr.bf16.mxu0 0
      %3594 = vmatpush1.bf16.msra.mxu0 0
      %3595 = vmatprep.subr.bf16.mxu0 0
      %3596 = vmatpush1.bf16.msra.mxu0 0
      %3597 = vmatprep.mubr.bf16.mxu0 0
      %3598 = vmatmul.mubr.bf16.gmra.mrb[0].mxu0 %v3502
      %v3599 = vpop.f32.mrb[0].mxu0
      %v3600 = vadd.f32 0.0, %v3599
      %v3601 = vpop.f32.mrb[0].mxu0
      %v3602 = vadd.f32 0.0, %v3601
      %v3603 = vpop.f32.mrb[0].mxu0
      %v3604 = vadd.f32 0.0, %v3603
      %v3605 = vpop.f32.mrb[0].mxu0
      %v3606 = vadd.f32 0.0, %v3605
      %3607 = vdwg.mxu0
      %3608 = vmatprep.subr.bf16.mxu0 %v3520
      %3609 = vmatpush1.bf16.msra.mxu0 %v3517
      %3610 = vmatprep.subr.bf16.mxu0 0
      %3611 = vmatpush1.bf16.msra.mxu0 0
      %3612 = vmatprep.subr.bf16.mxu0 0
      %3613 = vmatpush1.bf16.msra.mxu0 0
      %3614 = vmatprep.subr.bf16.mxu0 0
      %3615 = vmatpush1.bf16.msra.mxu0 0
      %3616 = vmatprep.subr.bf16.mxu0 0
      %3617 = vmatpush1.bf16.msra.mxu0 0
      %3618 = vmatprep.subr.bf16.mxu0 0
      %3619 = vmatpush1.bf16.msra.mxu0 0
      %3620 = vmatprep.subr.bf16.mxu0 0
      %3621 = vmatpush1.bf16.msra.mxu0 0
      %3622 = vmatprep.subr.bf16.mxu0 0
      %3623 = vmatpush1.bf16.msra.mxu0 0
      %3624 = vmatprep.subr.bf16.mxu0 0
      %3625 = vmatpush1.bf16.msra.mxu0 0
      %3626 = vmatprep.subr.bf16.mxu0 0
      %3627 = vmatpush1.bf16.msra.mxu0 0
      %3628 = vmatprep.subr.bf16.mxu0 0
      %3629 = vmatpush1.bf16.msra.mxu0 0
      %3630 = vmatprep.subr.bf16.mxu0 0
      %3631 = vmatpush1.bf16.msra.mxu0 0
      %3632 = vmatprep.subr.bf16.mxu0 0
      %3633 = vmatpush1.bf16.msra.mxu0 0
      %3634 = vmatprep.subr.bf16.mxu0 0
      %3635 = vmatpush1.bf16.msra.mxu0 0
      %3636 = vmatprep.subr.bf16.mxu0 0
      %3637 = vmatpush1.bf16.msra.mxu0 0
      %3638 = vmatprep.subr.bf16.mxu0 0
      %3639 = vmatpush1.bf16.msra.mxu0 0
      %3640 = vmatprep.mubr.bf16.mxu0 0
      %3641 = vmatmul.mubr.bf16.gmra.mrb[0].mxu0 %v3502
      %v3642 = vpop.f32.mrb[0].mxu0
      %v3643 = vadd.f32 0.0, %v3642
      %v3644 = vpop.f32.mrb[0].mxu0
      %v3645 = vadd.f32 0.0, %v3644
      %v3646 = vpop.f32.mrb[0].mxu0
      %v3647 = vadd.f32 0.0, %v3646
      %v3648 = vpop.f32.mrb[0].mxu0
      %v3649 = vadd.f32 0.0, %v3648
      %3650 = vdwg.mxu0
      %v3651 = vadd.f32 %v3464, %v3557
      %v3652 = vadd.f32 %v3465, %v3559
      %v3653 = vadd.f32 %v3466, %v3600
      %v3654 = vadd.f32 %v3467, %v3602
      %v3655 = vadd.f32 %v3468, %v3643
      %v3656 = vadd.f32 %v3469, %v3645
      %v3657 = vadd.f32 %v3470, %v3561
      %v3658 = vadd.f32 %v3471, %v3563
      %v3659 = vadd.f32 %v3472, %v3604
      %v3660 = vadd.f32 %v3473, %v3606
      %v3661 = vadd.f32 %v3474, %v3647
      %v3662 = vadd.f32 %v3475, %v3649
      %3664 = vset.pattern.permute.xlu0 0
      %3665 = vperm.xlu0 %3664, %v1991
      %v3666 = vpop.permute.xlu0 %3665
      %3669 = vset.pattern.permute.xlu0 0
      %3670 = vperm.xlu0 %3669, %v1992
      %v3671 = vpop.permute.xlu0 %3670
      %v3673 = vadd.f32 %v3651, %v3666
      %v3674 = vadd.f32 %v3652, %v3666
      %v3675 = vadd.f32 %v3653, %v3666
      %v3676 = vadd.f32 %v3654, %v3666
      %v3677 = vadd.f32 %v3655, %v3666
      %v3678 = vadd.f32 %v3656, %v3666
      %v3679 = vadd.f32 %v3657, %v3671
      %v3680 = vadd.f32 %v3658, %v3671
      %v3681 = vadd.f32 %v3659, %v3671
      %v3682 = vadd.f32 %v3660, %v3671
      %v3683 = vadd.f32 %v3661, %v3671
      %v3684 = vadd.f32 %v3662, %v3671
      %v3685 = vmax.f32 %v3673, 0.0
      %v3686 = vmax.f32 %v3674, 0.0
      %v3687 = vmax.f32 %v3675, 0.0
      %v3688 = vmax.f32 %v3676, 0.0
      %v3689 = vmax.f32 %v3677, 0.0
      %v3690 = vmax.f32 %v3678, 0.0
      %v3691 = vmax.f32 %v3679, 0.0
      %v3692 = vmax.f32 %v3680, 0.0
      %v3693 = vmax.f32 %v3681, 0.0
      %v3694 = vmax.f32 %v3682, 0.0
      %v3695 = vmax.f32 %v3683, 0.0
      %v3696 = vmax.f32 %v3684, 0.0
      %v3697 = vld [vmem:[%s2] sm:$0x3f]
      %v3698 = vld [vmem:[%s2 + $0x6] sm:$0x3f]
      %v3701 = vlaneseq
      %v3702 = vshrl.u32 %v3701, 7
      %v3703 = vsub.s32 0, %v3702
      %v3704 = vrot.slane %v3697, %v3703
      %v3705 = vlaneseq
      %v3706 = vshrl.u32 %v3705, 7
      %v3707 = vsub.s32 1, %v3706
      %v3708 = vrot.slane %v3697, %v3707
      %v3709 = vlaneseq
      %v3710 = vshrl.u32 %v3709, 7
      %v3711 = vsub.s32 2, %v3710
      %v3712 = vrot.slane %v3697, %v3711
      %v3713 = vlaneseq
      %v3714 = vshrl.u32 %v3713, 7
      %v3715 = vsub.s32 3, %v3714
      %v3716 = vrot.slane %v3697, %v3715
      %v3717 = vlaneseq
      %v3718 = vshrl.u32 %v3717, 7
      %v3719 = vsub.s32 4, %v3718
      %v3720 = vrot.slane %v3697, %v3719
      %v3721 = vlaneseq
      %v3722 = vshrl.u32 %v3721, 7
      %v3723 = vsub.s32 5, %v3722
      %v3724 = vrot.slane %v3697, %v3723
      %v3725 = vlaneseq
      %v3726 = vshrl.u32 %v3725, 7
      %v3727 = vsub.s32 0, %v3726
      %v3728 = vrot.slane %v3698, %v3727
      %v3729 = vlaneseq
      %v3730 = vshrl.u32 %v3729, 7
      %v3731 = vsub.s32 1, %v3730
      %v3732 = vrot.slane %v3698, %v3731
      %v3733 = vlaneseq
      %v3734 = vshrl.u32 %v3733, 7
      %v3735 = vsub.s32 2, %v3734
      %v3736 = vrot.slane %v3698, %v3735
      %v3737 = vlaneseq
      %v3738 = vshrl.u32 %v3737, 7
      %v3739 = vsub.s32 3, %v3738
      %v3740 = vrot.slane %v3698, %v3739
      %v3741 = vlaneseq
      %v3742 = vshrl.u32 %v3741, 7
      %v3743 = vsub.s32 4, %v3742
      %v3744 = vrot.slane %v3698, %v3743
      %v3745 = vlaneseq
      %v3746 = vshrl.u32 %v3745, 7
      %v3747 = vsub.s32 5, %v3746
      %v3748 = vrot.slane %v3698, %v3747
      %v3761 = vmul.f32 %v3704, %v3685
      %v3762 = vmul.f32 %v3708, %v3686
      %v3763 = vmul.f32 %v3712, %v3687
      %v3764 = vmul.f32 %v3716, %v3688
      %v3765 = vmul.f32 %v3720, %v3689
      %v3766 = vmul.f32 %v3724, %v3690
      %v3767 = vmul.f32 %v3704, %v3691
      %v3768 = vmul.f32 %v3708, %v3692
      %v3769 = vmul.f32 %v3712, %v3693
      %v3770 = vmul.f32 %v3716, %v3694
      %v3771 = vmul.f32 %v3720, %v3695
      %v3772 = vmul.f32 %v3724, %v3696
      %v3773 = vmul.f32 %v3728, %v3685
      %v3774 = vmul.f32 %v3732, %v3686
      %v3775 = vmul.f32 %v3736, %v3687
      %v3776 = vmul.f32 %v3740, %v3688
      %v3777 = vmul.f32 %v3744, %v3689
      %v3778 = vmul.f32 %v3748, %v3690
      %v3779 = vmul.f32 %v3728, %v3691
      %v3780 = vmul.f32 %v3732, %v3692
      %v3781 = vmul.f32 %v3736, %v3693
      %v3782 = vmul.f32 %v3740, %v3694
      %v3783 = vmul.f32 %v3744, %v3695
      %v3784 = vmul.f32 %v3748, %v3696
      %v3785 = vadd.f32 %v3761, %v3762
      %v3786 = vadd.f32 %v3785, %v3763
      %v3787 = vadd.f32 %v3786, %v3764
      %v3788 = vadd.f32 %v3787, %v3765
      %v3789 = vsel %vm2049, %v3766, 0.0
      %v3790 = vadd.f32 %v3788, %v3789
      %3791 = vadd.xlane.f32.xlu0 %v3790
      %v3792 = vpop.xlane.xlu0 %3791
      %v3793 = vadd.f32 %v3767, %v3768
      %v3794 = vadd.f32 %v3793, %v3769
      %v3795 = vadd.f32 %v3794, %v3770
      %v3796 = vadd.f32 %v3795, %v3771
      %v3797 = vsel %vm2049, %v3772, 0.0
      %v3798 = vadd.f32 %v3796, %v3797
      %3799 = vadd.xlane.f32.xlu0 %v3798
      %v3800 = vpop.xlane.xlu0 %3799
      %v3801 = vadd.f32 %v3773, %v3774
      %v3802 = vadd.f32 %v3801, %v3775
      %v3803 = vadd.f32 %v3802, %v3776
      %v3804 = vadd.f32 %v3803, %v3777
      %v3805 = vsel %vm2049, %v3778, 0.0
      %v3806 = vadd.f32 %v3804, %v3805
      %3807 = vadd.xlane.f32.xlu0 %v3806
      %v3808 = vpop.xlane.xlu0 %3807
      %v3809 = vadd.f32 %v3779, %v3780
      %v3810 = vadd.f32 %v3809, %v3781
      %v3811 = vadd.f32 %v3810, %v3782
      %v3812 = vadd.f32 %v3811, %v3783
      %v3813 = vsel %vm2049, %v3784, 0.0
      %v3814 = vadd.f32 %v3812, %v3813
      %3815 = vadd.xlane.f32.xlu0 %v3814
      %v3816 = vpop.xlane.xlu0 %3815
      %v3817 = vmul.f32 %v3792, 0.015625
      %v3818 = vmul.f32 %v3800, 0.015625
      %v3819 = vmul.f32 %v3808, 0.015625
      %v3820 = vmul.f32 %v3816, 0.015625
      %v3825 = vlaneseq
      %v3826 = vand.u32 %v3825, 127
      %v3827 = vlaneseq
      %v3828 = vshrl.u32 %v3827, 7
      %v3829 = vsub.s32 %v3826, %v3828
      %v3830 = vrot.slane %v3817, %v3829
      %v3831 = vadd.s32 %v3826, 4294967288
      %v3832 = vlaneseq
      %v3833 = vshrl.u32 %v3832, 7
      %v3834 = vsub.s32 %v3831, %v3833
      %v3835 = vrot.slane %v3818, %v3834
      %vm3836 = vcmask 130112
      %v3837 = vsel %vm3836, %v3835, %v3830
      %v3838 = vlaneseq
      %v3839 = vshrl.u32 %v3838, 7
      %v3840 = vsub.s32 %v3826, %v3839
      %v3841 = vrot.slane %v3819, %v3840
      %v3842 = vlaneseq
      %v3843 = vshrl.u32 %v3842, 7
      %v3844 = vsub.s32 %v3831, %v3843
      %v3845 = vrot.slane %v3820, %v3844
      %v3846 = vsel %vm3836, %v3845, %v3841
      %vm3847 = vcmask 1041409
      %v3848 = vsel %vm3847, %v3846, %v3837
      %vm3850 = vcmask 123904
      %3851 = vst.msk [vmem:[%s350] sm:$0x3] %vm3850, %v3848
      %p3852 = scmp.lt.s32.totalorder %s18, 3
      %s3853 = scalar_select %p3852, %s18, 3
      %s3854 = smul.addr %s3853, 2
      %s3855 = scalar_lea.vmem %s7, %s3854
      // Predicated region
      $region49: #{_forward_impl.2} parent=47 // pred_check
        %p3856 = pneg %p208
      $region50: #{_forward_impl.2} parent=47 // pred_check_branch
        %3858 = sbr.rel (%p3856) target = $region52
      $region51: #{_forward_impl.2} parent=47 // pred_region
        _
      $region52: #{_forward_impl.2} parent=47 // pred_fallthru
        _
    $region48: #{_forward_impl.2} parent=5 // pred_fallthru
      _
    %p3859 = scmp.le.s32.totalorder 2, %s13
    // Predicated region
    $region53: #{_forward_impl.2} parent=5 // pred_check
      %p3860 = pneg %p3859
    $region54: #{_forward_impl.2} parent=5 // pred_check_branch
      %3862 = sbr.rel (%p3860) target = $region56
    $region55: #{_forward_impl.2} parent=5 // pred_region
      %s3863 = ssub.s32 %s13, 2
      // Predicated region
      $region57: #{_forward_impl.2} parent=55 // pred_check
        %p3864 = pneg %p214
      $region58: #{_forward_impl.2} parent=55 // pred_check_branch
        %3866 = sbr.rel (%p3864) target = $region60
      $region59: #{_forward_impl.2} parent=55 // pred_region
        %p3867 = scmp.lt.s32.totalorder %s19, 3
        %s3868 = scalar_select %p3867, %s19, 3
        %s3869 = smul.addr %s3868, 2
        %s3870 = scalar_lea.vmem %s7, %s3869
      $region60: #{_forward_impl.2} parent=55 // pred_fallthru
        _
    $region56: #{_forward_impl.2} parent=5 // pred_fallthru
      _
  $region6: #{_forward_impl.2} parent=0 // loop_footer
    %s17 = sadd.s32 1, %s13
  $region7: #{_forward_impl.2} parent=0 // loop_footer_branch
    %12 = sbr.rel target = $region3
  $region8: #{_forward_impl.2} parent=0 // loop_exit
    _

</llo_original>
